<compile_context>
chip_gen: v5e
topology: v5e:2x2
jax: 0.10.0
libtpu: 0.0.40
codegen_flags: <defaults>
</compile_context>

<pallas_src>
import numpy as np
import jax
import jax.numpy as jnp
from jax.experimental import pallas as pl
from jax.experimental.pallas import tpu as pltpu

LATENT = 32  # VAE latent size (fc_mu / fc_logvar output width)
_MIB = 1 << 20


def _round_up(x, m):
    return ((x + m - 1) // m) * m


def _num_tensorcores():
    """Best-effort TensorCores-per-chip detection (v7x has 2; v5e/v6e have 1)."""
    try:
        kind = (getattr(jax.devices()[0], "device_kind", "") or "").lower()
        if "v7" in kind:
            return 2
    except Exception:
        pass
    return 1


def vae_kernel(x_ref, eps_ref,
               w1, b1, w2, b2, wml, bml, w4, b4, w5, b5, w6, b6,
               recon_ref, mulv_ref):
    """Fused VAE forward for one (batch_tile, F_pad) tile.

    encoder: Linear(F,128) -> ReLU -> Linear(128,64) -> ReLU
    heads:   [mu | logvar] = Linear(64, 64)   (fused fc_mu / fc_logvar)
    reparam: z = mu + eps * exp(0.5 * logvar)
    decoder: Linear(32,64) -> ReLU -> Linear(64,128) -> ReLU -> Linear(128,F) -> Sigmoid
    """
    compute_dtype = w1.dtype

    def lin(h, w_ref, b_ref):
        # MXU matmul with f32 accumulation; bias add in f32 on the VPU.
        y = jnp.dot(h.astype(compute_dtype), w_ref[...],
                    preferred_element_type=jnp.float32)
        return y + b_ref[...].astype(jnp.float32)

    x = x_ref[...]

    # encoder
    h = jnp.maximum(lin(x, w1, b1), 0.0)
    h = jnp.maximum(lin(h, w2, b2), 0.0)

    # fused latent heads: one N=64 matmul instead of two N=32 matmuls
    ml = lin(h, wml, bml)                         # (bt, 64) = [mu | logvar]
    mu = ml[:, :LATENT]
    logvar = ml[:, LATENT:]

    # reparameterize (standard-normal eps supplied by the host for determinism)
    std = jnp.exp(0.5 * logvar)                   # EUP transcendental
    z = mu + eps_ref[...].astype(jnp.float32) * std

    # decoder
    h = jnp.maximum(lin(z, w4, b4), 0.0)
    h = jnp.maximum(lin(h, w5, b5), 0.0)
    recon = jax.nn.sigmoid(lin(h, w6, b6))

    recon_ref[...] = recon.astype(recon_ref.dtype)
    mulv_ref[...] = ml.astype(mulv_ref.dtype)     # single 64-lane store


def vae_forward(x, params, eps, *, batch_tile=1024, compute_dtype=jnp.float32,
                num_tensorcores=None):
    """x: [B, F]; eps: [B, 32]; params: 7 (W[in,out], b[1,out]) pairs in order
    (enc1, enc2, fc_mu, fc_logvar, dec1, dec2, dec3).
    Returns (recon [B, F], mu [B, 32], logvar [B, 32])."""
    B, F = x.shape
    recon_dtype = x.dtype

    (w1, b1), (w2, b2), (wmu, bmu), (wlv, blv), (w4, b4), (w5, b5), (w6, b6) = params
    # Fuse fc_mu / fc_logvar into one [64, 64] weight (concat output columns).
    wml = jnp.concatenate([wmu, wlv], axis=1)
    bml = jnp.concatenate([bmu, blv], axis=1)

    # ---- feature padding: only when F is not already lane-aligned ----------
    F_pad = _round_up(F, 128)
    if F_pad != F:
        x_in = jnp.pad(x, ((0, 0), (0, F_pad - F)))
        w1 = jnp.pad(w1, ((0, F_pad - F), (0, 0)))   # zero rows: no-op on output
        w6 = jnp.pad(w6, ((0, 0), (0, F_pad - F)))   # padded cols sliced off below
        b6 = jnp.pad(b6, ((0, 0), (0, F_pad - F)))
    else:
        x_in = x                                     # no host-side pad/cast pass
    eps_in = eps

    # ---- batch padding: only up to the 8-row sublane granule ----------------
    B8 = _round_up(B, 8)
    if B8 != B:
        x_in = jnp.pad(x_in, ((0, B8 - B), (0, 0)))
        eps_in = jnp.pad(eps_in, ((0, B8 - B), (0, 0)))

    weights = [(w1, b1), (w2, b2), (wml, bml), (w4, b4), (w5, b5), (w6, b6)]
    in_item = np.dtype(x_in.dtype).itemsize
    out_item = np.dtype(recon_dtype).itemsize
    w_item = np.dtype(compute_dtype).itemsize
    weight_bytes = sum(w.size * w_item + b.size * 4 for (w, b) in weights)

    # ---- batch-tile selection ------------------------------------------------
    ncores = _num_tensorcores() if num_tensorcores is None else num_tensorcores
    bt = min(_round_up(batch_tile, 8), B8)
    if ncores >= 2:
        # v7x: >= 2 grid steps per TensorCore so DMA pipelines behind compute.
        min_steps = 2 * ncores
        if B8 >= 8 * min_steps:
            bt = min(bt, max(8, (B8 // min_steps) // 8 * 8))

    def _footprint(bt_):
        streamed = bt_ * (F_pad * in_item + LATENT * in_item
                          + F_pad * out_item + 2 * LATENT * 4)
        inter = bt_ * (F_pad + 512) * 4             # f32 activations inside kernel
        return 2 * streamed + weight_bytes + inter  # 2 = double-buffering

    vmem_budget = 40 * _MIB                         # safe on v7x (64 MiB physical)
    while bt > 8 and _footprint(bt) > vmem_budget:
        bt = max(8, _round_up(bt // 2, 8))

    grid = (pl.cdiv(B8, bt),)
    vmem_limit = int(min(48 * _MIB, max(32 * _MIB, _footprint(bt) + 4 * _MIB)))

    # ---- specs ---------------------------------------------------------------
    flat = []
    in_specs = [
        pl.BlockSpec((bt, F_pad), lambda i: (i, 0)),     # x tile (streamed)
        pl.BlockSpec((bt, LATENT), lambda i: (i, 0)),    # eps tile (streamed)
    ]
    for (w, b) in weights:
        flat.append(w.astype(compute_dtype))
        flat.append(b.astype(jnp.float32))
        # Constant block index -> fetched once, VMEM-resident across the grid.
        in_specs.append(pl.BlockSpec(w.shape, lambda i: (0, 0)))
        in_specs.append(pl.BlockSpec(b.shape, lambda i: (0, 0)))

    # Advisory cost estimate for XLA's scheduler.
    flops = 2 * B8 * sum(w.shape[0] * w.shape[1] for (w, _) in weights)
    transcendentals = B8 * (LATENT + F_pad)              # exp(0.5*logvar) + sigmoid
    bytes_accessed = (
        B8 * F_pad * in_item + B8 * LATENT * in_item     # x, eps in
        + B8 * F_pad * out_item + B8 * 2 * LATENT * 4    # recon, mu|logvar out
        + weight_bytes)

    recon, mulv = pl.pallas_call(
        vae_kernel,
        out_shape=(
            jax.ShapeDtypeStruct((B8, F_pad), recon_dtype),
            jax.ShapeDtypeStruct((B8, 2 * LATENT), jnp.float32),
        ),
        grid_spec=pltpu.PrefetchScalarGridSpec(
            num_scalar_prefetch=0,
            grid=grid,
            in_specs=in_specs,
            out_specs=(
                pl.BlockSpec((bt, F_pad), lambda i: (i, 0)),
                pl.BlockSpec((bt, 2 * LATENT), lambda i: (i, 0)),
            ),
        ),
        compiler_params=pltpu.CompilerParams(
            dimension_semantics=("parallel",),
            vmem_limit_bytes=vmem_limit),
        cost_estimate=pl.CostEstimate(
            flops=flops,
            transcendentals=transcendentals,
            bytes_accessed=bytes_accessed),
    )(x_in, eps_in, *flat)

    return recon[:B, :F], mulv[:B, :LATENT], mulv[:B, LATENT:]


def init_params(key, input_dim):
    """Deterministic PyTorch-style init U(-1/sqrt(fan_in), 1/sqrt(fan_in))."""
    dims = [(input_dim, 128), (128, 64),              # encoder
            (64, LATENT), (64, LATENT),               # fc_mu, fc_logvar
            (LATENT, 64), (64, 128), (128, input_dim)]  # decoder
    params = []
    for (fan_in, fan_out) in dims:
        key, kw, kb = jax.random.split(key, 3)
        bound = 1.0 / jnp.sqrt(float(fan_in))
        w = jax.random.uniform(kw, (fan_in, fan_out), jnp.float32, -bound, bound)
        b = jax.random.uniform(kb, (1, fan_out), jnp.float32, -bound, bound)
        params.append((w, b))
    return params


def reference_forward(x, params, eps):
    """Pure-JAX reference of VAE.forward with the same eps."""
    (w1, b1), (w2, b2), (wmu, bmu), (wlv, blv), (w4, b4), (w5, b5), (w6, b6) = params
    h = jnp.maximum(x @ w1 + b1, 0.0)
    h = jnp.maximum(h @ w2 + b2, 0.0)
    mu = h @ wmu + bmu
    logvar = h @ wlv + blv
    z = mu + eps * jnp.exp(0.5 * logvar)
    d = jnp.maximum(z @ w4 + b4, 0.0)
    d = jnp.maximum(d @ w5 + b5, 0.0)
    recon = jax.nn.sigmoid(d @ w6 + b6)
    return recon, mu, logvar


if __name__ == "__main__":
    # TODO(synk): torch.randn_like noise is replaced by a host-supplied eps argument
    # for determinism; there is no in-kernel standard-normal sampling here.
    key = jax.random.PRNGKey(0)
    key, kx, keps = jax.random.split(key, 3)

    # Main check: aligned shapes (no host-side padding pass).
    batch, input_dim = 512, 256
    x = jax.random.normal(kx, (batch, input_dim), jnp.float32)
    eps = jax.random.normal(keps, (batch, LATENT), jnp.float32)
    params = init_params(key, input_dim)

    recon, mu, logvar = vae_forward(x, params, eps)
    jax.block_until_ready((recon, mu, logvar))

    r_ref, mu_ref, lv_ref = reference_forward(x, params, eps)
    assert recon.shape == (batch, input_dim)
    assert mu.shape == (batch, LATENT) and logvar.shape == (batch, LATENT)
    assert jnp.allclose(recon, r_ref, atol=1e-4, rtol=1e-4), "recon mismatch"
    assert jnp.allclose(mu, mu_ref, atol=1e-4, rtol=1e-4), "mu mismatch"
    assert jnp.allclose(logvar, lv_ref, atol=1e-4, rtol=1e-4), "logvar mismatch"

    # Ragged batch + feature dim not a multiple of 128: exercises the padding path.
    key2, kx2, keps2 = jax.random.split(jax.random.PRNGKey(0), 3)
    xb = jax.random.normal(kx2, (10, 200), jnp.float32)
    epsb = jax.random.normal(keps2, (10, LATENT), jnp.float32)
    pb = init_params(key2, 200)
    rb, mub, lvb = vae_forward(xb, pb, epsb)
    jax.block_until_ready((rb, mub, lvb))
    rb_ref, mub_ref, lvb_ref = reference_forward(xb, pb, epsb)
    assert rb.shape == (10, 200)
    assert jnp.allclose(rb, rb_ref, atol=1e-4, rtol=1e-4), "ragged recon mismatch"
    assert jnp.allclose(mub, mub_ref, atol=1e-4, rtol=1e-4), "ragged mu mismatch"
    assert jnp.allclose(lvb, lvb_ref, atol=1e-4, rtol=1e-4), "ragged logvar mismatch"

    print("KERNEL_OK")
</pallas_src>

<mosaic_0001>
module attributes {stable_mosaic.version = 11 : i64} {
  func.func @vae_kernel(%arg0: i32, %arg1: memref<512x256xf32, #tpu.memory_space<vmem>>, %arg2: memref<512x32xf32, #tpu.memory_space<vmem>>, %arg3: memref<256x128xf32, #tpu.memory_space<vmem>>, %arg4: memref<1x128xf32, #tpu.memory_space<vmem>>, %arg5: memref<128x64xf32, #tpu.memory_space<vmem>>, %arg6: memref<1x64xf32, #tpu.memory_space<vmem>>, %arg7: memref<64x64xf32, #tpu.memory_space<vmem>>, %arg8: memref<1x64xf32, #tpu.memory_space<vmem>>, %arg9: memref<32x64xf32, #tpu.memory_space<vmem>>, %arg10: memref<1x64xf32, #tpu.memory_space<vmem>>, %arg11: memref<64x128xf32, #tpu.memory_space<vmem>>, %arg12: memref<1x128xf32, #tpu.memory_space<vmem>>, %arg13: memref<128x256xf32, #tpu.memory_space<vmem>>, %arg14: memref<1x256xf32, #tpu.memory_space<vmem>>, %arg15: memref<512x256xf32, #tpu.memory_space<vmem>>, %arg16: memref<512x64xf32, #tpu.memory_space<vmem>>) attributes {dimension_semantics = [#tpu.dimension_semantics<parallel>], iteration_bounds = array<i64: 1>, scalar_prefetch = 0 : i64, scratch_operands = 0 : i64, tpu.core_type = #tpu.core_type<tc>, window_params = [{transform_indices = @transform_0, window_bounds = array<i64: 512, 256>}, {transform_indices = @transform_1, window_bounds = array<i64: 512, 32>}, {pipeline_mode = #tpu.pipeline_mode<synchronous>, transform_indices = @transform_2, window_bounds = array<i64: 256, 128>}, {pipeline_mode = #tpu.pipeline_mode<synchronous>, transform_indices = @transform_3, window_bounds = array<i64: 1, 128>}, {pipeline_mode = #tpu.pipeline_mode<synchronous>, transform_indices = @transform_4, window_bounds = array<i64: 128, 64>}, {pipeline_mode = #tpu.pipeline_mode<synchronous>, transform_indices = @transform_5, window_bounds = array<i64: 1, 64>}, {pipeline_mode = #tpu.pipeline_mode<synchronous>, transform_indices = @transform_6, window_bounds = array<i64: 64, 64>}, {pipeline_mode = #tpu.pipeline_mode<synchronous>, transform_indices = @transform_7, window_bounds = array<i64: 1, 64>}, {pipeline_mode = #tpu.pipeline_mode<synchronous>, transform_indices = @transform_8, window_bounds = array<i64: 32, 64>}, {pipeline_mode = #tpu.pipeline_mode<synchronous>, transform_indices = @transform_9, window_bounds = array<i64: 1, 64>}, {pipeline_mode = #tpu.pipeline_mode<synchronous>, transform_indices = @transform_10, window_bounds = array<i64: 64, 128>}, {pipeline_mode = #tpu.pipeline_mode<synchronous>, transform_indices = @transform_11, window_bounds = array<i64: 1, 128>}, {pipeline_mode = #tpu.pipeline_mode<synchronous>, transform_indices = @transform_12, window_bounds = array<i64: 128, 256>}, {pipeline_mode = #tpu.pipeline_mode<synchronous>, transform_indices = @transform_13, window_bounds = array<i64: 1, 256>}, {transform_indices = @transform_14, window_bounds = array<i64: 512, 256>}, {transform_indices = @transform_15, window_bounds = array<i64: 512, 64>}]} {
    %c0 = arith.constant 0 : index
    %c0_0 = arith.constant 0 : index
    %0 = vector.load %arg1[%c0, %c0_0] : memref<512x256xf32, #tpu.memory_space<vmem>>, vector<512x256xf32>
    %c0_1 = arith.constant 0 : index
    %c0_2 = arith.constant 0 : index
    %1 = vector.load %arg3[%c0_1, %c0_2] : memref<256x128xf32, #tpu.memory_space<vmem>>, vector<256x128xf32>
    %cst = arith.constant dense<0.000000e+00> : vector<512x128xf32>
    %2 = tpu.matmul %0, %1, %cst {dimension_numbers = #tpu.dot_dimension_numbers<[1], [0], [0], [1], [0, 0, 1, 1], [], []>} : vector<512x256xf32>, vector<256x128xf32>, vector<512x128xf32> -> vector<512x128xf32>
    %c0_3 = arith.constant 0 : index
    %c0_4 = arith.constant 0 : index
    %3 = vector.load %arg4[%c0_3, %c0_4] : memref<1x128xf32, #tpu.memory_space<vmem>>, vector<1x128xf32>
    %4 = vector.broadcast %3 : vector<1x128xf32> to vector<512x128xf32>
    %5 = arith.addf %2, %4 : vector<512x128xf32>
    %cst_5 = arith.constant 0.000000e+00 : f32
    %6 = vector.broadcast %cst_5 : f32 to vector<512x128xf32>
    %7 = arith.maximumf %5, %6 : vector<512x128xf32>
    %c0_6 = arith.constant 0 : index
    %c0_7 = arith.constant 0 : index
    %8 = vector.load %arg5[%c0_6, %c0_7] : memref<128x64xf32, #tpu.memory_space<vmem>>, vector<128x64xf32>
    %cst_8 = arith.constant dense<0.000000e+00> : vector<512x64xf32>
    %9 = tpu.matmul %7, %8, %cst_8 {dimension_numbers = #tpu.dot_dimension_numbers<[1], [0], [0], [1], [0, 0, 1, 1], [], []>} : vector<512x128xf32>, vector<128x64xf32>, vector<512x64xf32> -> vector<512x64xf32>
    %c0_9 = arith.constant 0 : index
    %c0_10 = arith.constant 0 : index
    %10 = vector.load %arg6[%c0_9, %c0_10] : memref<1x64xf32, #tpu.memory_space<vmem>>, vector<1x64xf32>
    %11 = vector.broadcast %10 : vector<1x64xf32> to vector<512x64xf32>
    %12 = arith.addf %9, %11 : vector<512x64xf32>
    %cst_11 = arith.constant 0.000000e+00 : f32
    %13 = vector.broadcast %cst_11 : f32 to vector<512x64xf32>
    %14 = arith.maximumf %12, %13 : vector<512x64xf32>
    %c0_12 = arith.constant 0 : index
    %c0_13 = arith.constant 0 : index
    %15 = vector.load %arg7[%c0_12, %c0_13] : memref<64x64xf32, #tpu.memory_space<vmem>>, vector<64x64xf32>
    %cst_14 = arith.constant dense<0.000000e+00> : vector<512x64xf32>
    %16 = tpu.matmul %14, %15, %cst_14 {dimension_numbers = #tpu.dot_dimension_numbers<[1], [0], [0], [1], [0, 0, 1, 1], [], []>} : vector<512x64xf32>, vector<64x64xf32>, vector<512x64xf32> -> vector<512x64xf32>
    %c0_15 = arith.constant 0 : index
    %c0_16 = arith.constant 0 : index
    %17 = vector.load %arg8[%c0_15, %c0_16] : memref<1x64xf32, #tpu.memory_space<vmem>>, vector<1x64xf32>
    %18 = vector.broadcast %17 : vector<1x64xf32> to vector<512x64xf32>
    %19 = arith.addf %16, %18 : vector<512x64xf32>
    %20 = vector.extract_strided_slice %19 {offsets = [0, 0], sizes = [512, 32], strides = [1, 1]} : vector<512x64xf32> to vector<512x32xf32>
    %21 = vector.extract_strided_slice %19 {offsets = [0, 32], sizes = [512, 32], strides = [1, 1]} : vector<512x64xf32> to vector<512x32xf32>
    %cst_17 = arith.constant 5.000000e-01 : f32
    %22 = vector.broadcast %cst_17 : f32 to vector<512x32xf32>
    %23 = arith.mulf %22, %21 : vector<512x32xf32>
    %24 = math.exp %23 : vector<512x32xf32>
    %c0_18 = arith.constant 0 : index
    %c0_19 = arith.constant 0 : index
    %25 = vector.load %arg2[%c0_18, %c0_19] : memref<512x32xf32, #tpu.memory_space<vmem>>, vector<512x32xf32>
    %26 = arith.mulf %25, %24 : vector<512x32xf32>
    %27 = arith.addf %20, %26 : vector<512x32xf32>
    %c0_20 = arith.constant 0 : index
    %c0_21 = arith.constant 0 : index
    %28 = vector.load %arg9[%c0_20, %c0_21] : memref<32x64xf32, #tpu.memory_space<vmem>>, vector<32x64xf32>
    %cst_22 = arith.constant dense<0.000000e+00> : vector<512x64xf32>
    %29 = tpu.matmul %27, %28, %cst_22 {dimension_numbers = #tpu.dot_dimension_numbers<[1], [0], [0], [1], [0, 0, 1, 1], [], []>} : vector<512x32xf32>, vector<32x64xf32>, vector<512x64xf32> -> vector<512x64xf32>
    %c0_23 = arith.constant 0 : index
    %c0_24 = arith.constant 0 : index
    %30 = vector.load %arg10[%c0_23, %c0_24] : memref<1x64xf32, #tpu.memory_space<vmem>>, vector<1x64xf32>
    %31 = vector.broadcast %30 : vector<1x64xf32> to vector<512x64xf32>
    %32 = arith.addf %29, %31 : vector<512x64xf32>
    %cst_25 = arith.constant 0.000000e+00 : f32
    %33 = vector.broadcast %cst_25 : f32 to vector<512x64xf32>
    %34 = arith.maximumf %32, %33 : vector<512x64xf32>
    %c0_26 = arith.constant 0 : index
    %c0_27 = arith.constant 0 : index
    %35 = vector.load %arg11[%c0_26, %c0_27] : memref<64x128xf32, #tpu.memory_space<vmem>>, vector<64x128xf32>
    %cst_28 = arith.constant dense<0.000000e+00> : vector<512x128xf32>
    %36 = tpu.matmul %34, %35, %cst_28 {dimension_numbers = #tpu.dot_dimension_numbers<[1], [0], [0], [1], [0, 0, 1, 1], [], []>} : vector<512x64xf32>, vector<64x128xf32>, vector<512x128xf32> -> vector<512x128xf32>
    %c0_29 = arith.constant 0 : index
    %c0_30 = arith.constant 0 : index
    %37 = vector.load %arg12[%c0_29, %c0_30] : memref<1x128xf32, #tpu.memory_space<vmem>>, vector<1x128xf32>
    %38 = vector.broadcast %37 : vector<1x128xf32> to vector<512x128xf32>
    %39 = arith.addf %36, %38 : vector<512x128xf32>
    %cst_31 = arith.constant 0.000000e+00 : f32
    %40 = vector.broadcast %cst_31 : f32 to vector<512x128xf32>
    %41 = arith.maximumf %39, %40 : vector<512x128xf32>
    %c0_32 = arith.constant 0 : index
    %c0_33 = arith.constant 0 : index
    %42 = vector.load %arg13[%c0_32, %c0_33] : memref<128x256xf32, #tpu.memory_space<vmem>>, vector<128x256xf32>
    %cst_34 = arith.constant dense<0.000000e+00> : vector<512x256xf32>
    %43 = tpu.matmul %41, %42, %cst_34 {dimension_numbers = #tpu.dot_dimension_numbers<[1], [0], [0], [1], [0, 0, 1, 1], [], []>} : vector<512x128xf32>, vector<128x256xf32>, vector<512x256xf32> -> vector<512x256xf32>
    %c0_35 = arith.constant 0 : index
    %c0_36 = arith.constant 0 : index
    %44 = vector.load %arg14[%c0_35, %c0_36] : memref<1x256xf32, #tpu.memory_space<vmem>>, vector<1x256xf32>
    %45 = vector.broadcast %44 : vector<1x256xf32> to vector<512x256xf32>
    %46 = arith.addf %43, %45 : vector<512x256xf32>
    %47 = arith.negf %46 : vector<512x256xf32>
    %48 = math.exp %47 : vector<512x256xf32>
    %cst_37 = arith.constant 1.000000e+00 : f32
    %49 = vector.broadcast %cst_37 : f32 to vector<512x256xf32>
    %50 = arith.addf %49, %48 : vector<512x256xf32>
    %51 = arith.divf %49, %50 : vector<512x256xf32>
    %c0_38 = arith.constant 0 : index
    %c0_39 = arith.constant 0 : index
    %52 = vector.load %arg15[%c0_38, %c0_39] : memref<512x256xf32, #tpu.memory_space<vmem>>, vector<512x256xf32>
    tpu.vector_store %arg15[%c0_38, %c0_39], %51 {strides = array<i32>} : memref<512x256xf32, #tpu.memory_space<vmem>>, vector<512x256xf32>,
    %c0_40 = arith.constant 0 : index
    %c0_41 = arith.constant 0 : index
    %53 = vector.load %arg16[%c0_40, %c0_41] : memref<512x64xf32, #tpu.memory_space<vmem>>, vector<512x64xf32>
    tpu.vector_store %arg16[%c0_40, %c0_41], %19 {strides = array<i32>} : memref<512x64xf32, #tpu.memory_space<vmem>>, vector<512x64xf32>,
    return
  }
  func.func @transform_0(%arg0: i32) -> (i32, i32) {
    %c0_i32 = arith.constant 0 : i32
    %c0_i32_0 = arith.constant 0 : i32
    return %arg0, %c0_i32 : i32, i32
  }
  func.func @transform_1(%arg0: i32) -> (i32, i32) {
    %c0_i32 = arith.constant 0 : i32
    %c0_i32_0 = arith.constant 0 : i32
    return %arg0, %c0_i32 : i32, i32
  }
  func.func @transform_2(%arg0: i32) -> (i32, i32) {
    %c0_i32 = arith.constant 0 : i32
    %c0_i32_0 = arith.constant 0 : i32
    %c0_i32_1 = arith.constant 0 : i32
    return %c0_i32, %c0_i32_0 : i32, i32
  }
  func.func @transform_3(%arg0: i32) -> (i32, i32) {
    %c0_i32 = arith.constant 0 : i32
    %c0_i32_0 = arith.constant 0 : i32
    %c0_i32_1 = arith.constant 0 : i32
    return %c0_i32, %c0_i32_0 : i32, i32
  }
  func.func @transform_4(%arg0: i32) -> (i32, i32) {
    %c0_i32 = arith.constant 0 : i32
    %c0_i32_0 = arith.constant 0 : i32
    %c0_i32_1 = arith.constant 0 : i32
    return %c0_i32, %c0_i32_0 : i32, i32
  }
  func.func @transform_5(%arg0: i32) -> (i32, i32) {
    %c0_i32 = arith.constant 0 : i32
    %c0_i32_0 = arith.constant 0 : i32
    %c0_i32_1 = arith.constant 0 : i32
    return %c0_i32, %c0_i32_0 : i32, i32
  }
  func.func @transform_6(%arg0: i32) -> (i32, i32) {
    %c0_i32 = arith.constant 0 : i32
    %c0_i32_0 = arith.constant 0 : i32
    %c0_i32_1 = arith.constant 0 : i32
    return %c0_i32, %c0_i32_0 : i32, i32
  }
  func.func @transform_7(%arg0: i32) -> (i32, i32) {
    %c0_i32 = arith.constant 0 : i32
    %c0_i32_0 = arith.constant 0 : i32
    %c0_i32_1 = arith.constant 0 : i32
    return %c0_i32, %c0_i32_0 : i32, i32
  }
  func.func @transform_8(%arg0: i32) -> (i32, i32) {
    %c0_i32 = arith.constant 0 : i32
    %c0_i32_0 = arith.constant 0 : i32
    %c0_i32_1 = arith.constant 0 : i32
    return %c0_i32, %c0_i32_0 : i32, i32
  }
  func.func @transform_9(%arg0: i32) -> (i32, i32) {
    %c0_i32 = arith.constant 0 : i32
    %c0_i32_0 = arith.constant 0 : i32
    %c0_i32_1 = arith.constant 0 : i32
    return %c0_i32, %c0_i32_0 : i32, i32
  }
  func.func @transform_10(%arg0: i32) -> (i32, i32) {
    %c0_i32 = arith.constant 0 : i32
    %c0_i32_0 = arith.constant 0 : i32
    %c0_i32_1 = arith.constant 0 : i32
    return %c0_i32, %c0_i32_0 : i32, i32
  }
  func.func @transform_11(%arg0: i32) -> (i32, i32) {
    %c0_i32 = arith.constant 0 : i32
    %c0_i32_0 = arith.constant 0 : i32
    %c0_i32_1 = arith.constant 0 : i32
    return %c0_i32, %c0_i32_0 : i32, i32
  }
  func.func @transform_12(%arg0: i32) -> (i32, i32) {
    %c0_i32 = arith.constant 0 : i32
    %c0_i32_0 = arith.constant 0 : i32
    %c0_i32_1 = arith.constant 0 : i32
    return %c0_i32, %c0_i32_0 : i32, i32
  }
  func.func @transform_13(%arg0: i32) -> (i32, i32) {
    %c0_i32 = arith.constant 0 : i32
    %c0_i32_0 = arith.constant 0 : i32
    %c0_i32_1 = arith.constant 0 : i32
    return %c0_i32, %c0_i32_0 : i32, i32
  }
  func.func @transform_14(%arg0: i32) -> (i32, i32) {
    %c0_i32 = arith.constant 0 : i32
    %c0_i32_0 = arith.constant 0 : i32
    return %arg0, %c0_i32 : i32, i32
  }
  func.func @transform_15(%arg0: i32) -> (i32, i32) {
    %c0_i32 = arith.constant 0 : i32
    %c0_i32_0 = arith.constant 0 : i32
    return %arg0, %c0_i32 : i32, i32
  }
}

</mosaic_0001>

<llo_original>
// kernel: tpu_custom_call.1
$region0: #{tpu_custom_call.1}
  #allocation0 [shape = 'u32[]', space=smem, size = 0x4, offset = 0x4, fixed_abs, tag = 'smem constant byte address 0x4 - core index']
  #allocation1 [shape = 'u32[72,128]{1,0:T(1,128)}', space=vmem, size = 0x9000, scoped, tag = 'internal scratch']
  %s0 = inlined_call_operand.hbm [shape: f32[512,256], index: 0, kind: input, shape index: {}]
  %s1 = inlined_call_operand.vmem [shape: f32[512,32], index: 1, kind: input, shape index: {}]
  %s2 = inlined_call_operand.vmem [shape: f32[256,128], index: 2, kind: input, shape index: {}]
  %s3 = inlined_call_operand.vmem [shape: f32[1,128], index: 3, kind: input, shape index: {}]
  %s4 = inlined_call_operand.vmem [shape: f32[128,64], index: 4, kind: input, shape index: {}]
  %s5 = inlined_call_operand.vmem [shape: f32[1,64], index: 5, kind: input, shape index: {}]
  %s6 = inlined_call_operand.vmem [shape: f32[64,64], index: 6, kind: input, shape index: {}]
  %s7 = inlined_call_operand.vmem [shape: f32[1,64], index: 7, kind: input, shape index: {}]
  %s8 = inlined_call_operand.vmem [shape: f32[32,64], index: 8, kind: input, shape index: {}]
  %s9 = inlined_call_operand.vmem [shape: f32[1,64], index: 9, kind: input, shape index: {}]
  %s10 = inlined_call_operand.vmem [shape: f32[64,128], index: 10, kind: input, shape index: {}]
  %s11 = inlined_call_operand.vmem [shape: f32[1,128], index: 11, kind: input, shape index: {}]
  %s12 = inlined_call_operand.vmem [shape: f32[128,256], index: 12, kind: input, shape index: {}]
  %s13 = inlined_call_operand.vmem [shape: f32[1,256], index: 13, kind: input, shape index: {}]
  %s14 = inlined_call_operand.hbm [shape: f32[512,256], index: 14, kind: output, shape index: {0}]
  %s15 = inlined_call_operand.vmem [shape: f32[512,64], index: 15, kind: output, shape index: {1}]
  %16 = xla_tuple %s14, %s15
  %s17 = sld [smem:[#allocation0]]
  $region78: #{tpu_custom_call.1} parent=0
    _
  %s19 = ssub.s32 1, %s17
  %s20 = scalar_select 0, %s19, %s17
  $region1: #{tpu_custom_call.1} parent=0
    #allocation2 [shape = 'u8[524288]{0}', space=vmem, size = 0x80000, scoped, tag = 'input window, operand 0, single buffered']
    #allocation3 [shape = 's32[1]{0}', space=sflag, size = 0x4, scoped, tag = 'scoped memory for tpu_custom_call.1']
    #allocation4 [shape = 's32[1]{0}', space=sflag, size = 0x4, scoped, tag = 'scoped memory for tpu_custom_call.1']
    #allocation5 [shape = 'u8[524288]{0}', space=vmem, size = 0x80000, scoped, tag = 'output window, operand 0, single buffered']
    %21 = vsyncpa [#allocation3], 0
    %22 = vsyncpa [#allocation4], 0
    // Predicated region
    $region2: #{tpu_custom_call.1} parent=1 // pred_check
      _
    $region3: #{tpu_custom_call.1} parent=1 // pred_check_branch
      %24 = sbr.rel (0) target = $region5
    $region4: #{tpu_custom_call.1} parent=1 // pred_region
      %26 = vsyncadd [#allocation3], 0
      %s27 = sshll.u32 %s0, 4
      %s28 = int_to_ptr.hbm [resolvable:$true] %s27
      %s29 = sshll.u32 [#allocation2], 4
      %s30 = int_to_ptr.vmem [resolvable:$true] %s29
      %35 = dma.hbm_to_vmem [thread:$0]  %s28, 16384, %s30, [#allocation3], 256, 256, 16
    $region5: #{tpu_custom_call.1} parent=1 // pred_fallthru
      _
    // Predicated region
    $region6: #{tpu_custom_call.1} parent=1 // pred_check
      _
    $region7: #{tpu_custom_call.1} parent=1 // pred_check_branch
      %37 = sbr.rel (0) target = $region9
    $region8: #{tpu_custom_call.1} parent=1 // pred_region
      _
    $region9: #{tpu_custom_call.1} parent=1 // pred_fallthru
      _
    // Predicated region
    $region10: #{tpu_custom_call.1} parent=1 // pred_check
      _
    $region11: #{tpu_custom_call.1} parent=1 // pred_check_branch
      %39 = sbr.rel (0) target = $region13
    $region12: #{tpu_custom_call.1} parent=1 // pred_region
      _
    $region13: #{tpu_custom_call.1} parent=1 // pred_fallthru
      _
    // Predicated region
    $region14: #{tpu_custom_call.1} parent=1 // pred_check
      _
    $region15: #{tpu_custom_call.1} parent=1 // pred_check_branch
      %41 = sbr.rel (0) target = $region17
    $region16: #{tpu_custom_call.1} parent=1 // pred_region
      _
    $region17: #{tpu_custom_call.1} parent=1 // pred_fallthru
      _
    // Predicated region
    $region18: #{tpu_custom_call.1} parent=1 // pred_check
      _
    $region19: #{tpu_custom_call.1} parent=1 // pred_check_branch
      %43 = sbr.rel (0) target = $region21
    $region20: #{tpu_custom_call.1} parent=1 // pred_region
      _
    $region21: #{tpu_custom_call.1} parent=1 // pred_fallthru
      _
    // Predicated region
    $region22: #{tpu_custom_call.1} parent=1 // pred_check
      _
    $region23: #{tpu_custom_call.1} parent=1 // pred_check_branch
      %45 = sbr.rel (0) target = $region25
    $region24: #{tpu_custom_call.1} parent=1 // pred_region
      _
    $region25: #{tpu_custom_call.1} parent=1 // pred_fallthru
      _
    // Predicated region
    $region26: #{tpu_custom_call.1} parent=1 // pred_check
      _
    $region27: #{tpu_custom_call.1} parent=1 // pred_check_branch
      %47 = sbr.rel (0) target = $region29
    $region28: #{tpu_custom_call.1} parent=1 // pred_region
      _
    $region29: #{tpu_custom_call.1} parent=1 // pred_fallthru
      _
    // Predicated region
    $region30: #{tpu_custom_call.1} parent=1 // pred_check
      _
    $region31: #{tpu_custom_call.1} parent=1 // pred_check_branch
      %49 = sbr.rel (0) target = $region33
    $region32: #{tpu_custom_call.1} parent=1 // pred_region
      _
    $region33: #{tpu_custom_call.1} parent=1 // pred_fallthru
      _
    // Predicated region
    $region34: #{tpu_custom_call.1} parent=1 // pred_check
      _
    $region35: #{tpu_custom_call.1} parent=1 // pred_check_branch
      %51 = sbr.rel (0) target = $region37
    $region36: #{tpu_custom_call.1} parent=1 // pred_region
      _
    $region37: #{tpu_custom_call.1} parent=1 // pred_fallthru
      _
    // Predicated region
    $region38: #{tpu_custom_call.1} parent=1 // pred_check
      _
    $region39: #{tpu_custom_call.1} parent=1 // pred_check_branch
      %53 = sbr.rel (0) target = $region41
    $region40: #{tpu_custom_call.1} parent=1 // pred_region
      _
    $region41: #{tpu_custom_call.1} parent=1 // pred_fallthru
      _
    // Predicated region
    $region42: #{tpu_custom_call.1} parent=1 // pred_check
      _
    $region43: #{tpu_custom_call.1} parent=1 // pred_check_branch
      %55 = sbr.rel (0) target = $region45
    $region44: #{tpu_custom_call.1} parent=1 // pred_region
      _
    $region45: #{tpu_custom_call.1} parent=1 // pred_fallthru
      _
    // Predicated region
    $region46: #{tpu_custom_call.1} parent=1 // pred_check
      _
    $region47: #{tpu_custom_call.1} parent=1 // pred_check_branch
      %57 = sbr.rel (0) target = $region49
    $region48: #{tpu_custom_call.1} parent=1 // pred_region
      _
    $region49: #{tpu_custom_call.1} parent=1 // pred_fallthru
      _
    // Predicated region
    $region50: #{tpu_custom_call.1} parent=1 // pred_check
      _
    $region51: #{tpu_custom_call.1} parent=1 // pred_check_branch
      %59 = sbr.rel (0) target = $region53
    $region52: #{tpu_custom_call.1} parent=1 // pred_region
      _
    $region53: #{tpu_custom_call.1} parent=1 // pred_fallthru
      _
    // Predicated region
    $region54: #{tpu_custom_call.1} parent=1 // pred_check
      _
    $region55: #{tpu_custom_call.1} parent=1 // pred_check_branch
      %61 = sbr.rel (0) target = $region57
    $region56: #{tpu_custom_call.1} parent=1 // pred_region
      _
    $region57: #{tpu_custom_call.1} parent=1 // pred_fallthru
      _
    // Predicated region
    $region58: #{tpu_custom_call.1} parent=1 // pred_check
      _
    $region59: #{tpu_custom_call.1} parent=1 // pred_check_branch
      %63 = sbr.rel (0) target = $region61
    $region60: #{tpu_custom_call.1} parent=1 // pred_region
      %65 = dma.done [#allocation3], 16384
    $region61: #{tpu_custom_call.1} parent=1 // pred_fallthru
      _
    %v66 = vld [vmem:[#allocation2] sm:$0xff]
    %v67 = vld [vmem:[#allocation2 + $0x8] sm:$0xff]
    %v68 = vld [vmem:[#allocation2 + $0x10] sm:$0xff]
    %v69 = vld [vmem:[#allocation2 + $0x18] sm:$0xff]
    %v70 = vld [vmem:[#allocation2 + $0x20] sm:$0xff]
    %v71 = vld [vmem:[#allocation2 + $0x28] sm:$0xff]
    %v72 = vld [vmem:[#allocation2 + $0x30] sm:$0xff]
    %v73 = vld [vmem:[#allocation2 + $0x38] sm:$0xff]
    %v74 = vld [vmem:[#allocation2 + $0x40] sm:$0xff]
    %v75 = vld [vmem:[#allocation2 + $0x48] sm:$0xff]
    %v76 = vld [vmem:[#allocation2 + $0x50] sm:$0xff]
    %v77 = vld [vmem:[#allocation2 + $0x58] sm:$0xff]
    %v78 = vld [vmem:[#allocation2 + $0x60] sm:$0xff]
    %v79 = vld [vmem:[#allocation2 + $0x68] sm:$0xff]
    %v80 = vld [vmem:[#allocation2 + $0x70] sm:$0xff]
    %v81 = vld [vmem:[#allocation2 + $0x78] sm:$0xff]
    %v82 = vld [vmem:[#allocation2 + $0x80] sm:$0xff]
    %v83 = vld [vmem:[#allocation2 + $0x88] sm:$0xff]
    %v84 = vld [vmem:[#allocation2 + $0x90] sm:$0xff]
    %v85 = vld [vmem:[#allocation2 + $0x98] sm:$0xff]
    %v86 = vld [vmem:[#allocation2 + $0xa0] sm:$0xff]
    %v87 = vld [vmem:[#allocation2 + $0xa8] sm:$0xff]
    %v88 = vld [vmem:[#allocation2 + $0xb0] sm:$0xff]
    %v89 = vld [vmem:[#allocation2 + $0xb8] sm:$0xff]
    %v90 = vld [vmem:[#allocation2 + $0xc0] sm:$0xff]
    %v91 = vld [vmem:[#allocation2 + $0xc8] sm:$0xff]
    %v92 = vld [vmem:[#allocation2 + $0xd0] sm:$0xff]
    %v93 = vld [vmem:[#allocation2 + $0xd8] sm:$0xff]
    %v94 = vld [vmem:[#allocation2 + $0xe0] sm:$0xff]
    %v95 = vld [vmem:[#allocation2 + $0xe8] sm:$0xff]
    %v96 = vld [vmem:[#allocation2 + $0xf0] sm:$0xff]
    %v97 = vld [vmem:[#allocation2 + $0xf8] sm:$0xff]
    %v98 = vld [vmem:[#allocation2 + $0x100] sm:$0xff]
    %v99 = vld [vmem:[#allocation2 + $0x108] sm:$0xff]
    %v100 = vld [vmem:[#allocation2 + $0x110] sm:$0xff]
    %v101 = vld [vmem:[#allocation2 + $0x118] sm:$0xff]
    %v102 = vld [vmem:[#allocation2 + $0x120] sm:$0xff]
    %v103 = vld [vmem:[#allocation2 + $0x128] sm:$0xff]
    %v104 = vld [vmem:[#allocation2 + $0x130] sm:$0xff]
    %v105 = vld [vmem:[#allocation2 + $0x138] sm:$0xff]
    %v106 = vld [vmem:[#allocation2 + $0x140] sm:$0xff]
    %v107 = vld [vmem:[#allocation2 + $0x148] sm:$0xff]
    %v108 = vld [vmem:[#allocation2 + $0x150] sm:$0xff]
    %v109 = vld [vmem:[#allocation2 + $0x158] sm:$0xff]
    %v110 = vld [vmem:[#allocation2 + $0x160] sm:$0xff]
    %v111 = vld [vmem:[#allocation2 + $0x168] sm:$0xff]
    %v112 = vld [vmem:[#allocation2 + $0x170] sm:$0xff]
    %v113 = vld [vmem:[#allocation2 + $0x178] sm:$0xff]
    %v114 = vld [vmem:[#allocation2 + $0x180] sm:$0xff]
    %v115 = vld [vmem:[#allocation2 + $0x188] sm:$0xff]
    %v116 = vld [vmem:[#allocation2 + $0x190] sm:$0xff]
    %v117 = vld [vmem:[#allocation2 + $0x198] sm:$0xff]
    %v118 = vld [vmem:[#allocation2 + $0x1a0] sm:$0xff]
    %v119 = vld [vmem:[#allocation2 + $0x1a8] sm:$0xff]
    %v120 = vld [vmem:[#allocation2 + $0x1b0] sm:$0xff]
    %v121 = vld [vmem:[#allocation2 + $0x1b8] sm:$0xff]
    %v122 = vld [vmem:[#allocation2 + $0x1c0] sm:$0xff]
    %v123 = vld [vmem:[#allocation2 + $0x1c8] sm:$0xff]
    %v124 = vld [vmem:[#allocation2 + $0x1d0] sm:$0xff]
    %v125 = vld [vmem:[#allocation2 + $0x1d8] sm:$0xff]
    %v126 = vld [vmem:[#allocation2 + $0x1e0] sm:$0xff]
    %v127 = vld [vmem:[#allocation2 + $0x1e8] sm:$0xff]
    %v128 = vld [vmem:[#allocation2 + $0x1f0] sm:$0xff]
    %v129 = vld [vmem:[#allocation2 + $0x1f8] sm:$0xff]
    %v130 = vld [vmem:[#allocation2 + $0x200] sm:$0xff]
    %v131 = vld [vmem:[#allocation2 + $0x208] sm:$0xff]
    %v132 = vld [vmem:[#allocation2 + $0x210] sm:$0xff]
    %v133 = vld [vmem:[#allocation2 + $0x218] sm:$0xff]
    %v134 = vld [vmem:[#allocation2 + $0x220] sm:$0xff]
    %v135 = vld [vmem:[#allocation2 + $0x228] sm:$0xff]
    %v136 = vld [vmem:[#allocation2 + $0x230] sm:$0xff]
    %v137 = vld [vmem:[#allocation2 + $0x238] sm:$0xff]
    %v138 = vld [vmem:[#allocation2 + $0x240] sm:$0xff]
    %v139 = vld [vmem:[#allocation2 + $0x248] sm:$0xff]
    %v140 = vld [vmem:[#allocation2 + $0x250] sm:$0xff]
    %v141 = vld [vmem:[#allocation2 + $0x258] sm:$0xff]
    %v142 = vld [vmem:[#allocation2 + $0x260] sm:$0xff]
    %v143 = vld [vmem:[#allocation2 + $0x268] sm:$0xff]
    %v144 = vld [vmem:[#allocation2 + $0x270] sm:$0xff]
    %v145 = vld [vmem:[#allocation2 + $0x278] sm:$0xff]
    %v146 = vld [vmem:[#allocation2 + $0x280] sm:$0xff]
    %v147 = vld [vmem:[#allocation2 + $0x288] sm:$0xff]
    %v148 = vld [vmem:[#allocation2 + $0x290] sm:$0xff]
    %v149 = vld [vmem:[#allocation2 + $0x298] sm:$0xff]
    %v150 = vld [vmem:[#allocation2 + $0x2a0] sm:$0xff]
    %v151 = vld [vmem:[#allocation2 + $0x2a8] sm:$0xff]
    %v152 = vld [vmem:[#allocation2 + $0x2b0] sm:$0xff]
    %v153 = vld [vmem:[#allocation2 + $0x2b8] sm:$0xff]
    %v154 = vld [vmem:[#allocation2 + $0x2c0] sm:$0xff]
    %v155 = vld [vmem:[#allocation2 + $0x2c8] sm:$0xff]
    %v156 = vld [vmem:[#allocation2 + $0x2d0] sm:$0xff]
    %v157 = vld [vmem:[#allocation2 + $0x2d8] sm:$0xff]
    %v158 = vld [vmem:[#allocation2 + $0x2e0] sm:$0xff]
    %v159 = vld [vmem:[#allocation2 + $0x2e8] sm:$0xff]
    %v160 = vld [vmem:[#allocation2 + $0x2f0] sm:$0xff]
    %v161 = vld [vmem:[#allocation2 + $0x2f8] sm:$0xff]
    %v162 = vld [vmem:[#allocation2 + $0x300] sm:$0xff]
    %v163 = vld [vmem:[#allocation2 + $0x308] sm:$0xff]
    %v164 = vld [vmem:[#allocation2 + $0x310] sm:$0xff]
    %v165 = vld [vmem:[#allocation2 + $0x318] sm:$0xff]
    %v166 = vld [vmem:[#allocation2 + $0x320] sm:$0xff]
    %v167 = vld [vmem:[#allocation2 + $0x328] sm:$0xff]
    %v168 = vld [vmem:[#allocation2 + $0x330] sm:$0xff]
    %v169 = vld [vmem:[#allocation2 + $0x338] sm:$0xff]
    %v170 = vld [vmem:[#allocation2 + $0x340] sm:$0xff]
    %v171 = vld [vmem:[#allocation2 + $0x348] sm:$0xff]
    %v172 = vld [vmem:[#allocation2 + $0x350] sm:$0xff]
    %v173 = vld [vmem:[#allocation2 + $0x358] sm:$0xff]
    %v174 = vld [vmem:[#allocation2 + $0x360] sm:$0xff]
    %v175 = vld [vmem:[#allocation2 + $0x368] sm:$0xff]
    %v176 = vld [vmem:[#allocation2 + $0x370] sm:$0xff]
    %v177 = vld [vmem:[#allocation2 + $0x378] sm:$0xff]
    %v178 = vld [vmem:[#allocation2 + $0x380] sm:$0xff]
    %v179 = vld [vmem:[#allocation2 + $0x388] sm:$0xff]
    %v180 = vld [vmem:[#allocation2 + $0x390] sm:$0xff]
    %v181 = vld [vmem:[#allocation2 + $0x398] sm:$0xff]
    %v182 = vld [vmem:[#allocation2 + $0x3a0] sm:$0xff]
    %v183 = vld [vmem:[#allocation2 + $0x3a8] sm:$0xff]
    %v184 = vld [vmem:[#allocation2 + $0x3b0] sm:$0xff]
    %v185 = vld [vmem:[#allocation2 + $0x3b8] sm:$0xff]
    %v186 = vld [vmem:[#allocation2 + $0x3c0] sm:$0xff]
    %v187 = vld [vmem:[#allocation2 + $0x3c8] sm:$0xff]
    %v188 = vld [vmem:[#allocation2 + $0x3d0] sm:$0xff]
    %v189 = vld [vmem:[#allocation2 + $0x3d8] sm:$0xff]
    %v190 = vld [vmem:[#allocation2 + $0x3e0] sm:$0xff]
    %v191 = vld [vmem:[#allocation2 + $0x3e8] sm:$0xff]
    %v192 = vld [vmem:[#allocation2 + $0x3f0] sm:$0xff]
    %v193 = vld [vmem:[#allocation2 + $0x3f8] sm:$0xff]
    %v194 = vld [vmem:[%s2] sm:$0xff]
    %v195 = vld [vmem:[%s2 + $0x8] sm:$0xff]
    %v196 = vld [vmem:[%s2 + $0x10] sm:$0xff]
    %v197 = vld [vmem:[%s2 + $0x18] sm:$0xff]
    %v198 = vld [vmem:[%s2 + $0x20] sm:$0xff]
    %v199 = vld [vmem:[%s2 + $0x28] sm:$0xff]
    %v200 = vld [vmem:[%s2 + $0x30] sm:$0xff]
    %v201 = vld [vmem:[%s2 + $0x38] sm:$0xff]
    %v202 = vld [vmem:[%s2 + $0x40] sm:$0xff]
    %v203 = vld [vmem:[%s2 + $0x48] sm:$0xff]
    %v204 = vld [vmem:[%s2 + $0x50] sm:$0xff]
    %v205 = vld [vmem:[%s2 + $0x58] sm:$0xff]
    %v206 = vld [vmem:[%s2 + $0x60] sm:$0xff]
    %v207 = vld [vmem:[%s2 + $0x68] sm:$0xff]
    %v208 = vld [vmem:[%s2 + $0x70] sm:$0xff]
    %v209 = vld [vmem:[%s2 + $0x78] sm:$0xff]
    %v210 = vld [vmem:[%s2 + $0x80] sm:$0xff]
    %v211 = vld [vmem:[%s2 + $0x88] sm:$0xff]
    %v212 = vld [vmem:[%s2 + $0x90] sm:$0xff]
    %v213 = vld [vmem:[%s2 + $0x98] sm:$0xff]
    %v214 = vld [vmem:[%s2 + $0xa0] sm:$0xff]
    %v215 = vld [vmem:[%s2 + $0xa8] sm:$0xff]
    %v216 = vld [vmem:[%s2 + $0xb0] sm:$0xff]
    %v217 = vld [vmem:[%s2 + $0xb8] sm:$0xff]
    %v218 = vld [vmem:[%s2 + $0xc0] sm:$0xff]
    %v219 = vld [vmem:[%s2 + $0xc8] sm:$0xff]
    %v220 = vld [vmem:[%s2 + $0xd0] sm:$0xff]
    %v221 = vld [vmem:[%s2 + $0xd8] sm:$0xff]
    %v222 = vld [vmem:[%s2 + $0xe0] sm:$0xff]
    %v223 = vld [vmem:[%s2 + $0xe8] sm:$0xff]
    %v224 = vld [vmem:[%s2 + $0xf0] sm:$0xff]
    %v225 = vld [vmem:[%s2 + $0xf8] sm:$0xff]
    %v226 = vld [vmem:[%s3] sm:$0x1]
    %v228 = vperm.slane %v226, 0
    %230 = vmatpush.msra.mxu0 %v209
    %231 = vmatpush.msra.mxu0 %v208
    %232 = vmatpush.msra.mxu0 %v207
    %233 = vmatpush.msra.mxu0 %v206
    %234 = vmatpush.msra.mxu0 %v205
    %235 = vmatpush.msra.mxu0 %v204
    %236 = vmatpush.msra.mxu0 %v203
    %237 = vmatpush.msra.mxu0 %v202
    %238 = vmatpush.msra.mxu0 %v201
    %239 = vmatpush.msra.mxu0 %v200
    %240 = vmatpush.msra.mxu0 %v199
    %241 = vmatpush.msra.mxu0 %v198
    %242 = vmatpush.msra.mxu0 %v197
    %243 = vmatpush.msra.mxu0 %v196
    %244 = vmatpush.msra.mxu0 %v195
    %245 = vmatpush.msra.mxu0 %v194
    %246 = vmatmul.f32.gmra.mxu0 %v66
    %v247 = vpop.f32.mrf.mxu0
    %v248 = vadd.f32 %v228, %v247
    %249 = vmatmul.f32.gmra.mxu0 %v68
    %v250 = vpop.f32.mrf.mxu0
    %v251 = vadd.f32 %v228, %v250
    %252 = vmatmul.f32.gmra.mxu0 %v70
    %v253 = vpop.f32.mrf.mxu0
    %v254 = vadd.f32 %v228, %v253
    %255 = vmatmul.f32.gmra.mxu0 %v72
    %v256 = vpop.f32.mrf.mxu0
    %v257 = vadd.f32 %v228, %v256
    %258 = vmatmul.f32.gmra.mxu0 %v74
    %v259 = vpop.f32.mrf.mxu0
    %v260 = vadd.f32 %v228, %v259
    %261 = vmatmul.f32.gmra.mxu0 %v76
    %v262 = vpop.f32.mrf.mxu0
    %v263 = vadd.f32 %v228, %v262
    %264 = vmatmul.f32.gmra.mxu0 %v78
    %v265 = vpop.f32.mrf.mxu0
    %v266 = vadd.f32 %v228, %v265
    %267 = vmatmul.f32.gmra.mxu0 %v80
    %v268 = vpop.f32.mrf.mxu0
    %v269 = vadd.f32 %v228, %v268
    %270 = vmatmul.f32.gmra.mxu0 %v82
    %v271 = vpop.f32.mrf.mxu0
    %v272 = vadd.f32 %v228, %v271
    %273 = vmatmul.f32.gmra.mxu0 %v84
    %v274 = vpop.f32.mrf.mxu0
    %v275 = vadd.f32 %v228, %v274
    %276 = vmatmul.f32.gmra.mxu0 %v86
    %v277 = vpop.f32.mrf.mxu0
    %v278 = vadd.f32 %v228, %v277
    %279 = vmatmul.f32.gmra.mxu0 %v88
    %v280 = vpop.f32.mrf.mxu0
    %v281 = vadd.f32 %v228, %v280
    %282 = vmatmul.f32.gmra.mxu0 %v90
    %v283 = vpop.f32.mrf.mxu0
    %v284 = vadd.f32 %v228, %v283
    %285 = vmatmul.f32.gmra.mxu0 %v92
    %v286 = vpop.f32.mrf.mxu0
    %v287 = vadd.f32 %v228, %v286
    %288 = vmatmul.f32.gmra.mxu0 %v94
    %v289 = vpop.f32.mrf.mxu0
    %v290 = vadd.f32 %v228, %v289
    %291 = vmatmul.f32.gmra.mxu0 %v96
    %v292 = vpop.f32.mrf.mxu0
    %v293 = vadd.f32 %v228, %v292
    %294 = vmatmul.f32.gmra.mxu0 %v98
    %v295 = vpop.f32.mrf.mxu0
    %v296 = vadd.f32 %v228, %v295
    %297 = vmatmul.f32.gmra.mxu0 %v100
    %v298 = vpop.f32.mrf.mxu0
    %v299 = vadd.f32 %v228, %v298
    %300 = vmatmul.f32.gmra.mxu0 %v102
    %v301 = vpop.f32.mrf.mxu0
    %v302 = vadd.f32 %v228, %v301
    %303 = vmatmul.f32.gmra.mxu0 %v104
    %v304 = vpop.f32.mrf.mxu0
    %v305 = vadd.f32 %v228, %v304
    %306 = vmatmul.f32.gmra.mxu0 %v106
    %v307 = vpop.f32.mrf.mxu0
    %v308 = vadd.f32 %v228, %v307
    %309 = vmatmul.f32.gmra.mxu0 %v108
    %v310 = vpop.f32.mrf.mxu0
    %v311 = vadd.f32 %v228, %v310
    %312 = vmatmul.f32.gmra.mxu0 %v110
    %v313 = vpop.f32.mrf.mxu0
    %v314 = vadd.f32 %v228, %v313
    %315 = vmatmul.f32.gmra.mxu0 %v112
    %v316 = vpop.f32.mrf.mxu0
    %v317 = vadd.f32 %v228, %v316
    %318 = vmatmul.f32.gmra.mxu0 %v114
    %v319 = vpop.f32.mrf.mxu0
    %v320 = vadd.f32 %v228, %v319
    %321 = vmatmul.f32.gmra.mxu0 %v116
    %v322 = vpop.f32.mrf.mxu0
    %v323 = vadd.f32 %v228, %v322
    %324 = vmatmul.f32.gmra.mxu0 %v118
    %v325 = vpop.f32.mrf.mxu0
    %v326 = vadd.f32 %v228, %v325
    %327 = vmatmul.f32.gmra.mxu0 %v120
    %v328 = vpop.f32.mrf.mxu0
    %v329 = vadd.f32 %v228, %v328
    %330 = vmatmul.f32.gmra.mxu0 %v122
    %v331 = vpop.f32.mrf.mxu0
    %v332 = vadd.f32 %v228, %v331
    %333 = vmatmul.f32.gmra.mxu0 %v124
    %v334 = vpop.f32.mrf.mxu0
    %v335 = vadd.f32 %v228, %v334
    %336 = vmatmul.f32.gmra.mxu0 %v126
    %v337 = vpop.f32.mrf.mxu0
    %v338 = vadd.f32 %v228, %v337
    %339 = vmatmul.f32.gmra.mxu0 %v128
    %v340 = vpop.f32.mrf.mxu0
    %v341 = vadd.f32 %v228, %v340
    %342 = vmatmul.f32.gmra.mxu0 %v130
    %v343 = vpop.f32.mrf.mxu0
    %v344 = vadd.f32 %v228, %v343
    %345 = vmatmul.f32.gmra.mxu0 %v132
    %v346 = vpop.f32.mrf.mxu0
    %v347 = vadd.f32 %v228, %v346
    %348 = vmatmul.f32.gmra.mxu0 %v134
    %v349 = vpop.f32.mrf.mxu0
    %v350 = vadd.f32 %v228, %v349
    %351 = vmatmul.f32.gmra.mxu0 %v136
    %v352 = vpop.f32.mrf.mxu0
    %v353 = vadd.f32 %v228, %v352
    %354 = vmatmul.f32.gmra.mxu0 %v138
    %v355 = vpop.f32.mrf.mxu0
    %v356 = vadd.f32 %v228, %v355
    %357 = vmatmul.f32.gmra.mxu0 %v140
    %v358 = vpop.f32.mrf.mxu0
    %v359 = vadd.f32 %v228, %v358
    %360 = vmatmul.f32.gmra.mxu0 %v142
    %v361 = vpop.f32.mrf.mxu0
    %v362 = vadd.f32 %v228, %v361
    %363 = vmatmul.f32.gmra.mxu0 %v144
    %v364 = vpop.f32.mrf.mxu0
    %v365 = vadd.f32 %v228, %v364
    %366 = vmatmul.f32.gmra.mxu0 %v146
    %v367 = vpop.f32.mrf.mxu0
    %v368 = vadd.f32 %v228, %v367
    %369 = vmatmul.f32.gmra.mxu0 %v148
    %v370 = vpop.f32.mrf.mxu0
    %v371 = vadd.f32 %v228, %v370
    %372 = vmatmul.f32.gmra.mxu0 %v150
    %v373 = vpop.f32.mrf.mxu0
    %v374 = vadd.f32 %v228, %v373
    %375 = vmatmul.f32.gmra.mxu0 %v152
    %v376 = vpop.f32.mrf.mxu0
    %v377 = vadd.f32 %v228, %v376
    %378 = vmatmul.f32.gmra.mxu0 %v154
    %v379 = vpop.f32.mrf.mxu0
    %v380 = vadd.f32 %v228, %v379
    %381 = vmatmul.f32.gmra.mxu0 %v156
    %v382 = vpop.f32.mrf.mxu0
    %v383 = vadd.f32 %v228, %v382
    %384 = vmatmul.f32.gmra.mxu0 %v158
    %v385 = vpop.f32.mrf.mxu0
    %v386 = vadd.f32 %v228, %v385
    %387 = vmatmul.f32.gmra.mxu0 %v160
    %v388 = vpop.f32.mrf.mxu0
    %v389 = vadd.f32 %v228, %v388
    %390 = vmatmul.f32.gmra.mxu0 %v162
    %v391 = vpop.f32.mrf.mxu0
    %v392 = vadd.f32 %v228, %v391
    %393 = vmatmul.f32.gmra.mxu0 %v164
    %v394 = vpop.f32.mrf.mxu0
    %v395 = vadd.f32 %v228, %v394
    %396 = vmatmul.f32.gmra.mxu0 %v166
    %v397 = vpop.f32.mrf.mxu0
    %v398 = vadd.f32 %v228, %v397
    %399 = vmatmul.f32.gmra.mxu0 %v168
    %v400 = vpop.f32.mrf.mxu0
    %v401 = vadd.f32 %v228, %v400
    %402 = vmatmul.f32.gmra.mxu0 %v170
    %v403 = vpop.f32.mrf.mxu0
    %v404 = vadd.f32 %v228, %v403
    %405 = vmatmul.f32.gmra.mxu0 %v172
    %v406 = vpop.f32.mrf.mxu0
    %v407 = vadd.f32 %v228, %v406
    %408 = vmatmul.f32.gmra.mxu0 %v174
    %v409 = vpop.f32.mrf.mxu0
    %v410 = vadd.f32 %v228, %v409
    %411 = vmatmul.f32.gmra.mxu0 %v176
    %v412 = vpop.f32.mrf.mxu0
    %v413 = vadd.f32 %v228, %v412
    %414 = vmatmul.f32.gmra.mxu0 %v178
    %v415 = vpop.f32.mrf.mxu0
    %v416 = vadd.f32 %v228, %v415
    %417 = vmatmul.f32.gmra.mxu0 %v180
    %v418 = vpop.f32.mrf.mxu0
    %v419 = vadd.f32 %v228, %v418
    %420 = vmatmul.f32.gmra.mxu0 %v182
    %v421 = vpop.f32.mrf.mxu0
    %v422 = vadd.f32 %v228, %v421
    %423 = vmatmul.f32.gmra.mxu0 %v184
    %v424 = vpop.f32.mrf.mxu0
    %v425 = vadd.f32 %v228, %v424
    %426 = vmatmul.f32.gmra.mxu0 %v186
    %v427 = vpop.f32.mrf.mxu0
    %v428 = vadd.f32 %v228, %v427
    %429 = vmatmul.f32.gmra.mxu0 %v188
    %v430 = vpop.f32.mrf.mxu0
    %v431 = vadd.f32 %v228, %v430
    %432 = vmatmul.f32.gmra.mxu0 %v190
    %v433 = vpop.f32.mrf.mxu0
    %v434 = vadd.f32 %v228, %v433
    %435 = vmatmul.f32.gmra.mxu0 %v192
    %v436 = vpop.f32.mrf.mxu0
    %v437 = vadd.f32 %v228, %v436
    %438 = vdwg.mxu0
    %439 = vmatpush.msra.mxu0 %v225
    %440 = vmatpush.msra.mxu0 %v224
    %441 = vmatpush.msra.mxu0 %v223
    %442 = vmatpush.msra.mxu0 %v222
    %443 = vmatpush.msra.mxu0 %v221
    %444 = vmatpush.msra.mxu0 %v220
    %445 = vmatpush.msra.mxu0 %v219
    %446 = vmatpush.msra.mxu0 %v218
    %447 = vmatpush.msra.mxu0 %v217
    %448 = vmatpush.msra.mxu0 %v216
    %449 = vmatpush.msra.mxu0 %v215
    %450 = vmatpush.msra.mxu0 %v214
    %451 = vmatpush.msra.mxu0 %v213
    %452 = vmatpush.msra.mxu0 %v212
    %453 = vmatpush.msra.mxu0 %v211
    %454 = vmatpush.msra.mxu0 %v210
    %455 = vmatmul.f32.gmra.mxu0 %v67
    %v456 = vpop.f32.mrf.mxu0
    %v457 = vadd.f32 %v248, %v456
    %458 = vmatmul.f32.gmra.mxu0 %v69
    %v459 = vpop.f32.mrf.mxu0
    %v460 = vadd.f32 %v251, %v459
    %461 = vmatmul.f32.gmra.mxu0 %v71
    %v462 = vpop.f32.mrf.mxu0
    %v463 = vadd.f32 %v254, %v462
    %464 = vmatmul.f32.gmra.mxu0 %v73
    %v465 = vpop.f32.mrf.mxu0
    %v466 = vadd.f32 %v257, %v465
    %467 = vmatmul.f32.gmra.mxu0 %v75
    %v468 = vpop.f32.mrf.mxu0
    %v469 = vadd.f32 %v260, %v468
    %470 = vmatmul.f32.gmra.mxu0 %v77
    %v471 = vpop.f32.mrf.mxu0
    %v472 = vadd.f32 %v263, %v471
    %473 = vmatmul.f32.gmra.mxu0 %v79
    %v474 = vpop.f32.mrf.mxu0
    %v475 = vadd.f32 %v266, %v474
    %476 = vmatmul.f32.gmra.mxu0 %v81
    %v477 = vpop.f32.mrf.mxu0
    %v478 = vadd.f32 %v269, %v477
    %479 = vmatmul.f32.gmra.mxu0 %v83
    %v480 = vpop.f32.mrf.mxu0
    %v481 = vadd.f32 %v272, %v480
    %482 = vmatmul.f32.gmra.mxu0 %v85
    %v483 = vpop.f32.mrf.mxu0
    %v484 = vadd.f32 %v275, %v483
    %485 = vmatmul.f32.gmra.mxu0 %v87
    %v486 = vpop.f32.mrf.mxu0
    %v487 = vadd.f32 %v278, %v486
    %488 = vmatmul.f32.gmra.mxu0 %v89
    %v489 = vpop.f32.mrf.mxu0
    %v490 = vadd.f32 %v281, %v489
    %491 = vmatmul.f32.gmra.mxu0 %v91
    %v492 = vpop.f32.mrf.mxu0
    %v493 = vadd.f32 %v284, %v492
    %494 = vmatmul.f32.gmra.mxu0 %v93
    %v495 = vpop.f32.mrf.mxu0
    %v496 = vadd.f32 %v287, %v495
    %497 = vmatmul.f32.gmra.mxu0 %v95
    %v498 = vpop.f32.mrf.mxu0
    %v499 = vadd.f32 %v290, %v498
    %500 = vmatmul.f32.gmra.mxu0 %v97
    %v501 = vpop.f32.mrf.mxu0
    %v502 = vadd.f32 %v293, %v501
    %503 = vmatmul.f32.gmra.mxu0 %v99
    %v504 = vpop.f32.mrf.mxu0
    %v505 = vadd.f32 %v296, %v504
    %506 = vmatmul.f32.gmra.mxu0 %v101
    %v507 = vpop.f32.mrf.mxu0
    %v508 = vadd.f32 %v299, %v507
    %509 = vmatmul.f32.gmra.mxu0 %v103
    %v510 = vpop.f32.mrf.mxu0
    %v511 = vadd.f32 %v302, %v510
    %512 = vmatmul.f32.gmra.mxu0 %v105
    %v513 = vpop.f32.mrf.mxu0
    %v514 = vadd.f32 %v305, %v513
    %515 = vmatmul.f32.gmra.mxu0 %v107
    %v516 = vpop.f32.mrf.mxu0
    %v517 = vadd.f32 %v308, %v516
    %518 = vmatmul.f32.gmra.mxu0 %v109
    %v519 = vpop.f32.mrf.mxu0
    %v520 = vadd.f32 %v311, %v519
    %521 = vmatmul.f32.gmra.mxu0 %v111
    %v522 = vpop.f32.mrf.mxu0
    %v523 = vadd.f32 %v314, %v522
    %524 = vmatmul.f32.gmra.mxu0 %v113
    %v525 = vpop.f32.mrf.mxu0
    %v526 = vadd.f32 %v317, %v525
    %527 = vmatmul.f32.gmra.mxu0 %v115
    %v528 = vpop.f32.mrf.mxu0
    %v529 = vadd.f32 %v320, %v528
    %530 = vmatmul.f32.gmra.mxu0 %v117
    %v531 = vpop.f32.mrf.mxu0
    %v532 = vadd.f32 %v323, %v531
    %533 = vmatmul.f32.gmra.mxu0 %v119
    %v534 = vpop.f32.mrf.mxu0
    %v535 = vadd.f32 %v326, %v534
    %536 = vmatmul.f32.gmra.mxu0 %v121
    %v537 = vpop.f32.mrf.mxu0
    %v538 = vadd.f32 %v329, %v537
    %539 = vmatmul.f32.gmra.mxu0 %v123
    %v540 = vpop.f32.mrf.mxu0
    %v541 = vadd.f32 %v332, %v540
    %542 = vmatmul.f32.gmra.mxu0 %v125
    %v543 = vpop.f32.mrf.mxu0
    %v544 = vadd.f32 %v335, %v543
    %545 = vmatmul.f32.gmra.mxu0 %v127
    %v546 = vpop.f32.mrf.mxu0
    %v547 = vadd.f32 %v338, %v546
    %548 = vmatmul.f32.gmra.mxu0 %v129
    %v549 = vpop.f32.mrf.mxu0
    %v550 = vadd.f32 %v341, %v549
    %551 = vmatmul.f32.gmra.mxu0 %v131
    %v552 = vpop.f32.mrf.mxu0
    %v553 = vadd.f32 %v344, %v552
    %554 = vmatmul.f32.gmra.mxu0 %v133
    %v555 = vpop.f32.mrf.mxu0
    %v556 = vadd.f32 %v347, %v555
    %557 = vmatmul.f32.gmra.mxu0 %v135
    %v558 = vpop.f32.mrf.mxu0
    %v559 = vadd.f32 %v350, %v558
    %560 = vmatmul.f32.gmra.mxu0 %v137
    %v561 = vpop.f32.mrf.mxu0
    %v562 = vadd.f32 %v353, %v561
    %563 = vmatmul.f32.gmra.mxu0 %v139
    %v564 = vpop.f32.mrf.mxu0
    %v565 = vadd.f32 %v356, %v564
    %566 = vmatmul.f32.gmra.mxu0 %v141
    %v567 = vpop.f32.mrf.mxu0
    %v568 = vadd.f32 %v359, %v567
    %569 = vmatmul.f32.gmra.mxu0 %v143
    %v570 = vpop.f32.mrf.mxu0
    %v571 = vadd.f32 %v362, %v570
    %572 = vmatmul.f32.gmra.mxu0 %v145
    %v573 = vpop.f32.mrf.mxu0
    %v574 = vadd.f32 %v365, %v573
    %575 = vmatmul.f32.gmra.mxu0 %v147
    %v576 = vpop.f32.mrf.mxu0
    %v577 = vadd.f32 %v368, %v576
    %578 = vmatmul.f32.gmra.mxu0 %v149
    %v579 = vpop.f32.mrf.mxu0
    %v580 = vadd.f32 %v371, %v579
    %581 = vmatmul.f32.gmra.mxu0 %v151
    %v582 = vpop.f32.mrf.mxu0
    %v583 = vadd.f32 %v374, %v582
    %584 = vmatmul.f32.gmra.mxu0 %v153
    %v585 = vpop.f32.mrf.mxu0
    %v586 = vadd.f32 %v377, %v585
    %587 = vmatmul.f32.gmra.mxu0 %v155
    %v588 = vpop.f32.mrf.mxu0
    %v589 = vadd.f32 %v380, %v588
    %590 = vmatmul.f32.gmra.mxu0 %v157
    %v591 = vpop.f32.mrf.mxu0
    %v592 = vadd.f32 %v383, %v591
    %593 = vmatmul.f32.gmra.mxu0 %v159
    %v594 = vpop.f32.mrf.mxu0
    %v595 = vadd.f32 %v386, %v594
    %596 = vmatmul.f32.gmra.mxu0 %v161
    %v597 = vpop.f32.mrf.mxu0
    %v598 = vadd.f32 %v389, %v597
    %599 = vmatmul.f32.gmra.mxu0 %v163
    %v600 = vpop.f32.mrf.mxu0
    %v601 = vadd.f32 %v392, %v600
    %602 = vmatmul.f32.gmra.mxu0 %v165
    %v603 = vpop.f32.mrf.mxu0
    %v604 = vadd.f32 %v395, %v603
    %605 = vmatmul.f32.gmra.mxu0 %v167
    %v606 = vpop.f32.mrf.mxu0
    %v607 = vadd.f32 %v398, %v606
    %608 = vmatmul.f32.gmra.mxu0 %v169
    %v609 = vpop.f32.mrf.mxu0
    %v610 = vadd.f32 %v401, %v609
    %611 = vmatmul.f32.gmra.mxu0 %v171
    %v612 = vpop.f32.mrf.mxu0
    %v613 = vadd.f32 %v404, %v612
    %614 = vmatmul.f32.gmra.mxu0 %v173
    %v615 = vpop.f32.mrf.mxu0
    %v616 = vadd.f32 %v407, %v615
    %617 = vmatmul.f32.gmra.mxu0 %v175
    %v618 = vpop.f32.mrf.mxu0
    %v619 = vadd.f32 %v410, %v618
    %620 = vmatmul.f32.gmra.mxu0 %v177
    %v621 = vpop.f32.mrf.mxu0
    %v622 = vadd.f32 %v413, %v621
    %623 = vmatmul.f32.gmra.mxu0 %v179
    %v624 = vpop.f32.mrf.mxu0
    %v625 = vadd.f32 %v416, %v624
    %626 = vmatmul.f32.gmra.mxu0 %v181
    %v627 = vpop.f32.mrf.mxu0
    %v628 = vadd.f32 %v419, %v627
    %629 = vmatmul.f32.gmra.mxu0 %v183
    %v630 = vpop.f32.mrf.mxu0
    %v631 = vadd.f32 %v422, %v630
    %632 = vmatmul.f32.gmra.mxu0 %v185
    %v633 = vpop.f32.mrf.mxu0
    %v634 = vadd.f32 %v425, %v633
    %635 = vmatmul.f32.gmra.mxu0 %v187
    %v636 = vpop.f32.mrf.mxu0
    %v637 = vadd.f32 %v428, %v636
    %638 = vmatmul.f32.gmra.mxu0 %v189
    %v639 = vpop.f32.mrf.mxu0
    %v640 = vadd.f32 %v431, %v639
    %641 = vmatmul.f32.gmra.mxu0 %v191
    %v642 = vpop.f32.mrf.mxu0
    %v643 = vadd.f32 %v434, %v642
    %644 = vmatmul.f32.gmra.mxu0 %v193
    %v645 = vpop.f32.mrf.mxu0
    %v646 = vadd.f32 %v437, %v645
    %647 = vdwg.mxu0
    %v648 = vmax.f32 %v457, 0.0
    %v649 = vmax.f32 %v460, 0.0
    %v650 = vmax.f32 %v463, 0.0
    %v651 = vmax.f32 %v466, 0.0
    %v652 = vmax.f32 %v469, 0.0
    %v653 = vmax.f32 %v472, 0.0
    %v654 = vmax.f32 %v475, 0.0
    %v655 = vmax.f32 %v478, 0.0
    %v656 = vmax.f32 %v481, 0.0
    %v657 = vmax.f32 %v484, 0.0
    %v658 = vmax.f32 %v487, 0.0
    %v659 = vmax.f32 %v490, 0.0
    %v660 = vmax.f32 %v493, 0.0
    %v661 = vmax.f32 %v496, 0.0
    %v662 = vmax.f32 %v499, 0.0
    %v663 = vmax.f32 %v502, 0.0
    %v664 = vmax.f32 %v505, 0.0
    %v665 = vmax.f32 %v508, 0.0
    %v666 = vmax.f32 %v511, 0.0
    %v667 = vmax.f32 %v514, 0.0
    %v668 = vmax.f32 %v517, 0.0
    %v669 = vmax.f32 %v520, 0.0
    %v670 = vmax.f32 %v523, 0.0
    %v671 = vmax.f32 %v526, 0.0
    %v672 = vmax.f32 %v529, 0.0
    %v673 = vmax.f32 %v532, 0.0
    %v674 = vmax.f32 %v535, 0.0
    %v675 = vmax.f32 %v538, 0.0
    %v676 = vmax.f32 %v541, 0.0
    %v677 = vmax.f32 %v544, 0.0
    %v678 = vmax.f32 %v547, 0.0
    %v679 = vmax.f32 %v550, 0.0
    %v680 = vmax.f32 %v553, 0.0
    %v681 = vmax.f32 %v556, 0.0
    %v682 = vmax.f32 %v559, 0.0
    %v683 = vmax.f32 %v562, 0.0
    %v684 = vmax.f32 %v565, 0.0
    %v685 = vmax.f32 %v568, 0.0
    %v686 = vmax.f32 %v571, 0.0
    %v687 = vmax.f32 %v574, 0.0
    %v688 = vmax.f32 %v577, 0.0
    %v689 = vmax.f32 %v580, 0.0
    %v690 = vmax.f32 %v583, 0.0
    %v691 = vmax.f32 %v586, 0.0
    %v692 = vmax.f32 %v589, 0.0
    %v693 = vmax.f32 %v592, 0.0
    %v694 = vmax.f32 %v595, 0.0
    %v695 = vmax.f32 %v598, 0.0
    %v696 = vmax.f32 %v601, 0.0
    %v697 = vmax.f32 %v604, 0.0
    %v698 = vmax.f32 %v607, 0.0
    %v699 = vmax.f32 %v610, 0.0
    %v700 = vmax.f32 %v613, 0.0
    %v701 = vmax.f32 %v616, 0.0
    %v702 = vmax.f32 %v619, 0.0
    %v703 = vmax.f32 %v622, 0.0
    %v704 = vmax.f32 %v625, 0.0
    %v705 = vmax.f32 %v628, 0.0
    %v706 = vmax.f32 %v631, 0.0
    %v707 = vmax.f32 %v634, 0.0
    %v708 = vmax.f32 %v637, 0.0
    %v709 = vmax.f32 %v640, 0.0
    %v710 = vmax.f32 %v643, 0.0
    %v711 = vmax.f32 %v646, 0.0
    %v712 = vld [vmem:[%s4] sm:$0xff]
    %v713 = vld [vmem:[%s4 + $0x8] sm:$0xff]
    %v714 = vld [vmem:[%s4 + $0x10] sm:$0xff]
    %v715 = vld [vmem:[%s4 + $0x18] sm:$0xff]
    %v716 = vld [vmem:[%s4 + $0x20] sm:$0xff]
    %v717 = vld [vmem:[%s4 + $0x28] sm:$0xff]
    %v718 = vld [vmem:[%s4 + $0x30] sm:$0xff]
    %v719 = vld [vmem:[%s4 + $0x38] sm:$0xff]
    %v720 = vld [vmem:[%s4 + $0x40] sm:$0xff]
    %v721 = vld [vmem:[%s4 + $0x48] sm:$0xff]
    %v722 = vld [vmem:[%s4 + $0x50] sm:$0xff]
    %v723 = vld [vmem:[%s4 + $0x58] sm:$0xff]
    %v724 = vld [vmem:[%s4 + $0x60] sm:$0xff]
    %v725 = vld [vmem:[%s4 + $0x68] sm:$0xff]
    %v726 = vld [vmem:[%s4 + $0x70] sm:$0xff]
    %v727 = vld [vmem:[%s4 + $0x78] sm:$0xff]
    %v728 = vld [vmem:[%s5] sm:$0x1]
    %v730 = vperm.slane %v728, 0
    %732 = vmatpush.msra.mxu0 %v727
    %733 = vmatpush.msra.mxu0 %v726
    %734 = vmatpush.msra.mxu0 %v725
    %735 = vmatpush.msra.mxu0 %v724
    %736 = vmatpush.msra.mxu0 %v723
    %737 = vmatpush.msra.mxu0 %v722
    %738 = vmatpush.msra.mxu0 %v721
    %739 = vmatpush.msra.mxu0 %v720
    %740 = vmatpush.msra.mxu0 %v719
    %741 = vmatpush.msra.mxu0 %v718
    %742 = vmatpush.msra.mxu0 %v717
    %743 = vmatpush.msra.mxu0 %v716
    %744 = vmatpush.msra.mxu0 %v715
    %745 = vmatpush.msra.mxu0 %v714
    %746 = vmatpush.msra.mxu0 %v713
    %747 = vmatpush.msra.mxu0 %v712
    %748 = vmatmul.f32.gmra.mxu0 %v648
    %v749 = vpop.f32.mrf.mxu0
    %v750 = vadd.f32 %v730, %v749
    %751 = vmatmul.f32.gmra.mxu0 %v649
    %v752 = vpop.f32.mrf.mxu0
    %v753 = vadd.f32 %v730, %v752
    %754 = vmatmul.f32.gmra.mxu0 %v650
    %v755 = vpop.f32.mrf.mxu0
    %v756 = vadd.f32 %v730, %v755
    %757 = vmatmul.f32.gmra.mxu0 %v651
    %v758 = vpop.f32.mrf.mxu0
    %v759 = vadd.f32 %v730, %v758
    %760 = vmatmul.f32.gmra.mxu0 %v652
    %v761 = vpop.f32.mrf.mxu0
    %v762 = vadd.f32 %v730, %v761
    %763 = vmatmul.f32.gmra.mxu0 %v653
    %v764 = vpop.f32.mrf.mxu0
    %v765 = vadd.f32 %v730, %v764
    %766 = vmatmul.f32.gmra.mxu0 %v654
    %v767 = vpop.f32.mrf.mxu0
    %v768 = vadd.f32 %v730, %v767
    %769 = vmatmul.f32.gmra.mxu0 %v655
    %v770 = vpop.f32.mrf.mxu0
    %v771 = vadd.f32 %v730, %v770
    %772 = vmatmul.f32.gmra.mxu0 %v656
    %v773 = vpop.f32.mrf.mxu0
    %v774 = vadd.f32 %v730, %v773
    %775 = vmatmul.f32.gmra.mxu0 %v657
    %v776 = vpop.f32.mrf.mxu0
    %v777 = vadd.f32 %v730, %v776
    %778 = vmatmul.f32.gmra.mxu0 %v658
    %v779 = vpop.f32.mrf.mxu0
    %v780 = vadd.f32 %v730, %v779
    %781 = vmatmul.f32.gmra.mxu0 %v659
    %v782 = vpop.f32.mrf.mxu0
    %v783 = vadd.f32 %v730, %v782
    %784 = vmatmul.f32.gmra.mxu0 %v660
    %v785 = vpop.f32.mrf.mxu0
    %v786 = vadd.f32 %v730, %v785
    %787 = vmatmul.f32.gmra.mxu0 %v661
    %v788 = vpop.f32.mrf.mxu0
    %v789 = vadd.f32 %v730, %v788
    %790 = vmatmul.f32.gmra.mxu0 %v662
    %v791 = vpop.f32.mrf.mxu0
    %v792 = vadd.f32 %v730, %v791
    %793 = vmatmul.f32.gmra.mxu0 %v663
    %v794 = vpop.f32.mrf.mxu0
    %v795 = vadd.f32 %v730, %v794
    %796 = vmatmul.f32.gmra.mxu0 %v664
    %v797 = vpop.f32.mrf.mxu0
    %v798 = vadd.f32 %v730, %v797
    %799 = vmatmul.f32.gmra.mxu0 %v665
    %v800 = vpop.f32.mrf.mxu0
    %v801 = vadd.f32 %v730, %v800
    %802 = vmatmul.f32.gmra.mxu0 %v666
    %v803 = vpop.f32.mrf.mxu0
    %v804 = vadd.f32 %v730, %v803
    %805 = vmatmul.f32.gmra.mxu0 %v667
    %v806 = vpop.f32.mrf.mxu0
    %v807 = vadd.f32 %v730, %v806
    %808 = vmatmul.f32.gmra.mxu0 %v668
    %v809 = vpop.f32.mrf.mxu0
    %v810 = vadd.f32 %v730, %v809
    %811 = vmatmul.f32.gmra.mxu0 %v669
    %v812 = vpop.f32.mrf.mxu0
    %v813 = vadd.f32 %v730, %v812
    %814 = vmatmul.f32.gmra.mxu0 %v670
    %v815 = vpop.f32.mrf.mxu0
    %v816 = vadd.f32 %v730, %v815
    %817 = vmatmul.f32.gmra.mxu0 %v671
    %v818 = vpop.f32.mrf.mxu0
    %v819 = vadd.f32 %v730, %v818
    %820 = vmatmul.f32.gmra.mxu0 %v672
    %v821 = vpop.f32.mrf.mxu0
    %v822 = vadd.f32 %v730, %v821
    %823 = vmatmul.f32.gmra.mxu0 %v673
    %v824 = vpop.f32.mrf.mxu0
    %v825 = vadd.f32 %v730, %v824
    %826 = vmatmul.f32.gmra.mxu0 %v674
    %v827 = vpop.f32.mrf.mxu0
    %v828 = vadd.f32 %v730, %v827
    %829 = vmatmul.f32.gmra.mxu0 %v675
    %v830 = vpop.f32.mrf.mxu0
    %v831 = vadd.f32 %v730, %v830
    %832 = vmatmul.f32.gmra.mxu0 %v676
    %v833 = vpop.f32.mrf.mxu0
    %v834 = vadd.f32 %v730, %v833
    %835 = vmatmul.f32.gmra.mxu0 %v677
    %v836 = vpop.f32.mrf.mxu0
    %v837 = vadd.f32 %v730, %v836
    %838 = vmatmul.f32.gmra.mxu0 %v678
    %v839 = vpop.f32.mrf.mxu0
    %v840 = vadd.f32 %v730, %v839
    %841 = vmatmul.f32.gmra.mxu0 %v679
    %v842 = vpop.f32.mrf.mxu0
    %v843 = vadd.f32 %v730, %v842
    %844 = vmatmul.f32.gmra.mxu0 %v680
    %v845 = vpop.f32.mrf.mxu0
    %v846 = vadd.f32 %v730, %v845
    %847 = vmatmul.f32.gmra.mxu0 %v681
    %v848 = vpop.f32.mrf.mxu0
    %v849 = vadd.f32 %v730, %v848
    %850 = vmatmul.f32.gmra.mxu0 %v682
    %v851 = vpop.f32.mrf.mxu0
    %v852 = vadd.f32 %v730, %v851
    %853 = vmatmul.f32.gmra.mxu0 %v683
    %v854 = vpop.f32.mrf.mxu0
    %v855 = vadd.f32 %v730, %v854
    %856 = vmatmul.f32.gmra.mxu0 %v684
    %v857 = vpop.f32.mrf.mxu0
    %v858 = vadd.f32 %v730, %v857
    %859 = vmatmul.f32.gmra.mxu0 %v685
    %v860 = vpop.f32.mrf.mxu0
    %v861 = vadd.f32 %v730, %v860
    %862 = vmatmul.f32.gmra.mxu0 %v686
    %v863 = vpop.f32.mrf.mxu0
    %v864 = vadd.f32 %v730, %v863
    %865 = vmatmul.f32.gmra.mxu0 %v687
    %v866 = vpop.f32.mrf.mxu0
    %v867 = vadd.f32 %v730, %v866
    %868 = vmatmul.f32.gmra.mxu0 %v688
    %v869 = vpop.f32.mrf.mxu0
    %v870 = vadd.f32 %v730, %v869
    %871 = vmatmul.f32.gmra.mxu0 %v689
    %v872 = vpop.f32.mrf.mxu0
    %v873 = vadd.f32 %v730, %v872
    %874 = vmatmul.f32.gmra.mxu0 %v690
    %v875 = vpop.f32.mrf.mxu0
    %v876 = vadd.f32 %v730, %v875
    %877 = vmatmul.f32.gmra.mxu0 %v691
    %v878 = vpop.f32.mrf.mxu0
    %v879 = vadd.f32 %v730, %v878
    %880 = vmatmul.f32.gmra.mxu0 %v692
    %v881 = vpop.f32.mrf.mxu0
    %v882 = vadd.f32 %v730, %v881
    %883 = vmatmul.f32.gmra.mxu0 %v693
    %v884 = vpop.f32.mrf.mxu0
    %v885 = vadd.f32 %v730, %v884
    %886 = vmatmul.f32.gmra.mxu0 %v694
    %v887 = vpop.f32.mrf.mxu0
    %v888 = vadd.f32 %v730, %v887
    %889 = vmatmul.f32.gmra.mxu0 %v695
    %v890 = vpop.f32.mrf.mxu0
    %v891 = vadd.f32 %v730, %v890
    %892 = vmatmul.f32.gmra.mxu0 %v696
    %v893 = vpop.f32.mrf.mxu0
    %v894 = vadd.f32 %v730, %v893
    %895 = vmatmul.f32.gmra.mxu0 %v697
    %v896 = vpop.f32.mrf.mxu0
    %v897 = vadd.f32 %v730, %v896
    %898 = vmatmul.f32.gmra.mxu0 %v698
    %v899 = vpop.f32.mrf.mxu0
    %v900 = vadd.f32 %v730, %v899
    %901 = vmatmul.f32.gmra.mxu0 %v699
    %v902 = vpop.f32.mrf.mxu0
    %v903 = vadd.f32 %v730, %v902
    %904 = vmatmul.f32.gmra.mxu0 %v700
    %v905 = vpop.f32.mrf.mxu0
    %v906 = vadd.f32 %v730, %v905
    %907 = vmatmul.f32.gmra.mxu0 %v701
    %v908 = vpop.f32.mrf.mxu0
    %v909 = vadd.f32 %v730, %v908
    %910 = vmatmul.f32.gmra.mxu0 %v702
    %v911 = vpop.f32.mrf.mxu0
    %v912 = vadd.f32 %v730, %v911
    %913 = vmatmul.f32.gmra.mxu0 %v703
    %v914 = vpop.f32.mrf.mxu0
    %v915 = vadd.f32 %v730, %v914
    %916 = vmatmul.f32.gmra.mxu0 %v704
    %v917 = vpop.f32.mrf.mxu0
    %v918 = vadd.f32 %v730, %v917
    %919 = vmatmul.f32.gmra.mxu0 %v705
    %v920 = vpop.f32.mrf.mxu0
    %v921 = vadd.f32 %v730, %v920
    %922 = vmatmul.f32.gmra.mxu0 %v706
    %v923 = vpop.f32.mrf.mxu0
    %v924 = vadd.f32 %v730, %v923
    %925 = vmatmul.f32.gmra.mxu0 %v707
    %v926 = vpop.f32.mrf.mxu0
    %v927 = vadd.f32 %v730, %v926
    %928 = vmatmul.f32.gmra.mxu0 %v708
    %v929 = vpop.f32.mrf.mxu0
    %v930 = vadd.f32 %v730, %v929
    %931 = vmatmul.f32.gmra.mxu0 %v709
    %v932 = vpop.f32.mrf.mxu0
    %v933 = vadd.f32 %v730, %v932
    %934 = vmatmul.f32.gmra.mxu0 %v710
    %v935 = vpop.f32.mrf.mxu0
    %v936 = vadd.f32 %v730, %v935
    %937 = vmatmul.f32.gmra.mxu0 %v711
    %v938 = vpop.f32.mrf.mxu0
    %v939 = vadd.f32 %v730, %v938
    %940 = vdwg.mxu0
    %v941 = vmax.f32 %v750, 0.0
    %v942 = vmax.f32 %v753, 0.0
    %v943 = vmax.f32 %v756, 0.0
    %v944 = vmax.f32 %v759, 0.0
    %v945 = vmax.f32 %v762, 0.0
    %v946 = vmax.f32 %v765, 0.0
    %v947 = vmax.f32 %v768, 0.0
    %v948 = vmax.f32 %v771, 0.0
    %v949 = vmax.f32 %v774, 0.0
    %v950 = vmax.f32 %v777, 0.0
    %v951 = vmax.f32 %v780, 0.0
    %v952 = vmax.f32 %v783, 0.0
    %v953 = vmax.f32 %v786, 0.0
    %v954 = vmax.f32 %v789, 0.0
    %v955 = vmax.f32 %v792, 0.0
    %v956 = vmax.f32 %v795, 0.0
    %v957 = vmax.f32 %v798, 0.0
    %v958 = vmax.f32 %v801, 0.0
    %v959 = vmax.f32 %v804, 0.0
    %v960 = vmax.f32 %v807, 0.0
    %v961 = vmax.f32 %v810, 0.0
    %v962 = vmax.f32 %v813, 0.0
    %v963 = vmax.f32 %v816, 0.0
    %v964 = vmax.f32 %v819, 0.0
    %v965 = vmax.f32 %v822, 0.0
    %v966 = vmax.f32 %v825, 0.0
    %v967 = vmax.f32 %v828, 0.0
    %v968 = vmax.f32 %v831, 0.0
    %v969 = vmax.f32 %v834, 0.0
    %v970 = vmax.f32 %v837, 0.0
    %v971 = vmax.f32 %v840, 0.0
    %v972 = vmax.f32 %v843, 0.0
    %v973 = vmax.f32 %v846, 0.0
    %v974 = vmax.f32 %v849, 0.0
    %v975 = vmax.f32 %v852, 0.0
    %v976 = vmax.f32 %v855, 0.0
    %v977 = vmax.f32 %v858, 0.0
    %v978 = vmax.f32 %v861, 0.0
    %v979 = vmax.f32 %v864, 0.0
    %v980 = vmax.f32 %v867, 0.0
    %v981 = vmax.f32 %v870, 0.0
    %v982 = vmax.f32 %v873, 0.0
    %v983 = vmax.f32 %v876, 0.0
    %v984 = vmax.f32 %v879, 0.0
    %v985 = vmax.f32 %v882, 0.0
    %v986 = vmax.f32 %v885, 0.0
    %v987 = vmax.f32 %v888, 0.0
    %v988 = vmax.f32 %v891, 0.0
    %v989 = vmax.f32 %v894, 0.0
    %v990 = vmax.f32 %v897, 0.0
    %v991 = vmax.f32 %v900, 0.0
    %v992 = vmax.f32 %v903, 0.0
    %v993 = vmax.f32 %v906, 0.0
    %v994 = vmax.f32 %v909, 0.0
    %v995 = vmax.f32 %v912, 0.0
    %v996 = vmax.f32 %v915, 0.0
    %v997 = vmax.f32 %v918, 0.0
    %v998 = vmax.f32 %v921, 0.0
    %v999 = vmax.f32 %v924, 0.0
    %v1000 = vmax.f32 %v927, 0.0
    %v1001 = vmax.f32 %v930, 0.0
    %v1002 = vmax.f32 %v933, 0.0
    %v1003 = vmax.f32 %v936, 0.0
    %v1004 = vmax.f32 %v939, 0.0
    %v1005 = vld [vmem:[%s6] sm:$0xff]
    %v1006 = vld [vmem:[%s6 + $0x8] sm:$0xff]
    %v1007 = vld [vmem:[%s6 + $0x10] sm:$0xff]
    %v1008 = vld [vmem:[%s6 + $0x18] sm:$0xff]
    %v1009 = vld [vmem:[%s6 + $0x20] sm:$0xff]
    %v1010 = vld [vmem:[%s6 + $0x28] sm:$0xff]
    %v1011 = vld [vmem:[%s6 + $0x30] sm:$0xff]
    %v1012 = vld [vmem:[%s6 + $0x38] sm:$0xff]
    %v1013 = vld [vmem:[%s7] sm:$0x1]
    %v1015 = vperm.slane %v1013, 0
    %vm1017 = vcmask 523264
    %v1019 = vsel %vm1017, %v941, 0
    %v1022 = vsel %vm1017, %v942, 0
    %v1025 = vsel %vm1017, %v943, 0
    %v1028 = vsel %vm1017, %v944, 0
    %v1031 = vsel %vm1017, %v945, 0
    %v1034 = vsel %vm1017, %v946, 0
    %v1037 = vsel %vm1017, %v947, 0
    %v1040 = vsel %vm1017, %v948, 0
    %v1043 = vsel %vm1017, %v949, 0
    %v1046 = vsel %vm1017, %v950, 0
    %v1049 = vsel %vm1017, %v951, 0
    %v1052 = vsel %vm1017, %v952, 0
    %v1055 = vsel %vm1017, %v953, 0
    %v1058 = vsel %vm1017, %v954, 0
    %v1061 = vsel %vm1017, %v955, 0
    %v1064 = vsel %vm1017, %v956, 0
    %v1067 = vsel %vm1017, %v957, 0
    %v1070 = vsel %vm1017, %v958, 0
    %v1073 = vsel %vm1017, %v959, 0
    %v1076 = vsel %vm1017, %v960, 0
    %v1079 = vsel %vm1017, %v961, 0
    %v1082 = vsel %vm1017, %v962, 0
    %v1085 = vsel %vm1017, %v963, 0
    %v1088 = vsel %vm1017, %v964, 0
    %v1091 = vsel %vm1017, %v965, 0
    %v1094 = vsel %vm1017, %v966, 0
    %v1097 = vsel %vm1017, %v967, 0
    %v1100 = vsel %vm1017, %v968, 0
    %v1103 = vsel %vm1017, %v969, 0
    %v1106 = vsel %vm1017, %v970, 0
    %v1109 = vsel %vm1017, %v971, 0
    %v1112 = vsel %vm1017, %v972, 0
    %v1115 = vsel %vm1017, %v973, 0
    %v1118 = vsel %vm1017, %v974, 0
    %v1121 = vsel %vm1017, %v975, 0
    %v1124 = vsel %vm1017, %v976, 0
    %v1127 = vsel %vm1017, %v977, 0
    %v1130 = vsel %vm1017, %v978, 0
    %v1133 = vsel %vm1017, %v979, 0
    %v1136 = vsel %vm1017, %v980, 0
    %v1139 = vsel %vm1017, %v981, 0
    %v1142 = vsel %vm1017, %v982, 0
    %v1145 = vsel %vm1017, %v983, 0
    %v1148 = vsel %vm1017, %v984, 0
    %v1151 = vsel %vm1017, %v985, 0
    %v1154 = vsel %vm1017, %v986, 0
    %v1157 = vsel %vm1017, %v987, 0
    %v1160 = vsel %vm1017, %v988, 0
    %v1163 = vsel %vm1017, %v989, 0
    %v1166 = vsel %vm1017, %v990, 0
    %v1169 = vsel %vm1017, %v991, 0
    %v1172 = vsel %vm1017, %v992, 0
    %v1175 = vsel %vm1017, %v993, 0
    %v1178 = vsel %vm1017, %v994, 0
    %v1181 = vsel %vm1017, %v995, 0
    %v1184 = vsel %vm1017, %v996, 0
    %v1187 = vsel %vm1017, %v997, 0
    %v1190 = vsel %vm1017, %v998, 0
    %v1193 = vsel %vm1017, %v999, 0
    %v1196 = vsel %vm1017, %v1000, 0
    %v1199 = vsel %vm1017, %v1001, 0
    %v1202 = vsel %vm1017, %v1002, 0
    %v1205 = vsel %vm1017, %v1003, 0
    %v1208 = vsel %vm1017, %v1004, 0
    %1210 = vmatpush.msra.mxu0 0.0
    %1211 = vmatpush.msra.mxu0 0.0
    %1212 = vmatpush.msra.mxu0 0.0
    %1213 = vmatpush.msra.mxu0 0.0
    %1214 = vmatpush.msra.mxu0 0.0
    %1215 = vmatpush.msra.mxu0 0.0
    %1216 = vmatpush.msra.mxu0 0.0
    %1217 = vmatpush.msra.mxu0 0.0
    %1218 = vmatpush.msra.mxu0 %v1012
    %1219 = vmatpush.msra.mxu0 %v1011
    %1220 = vmatpush.msra.mxu0 %v1010
    %1221 = vmatpush.msra.mxu0 %v1009
    %1222 = vmatpush.msra.mxu0 %v1008
    %1223 = vmatpush.msra.mxu0 %v1007
    %1224 = vmatpush.msra.mxu0 %v1006
    %1225 = vmatpush.msra.mxu0 %v1005
    %1226 = vmatmul.f32.gmra.mxu0 %v1019
    %v1227 = vpop.f32.mrf.mxu0
    %v1228 = vadd.f32 %v1015, %v1227
    %1229 = vmatmul.f32.gmra.mxu0 %v1022
    %v1230 = vpop.f32.mrf.mxu0
    %v1231 = vadd.f32 %v1015, %v1230
    %1232 = vmatmul.f32.gmra.mxu0 %v1025
    %v1233 = vpop.f32.mrf.mxu0
    %v1234 = vadd.f32 %v1015, %v1233
    %1235 = vmatmul.f32.gmra.mxu0 %v1028
    %v1236 = vpop.f32.mrf.mxu0
    %v1237 = vadd.f32 %v1015, %v1236
    %1238 = vmatmul.f32.gmra.mxu0 %v1031
    %v1239 = vpop.f32.mrf.mxu0
    %v1240 = vadd.f32 %v1015, %v1239
    %1241 = vmatmul.f32.gmra.mxu0 %v1034
    %v1242 = vpop.f32.mrf.mxu0
    %v1243 = vadd.f32 %v1015, %v1242
    %1244 = vmatmul.f32.gmra.mxu0 %v1037
    %v1245 = vpop.f32.mrf.mxu0
    %v1246 = vadd.f32 %v1015, %v1245
    %1247 = vmatmul.f32.gmra.mxu0 %v1040
    %v1248 = vpop.f32.mrf.mxu0
    %v1249 = vadd.f32 %v1015, %v1248
    %1250 = vmatmul.f32.gmra.mxu0 %v1043
    %v1251 = vpop.f32.mrf.mxu0
    %v1252 = vadd.f32 %v1015, %v1251
    %1253 = vmatmul.f32.gmra.mxu0 %v1046
    %v1254 = vpop.f32.mrf.mxu0
    %v1255 = vadd.f32 %v1015, %v1254
    %1256 = vmatmul.f32.gmra.mxu0 %v1049
    %v1257 = vpop.f32.mrf.mxu0
    %v1258 = vadd.f32 %v1015, %v1257
    %1259 = vmatmul.f32.gmra.mxu0 %v1052
    %v1260 = vpop.f32.mrf.mxu0
    %v1261 = vadd.f32 %v1015, %v1260
    %1262 = vmatmul.f32.gmra.mxu0 %v1055
    %v1263 = vpop.f32.mrf.mxu0
    %v1264 = vadd.f32 %v1015, %v1263
    %1265 = vmatmul.f32.gmra.mxu0 %v1058
    %v1266 = vpop.f32.mrf.mxu0
    %v1267 = vadd.f32 %v1015, %v1266
    %1268 = vmatmul.f32.gmra.mxu0 %v1061
    %v1269 = vpop.f32.mrf.mxu0
    %v1270 = vadd.f32 %v1015, %v1269
    %1271 = vmatmul.f32.gmra.mxu0 %v1064
    %v1272 = vpop.f32.mrf.mxu0
    %v1273 = vadd.f32 %v1015, %v1272
    %1274 = vmatmul.f32.gmra.mxu0 %v1067
    %v1275 = vpop.f32.mrf.mxu0
    %v1276 = vadd.f32 %v1015, %v1275
    %1277 = vmatmul.f32.gmra.mxu0 %v1070
    %v1278 = vpop.f32.mrf.mxu0
    %v1279 = vadd.f32 %v1015, %v1278
    %1280 = vmatmul.f32.gmra.mxu0 %v1073
    %v1281 = vpop.f32.mrf.mxu0
    %v1282 = vadd.f32 %v1015, %v1281
    %1283 = vmatmul.f32.gmra.mxu0 %v1076
    %v1284 = vpop.f32.mrf.mxu0
    %v1285 = vadd.f32 %v1015, %v1284
    %1286 = vmatmul.f32.gmra.mxu0 %v1079
    %v1287 = vpop.f32.mrf.mxu0
    %v1288 = vadd.f32 %v1015, %v1287
    %1289 = vmatmul.f32.gmra.mxu0 %v1082
    %v1290 = vpop.f32.mrf.mxu0
    %v1291 = vadd.f32 %v1015, %v1290
    %1292 = vmatmul.f32.gmra.mxu0 %v1085
    %v1293 = vpop.f32.mrf.mxu0
    %v1294 = vadd.f32 %v1015, %v1293
    %1295 = vmatmul.f32.gmra.mxu0 %v1088
    %v1296 = vpop.f32.mrf.mxu0
    %v1297 = vadd.f32 %v1015, %v1296
    %1298 = vmatmul.f32.gmra.mxu0 %v1091
    %v1299 = vpop.f32.mrf.mxu0
    %v1300 = vadd.f32 %v1015, %v1299
    %1301 = vmatmul.f32.gmra.mxu0 %v1094
    %v1302 = vpop.f32.mrf.mxu0
    %v1303 = vadd.f32 %v1015, %v1302
    %1304 = vmatmul.f32.gmra.mxu0 %v1097
    %v1305 = vpop.f32.mrf.mxu0
    %v1306 = vadd.f32 %v1015, %v1305
    %1307 = vmatmul.f32.gmra.mxu0 %v1100
    %v1308 = vpop.f32.mrf.mxu0
    %v1309 = vadd.f32 %v1015, %v1308
    %1310 = vmatmul.f32.gmra.mxu0 %v1103
    %v1311 = vpop.f32.mrf.mxu0
    %v1312 = vadd.f32 %v1015, %v1311
    %1313 = vmatmul.f32.gmra.mxu0 %v1106
    %v1314 = vpop.f32.mrf.mxu0
    %v1315 = vadd.f32 %v1015, %v1314
    %1316 = vmatmul.f32.gmra.mxu0 %v1109
    %v1317 = vpop.f32.mrf.mxu0
    %v1318 = vadd.f32 %v1015, %v1317
    %1319 = vmatmul.f32.gmra.mxu0 %v1112
    %v1320 = vpop.f32.mrf.mxu0
    %v1321 = vadd.f32 %v1015, %v1320
    %1322 = vmatmul.f32.gmra.mxu0 %v1115
    %v1323 = vpop.f32.mrf.mxu0
    %v1324 = vadd.f32 %v1015, %v1323
    %1325 = vmatmul.f32.gmra.mxu0 %v1118
    %v1326 = vpop.f32.mrf.mxu0
    %v1327 = vadd.f32 %v1015, %v1326
    %1328 = vmatmul.f32.gmra.mxu0 %v1121
    %v1329 = vpop.f32.mrf.mxu0
    %v1330 = vadd.f32 %v1015, %v1329
    %1331 = vmatmul.f32.gmra.mxu0 %v1124
    %v1332 = vpop.f32.mrf.mxu0
    %v1333 = vadd.f32 %v1015, %v1332
    %1334 = vmatmul.f32.gmra.mxu0 %v1127
    %v1335 = vpop.f32.mrf.mxu0
    %v1336 = vadd.f32 %v1015, %v1335
    %1337 = vmatmul.f32.gmra.mxu0 %v1130
    %v1338 = vpop.f32.mrf.mxu0
    %v1339 = vadd.f32 %v1015, %v1338
    %1340 = vmatmul.f32.gmra.mxu0 %v1133
    %v1341 = vpop.f32.mrf.mxu0
    %v1342 = vadd.f32 %v1015, %v1341
    %1343 = vmatmul.f32.gmra.mxu0 %v1136
    %v1344 = vpop.f32.mrf.mxu0
    %v1345 = vadd.f32 %v1015, %v1344
    %1346 = vmatmul.f32.gmra.mxu0 %v1139
    %v1347 = vpop.f32.mrf.mxu0
    %v1348 = vadd.f32 %v1015, %v1347
    %1349 = vmatmul.f32.gmra.mxu0 %v1142
    %v1350 = vpop.f32.mrf.mxu0
    %v1351 = vadd.f32 %v1015, %v1350
    %1352 = vmatmul.f32.gmra.mxu0 %v1145
    %v1353 = vpop.f32.mrf.mxu0
    %v1354 = vadd.f32 %v1015, %v1353
    %1355 = vmatmul.f32.gmra.mxu0 %v1148
    %v1356 = vpop.f32.mrf.mxu0
    %v1357 = vadd.f32 %v1015, %v1356
    %1358 = vmatmul.f32.gmra.mxu0 %v1151
    %v1359 = vpop.f32.mrf.mxu0
    %v1360 = vadd.f32 %v1015, %v1359
    %1361 = vmatmul.f32.gmra.mxu0 %v1154
    %v1362 = vpop.f32.mrf.mxu0
    %v1363 = vadd.f32 %v1015, %v1362
    %1364 = vmatmul.f32.gmra.mxu0 %v1157
    %v1365 = vpop.f32.mrf.mxu0
    %v1366 = vadd.f32 %v1015, %v1365
    %1367 = vmatmul.f32.gmra.mxu0 %v1160
    %v1368 = vpop.f32.mrf.mxu0
    %v1369 = vadd.f32 %v1015, %v1368
    %1370 = vmatmul.f32.gmra.mxu0 %v1163
    %v1371 = vpop.f32.mrf.mxu0
    %v1372 = vadd.f32 %v1015, %v1371
    %1373 = vmatmul.f32.gmra.mxu0 %v1166
    %v1374 = vpop.f32.mrf.mxu0
    %v1375 = vadd.f32 %v1015, %v1374
    %1376 = vmatmul.f32.gmra.mxu0 %v1169
    %v1377 = vpop.f32.mrf.mxu0
    %v1378 = vadd.f32 %v1015, %v1377
    %1379 = vmatmul.f32.gmra.mxu0 %v1172
    %v1380 = vpop.f32.mrf.mxu0
    %v1381 = vadd.f32 %v1015, %v1380
    %1382 = vmatmul.f32.gmra.mxu0 %v1175
    %v1383 = vpop.f32.mrf.mxu0
    %v1384 = vadd.f32 %v1015, %v1383
    %1385 = vmatmul.f32.gmra.mxu0 %v1178
    %v1386 = vpop.f32.mrf.mxu0
    %v1387 = vadd.f32 %v1015, %v1386
    %1388 = vmatmul.f32.gmra.mxu0 %v1181
    %v1389 = vpop.f32.mrf.mxu0
    %v1390 = vadd.f32 %v1015, %v1389
    %1391 = vmatmul.f32.gmra.mxu0 %v1184
    %v1392 = vpop.f32.mrf.mxu0
    %v1393 = vadd.f32 %v1015, %v1392
    %1394 = vmatmul.f32.gmra.mxu0 %v1187
    %v1395 = vpop.f32.mrf.mxu0
    %v1396 = vadd.f32 %v1015, %v1395
    %1397 = vmatmul.f32.gmra.mxu0 %v1190
    %v1398 = vpop.f32.mrf.mxu0
    %v1399 = vadd.f32 %v1015, %v1398
    %1400 = vmatmul.f32.gmra.mxu0 %v1193
    %v1401 = vpop.f32.mrf.mxu0
    %v1402 = vadd.f32 %v1015, %v1401
    %1403 = vmatmul.f32.gmra.mxu0 %v1196
    %v1404 = vpop.f32.mrf.mxu0
    %v1405 = vadd.f32 %v1015, %v1404
    %1406 = vmatmul.f32.gmra.mxu0 %v1199
    %v1407 = vpop.f32.mrf.mxu0
    %v1408 = vadd.f32 %v1015, %v1407
    %1409 = vmatmul.f32.gmra.mxu0 %v1202
    %v1410 = vpop.f32.mrf.mxu0
    %v1411 = vadd.f32 %v1015, %v1410
    %1412 = vmatmul.f32.gmra.mxu0 %v1205
    %v1413 = vpop.f32.mrf.mxu0
    %v1414 = vadd.f32 %v1015, %v1413
    %1415 = vmatmul.f32.gmra.mxu0 %v1208
    %v1416 = vpop.f32.mrf.mxu0
    %v1417 = vadd.f32 %v1015, %v1416
    %1418 = vdwg.mxu0
    %v1419 = vmul.f32 %v1228, 0.5
    %v1420 = vmul.f32 %v1231, 0.5
    %v1421 = vmul.f32 %v1234, 0.5
    %v1422 = vmul.f32 %v1237, 0.5
    %v1423 = vmul.f32 %v1240, 0.5
    %v1424 = vmul.f32 %v1243, 0.5
    %v1425 = vmul.f32 %v1246, 0.5
    %v1426 = vmul.f32 %v1249, 0.5
    %v1427 = vmul.f32 %v1252, 0.5
    %v1428 = vmul.f32 %v1255, 0.5
    %v1429 = vmul.f32 %v1258, 0.5
    %v1430 = vmul.f32 %v1261, 0.5
    %v1431 = vmul.f32 %v1264, 0.5
    %v1432 = vmul.f32 %v1267, 0.5
    %v1433 = vmul.f32 %v1270, 0.5
    %v1434 = vmul.f32 %v1273, 0.5
    %v1435 = vmul.f32 %v1276, 0.5
    %v1436 = vmul.f32 %v1279, 0.5
    %v1437 = vmul.f32 %v1282, 0.5
    %v1438 = vmul.f32 %v1285, 0.5
    %v1439 = vmul.f32 %v1288, 0.5
    %v1440 = vmul.f32 %v1291, 0.5
    %v1441 = vmul.f32 %v1294, 0.5
    %v1442 = vmul.f32 %v1297, 0.5
    %v1443 = vmul.f32 %v1300, 0.5
    %v1444 = vmul.f32 %v1303, 0.5
    %v1445 = vmul.f32 %v1306, 0.5
    %v1446 = vmul.f32 %v1309, 0.5
    %v1447 = vmul.f32 %v1312, 0.5
    %v1448 = vmul.f32 %v1315, 0.5
    %v1449 = vmul.f32 %v1318, 0.5
    %v1450 = vmul.f32 %v1321, 0.5
    %v1451 = vmul.f32 %v1324, 0.5
    %v1452 = vmul.f32 %v1327, 0.5
    %v1453 = vmul.f32 %v1330, 0.5
    %v1454 = vmul.f32 %v1333, 0.5
    %v1455 = vmul.f32 %v1336, 0.5
    %v1456 = vmul.f32 %v1339, 0.5
    %v1457 = vmul.f32 %v1342, 0.5
    %v1458 = vmul.f32 %v1345, 0.5
    %v1459 = vmul.f32 %v1348, 0.5
    %v1460 = vmul.f32 %v1351, 0.5
    %v1461 = vmul.f32 %v1354, 0.5
    %v1462 = vmul.f32 %v1357, 0.5
    %v1463 = vmul.f32 %v1360, 0.5
    %v1464 = vmul.f32 %v1363, 0.5
    %v1465 = vmul.f32 %v1366, 0.5
    %v1466 = vmul.f32 %v1369, 0.5
    %v1467 = vmul.f32 %v1372, 0.5
    %v1468 = vmul.f32 %v1375, 0.5
    %v1469 = vmul.f32 %v1378, 0.5
    %v1470 = vmul.f32 %v1381, 0.5
    %v1471 = vmul.f32 %v1384, 0.5
    %v1472 = vmul.f32 %v1387, 0.5
    %v1473 = vmul.f32 %v1390, 0.5
    %v1474 = vmul.f32 %v1393, 0.5
    %v1475 = vmul.f32 %v1396, 0.5
    %v1476 = vmul.f32 %v1399, 0.5
    %v1477 = vmul.f32 %v1402, 0.5
    %v1478 = vmul.f32 %v1405, 0.5
    %v1479 = vmul.f32 %v1408, 0.5
    %v1480 = vmul.f32 %v1411, 0.5
    %v1481 = vmul.f32 %v1414, 0.5
    %v1482 = vmul.f32 %v1417, 0.5
    %v1483 = vmul.f32 %v1419, 1.442695
    %v1484 = vpow.pop %v1483
    %v1485 = vmul.f32 %v1420, 1.442695
    %v1486 = vpow.pop %v1485
    %v1487 = vmul.f32 %v1421, 1.442695
    %v1488 = vpow.pop %v1487
    %v1489 = vmul.f32 %v1422, 1.442695
    %v1490 = vpow.pop %v1489
    %v1491 = vmul.f32 %v1423, 1.442695
    %v1492 = vpow.pop %v1491
    %v1493 = vmul.f32 %v1424, 1.442695
    %v1494 = vpow.pop %v1493
    %v1495 = vmul.f32 %v1425, 1.442695
    %v1496 = vpow.pop %v1495
    %v1497 = vmul.f32 %v1426, 1.442695
    %v1498 = vpow.pop %v1497
    %v1499 = vmul.f32 %v1427, 1.442695
    %v1500 = vpow.pop %v1499
    %v1501 = vmul.f32 %v1428, 1.442695
    %v1502 = vpow.pop %v1501
    %v1503 = vmul.f32 %v1429, 1.442695
    %v1504 = vpow.pop %v1503
    %v1505 = vmul.f32 %v1430, 1.442695
    %v1506 = vpow.pop %v1505
    %v1507 = vmul.f32 %v1431, 1.442695
    %v1508 = vpow.pop %v1507
    %v1509 = vmul.f32 %v1432, 1.442695
    %v1510 = vpow.pop %v1509
    %v1511 = vmul.f32 %v1433, 1.442695
    %v1512 = vpow.pop %v1511
    %v1513 = vmul.f32 %v1434, 1.442695
    %v1514 = vpow.pop %v1513
    %v1515 = vmul.f32 %v1435, 1.442695
    %v1516 = vpow.pop %v1515
    %v1517 = vmul.f32 %v1436, 1.442695
    %v1518 = vpow.pop %v1517
    %v1519 = vmul.f32 %v1437, 1.442695
    %v1520 = vpow.pop %v1519
    %v1521 = vmul.f32 %v1438, 1.442695
    %v1522 = vpow.pop %v1521
    %v1523 = vmul.f32 %v1439, 1.442695
    %v1524 = vpow.pop %v1523
    %v1525 = vmul.f32 %v1440, 1.442695
    %v1526 = vpow.pop %v1525
    %v1527 = vmul.f32 %v1441, 1.442695
    %v1528 = vpow.pop %v1527
    %v1529 = vmul.f32 %v1442, 1.442695
    %v1530 = vpow.pop %v1529
    %v1531 = vmul.f32 %v1443, 1.442695
    %v1532 = vpow.pop %v1531
    %v1533 = vmul.f32 %v1444, 1.442695
    %v1534 = vpow.pop %v1533
    %v1535 = vmul.f32 %v1445, 1.442695
    %v1536 = vpow.pop %v1535
    %v1537 = vmul.f32 %v1446, 1.442695
    %v1538 = vpow.pop %v1537
    %v1539 = vmul.f32 %v1447, 1.442695
    %v1540 = vpow.pop %v1539
    %v1541 = vmul.f32 %v1448, 1.442695
    %v1542 = vpow.pop %v1541
    %v1543 = vmul.f32 %v1449, 1.442695
    %v1544 = vpow.pop %v1543
    %v1545 = vmul.f32 %v1450, 1.442695
    %v1546 = vpow.pop %v1545
    %v1547 = vmul.f32 %v1451, 1.442695
    %v1548 = vpow.pop %v1547
    %v1549 = vmul.f32 %v1452, 1.442695
    %v1550 = vpow.pop %v1549
    %v1551 = vmul.f32 %v1453, 1.442695
    %v1552 = vpow.pop %v1551
    %v1553 = vmul.f32 %v1454, 1.442695
    %v1554 = vpow.pop %v1553
    %v1555 = vmul.f32 %v1455, 1.442695
    %v1556 = vpow.pop %v1555
    %v1557 = vmul.f32 %v1456, 1.442695
    %v1558 = vpow.pop %v1557
    %v1559 = vmul.f32 %v1457, 1.442695
    %v1560 = vpow.pop %v1559
    %v1561 = vmul.f32 %v1458, 1.442695
    %v1562 = vpow.pop %v1561
    %v1563 = vmul.f32 %v1459, 1.442695
    %v1564 = vpow.pop %v1563
    %v1565 = vmul.f32 %v1460, 1.442695
    %v1566 = vpow.pop %v1565
    %v1567 = vmul.f32 %v1461, 1.442695
    %v1568 = vpow.pop %v1567
    %v1569 = vmul.f32 %v1462, 1.442695
    %v1570 = vpow.pop %v1569
    %v1571 = vmul.f32 %v1463, 1.442695
    %v1572 = vpow.pop %v1571
    %v1573 = vmul.f32 %v1464, 1.442695
    %v1574 = vpow.pop %v1573
    %v1575 = vmul.f32 %v1465, 1.442695
    %v1576 = vpow.pop %v1575
    %v1577 = vmul.f32 %v1466, 1.442695
    %v1578 = vpow.pop %v1577
    %v1579 = vmul.f32 %v1467, 1.442695
    %v1580 = vpow.pop %v1579
    %v1581 = vmul.f32 %v1468, 1.442695
    %v1582 = vpow.pop %v1581
    %v1583 = vmul.f32 %v1469, 1.442695
    %v1584 = vpow.pop %v1583
    %v1585 = vmul.f32 %v1470, 1.442695
    %v1586 = vpow.pop %v1585
    %v1587 = vmul.f32 %v1471, 1.442695
    %v1588 = vpow.pop %v1587
    %v1589 = vmul.f32 %v1472, 1.442695
    %v1590 = vpow.pop %v1589
    %v1591 = vmul.f32 %v1473, 1.442695
    %v1592 = vpow.pop %v1591
    %v1593 = vmul.f32 %v1474, 1.442695
    %v1594 = vpow.pop %v1593
    %v1595 = vmul.f32 %v1475, 1.442695
    %v1596 = vpow.pop %v1595
    %v1597 = vmul.f32 %v1476, 1.442695
    %v1598 = vpow.pop %v1597
    %v1599 = vmul.f32 %v1477, 1.442695
    %v1600 = vpow.pop %v1599
    %v1601 = vmul.f32 %v1478, 1.442695
    %v1602 = vpow.pop %v1601
    %v1603 = vmul.f32 %v1479, 1.442695
    %v1604 = vpow.pop %v1603
    %v1605 = vmul.f32 %v1480, 1.442695
    %v1606 = vpow.pop %v1605
    %v1607 = vmul.f32 %v1481, 1.442695
    %v1608 = vpow.pop %v1607
    %v1609 = vmul.f32 %v1482, 1.442695
    %v1610 = vpow.pop %v1609
    %v1611 = vld [vmem:[%s1] sm:$0xff]
    %v1612 = vld [vmem:[%s1 + $0x8] sm:$0xff]
    %v1613 = vld [vmem:[%s1 + $0x10] sm:$0xff]
    %v1614 = vld [vmem:[%s1 + $0x18] sm:$0xff]
    %v1615 = vld [vmem:[%s1 + $0x20] sm:$0xff]
    %v1616 = vld [vmem:[%s1 + $0x28] sm:$0xff]
    %v1617 = vld [vmem:[%s1 + $0x30] sm:$0xff]
    %v1618 = vld [vmem:[%s1 + $0x38] sm:$0xff]
    %v1619 = vld [vmem:[%s1 + $0x40] sm:$0xff]
    %v1620 = vld [vmem:[%s1 + $0x48] sm:$0xff]
    %v1621 = vld [vmem:[%s1 + $0x50] sm:$0xff]
    %v1622 = vld [vmem:[%s1 + $0x58] sm:$0xff]
    %v1623 = vld [vmem:[%s1 + $0x60] sm:$0xff]
    %v1624 = vld [vmem:[%s1 + $0x68] sm:$0xff]
    %v1625 = vld [vmem:[%s1 + $0x70] sm:$0xff]
    %v1626 = vld [vmem:[%s1 + $0x78] sm:$0xff]
    %v1627 = vld [vmem:[%s1 + $0x80] sm:$0xff]
    %v1628 = vld [vmem:[%s1 + $0x88] sm:$0xff]
    %v1629 = vld [vmem:[%s1 + $0x90] sm:$0xff]
    %v1630 = vld [vmem:[%s1 + $0x98] sm:$0xff]
    %v1631 = vld [vmem:[%s1 + $0xa0] sm:$0xff]
    %v1632 = vld [vmem:[%s1 + $0xa8] sm:$0xff]
    %v1633 = vld [vmem:[%s1 + $0xb0] sm:$0xff]
    %v1634 = vld [vmem:[%s1 + $0xb8] sm:$0xff]
    %v1635 = vld [vmem:[%s1 + $0xc0] sm:$0xff]
    %v1636 = vld [vmem:[%s1 + $0xc8] sm:$0xff]
    %v1637 = vld [vmem:[%s1 + $0xd0] sm:$0xff]
    %v1638 = vld [vmem:[%s1 + $0xd8] sm:$0xff]
    %v1639 = vld [vmem:[%s1 + $0xe0] sm:$0xff]
    %v1640 = vld [vmem:[%s1 + $0xe8] sm:$0xff]
    %v1641 = vld [vmem:[%s1 + $0xf0] sm:$0xff]
    %v1642 = vld [vmem:[%s1 + $0xf8] sm:$0xff]
    %v1643 = vld [vmem:[%s1 + $0x100] sm:$0xff]
    %v1644 = vld [vmem:[%s1 + $0x108] sm:$0xff]
    %v1645 = vld [vmem:[%s1 + $0x110] sm:$0xff]
    %v1646 = vld [vmem:[%s1 + $0x118] sm:$0xff]
    %v1647 = vld [vmem:[%s1 + $0x120] sm:$0xff]
    %v1648 = vld [vmem:[%s1 + $0x128] sm:$0xff]
    %v1649 = vld [vmem:[%s1 + $0x130] sm:$0xff]
    %v1650 = vld [vmem:[%s1 + $0x138] sm:$0xff]
    %v1651 = vld [vmem:[%s1 + $0x140] sm:$0xff]
    %v1652 = vld [vmem:[%s1 + $0x148] sm:$0xff]
    %v1653 = vld [vmem:[%s1 + $0x150] sm:$0xff]
    %v1654 = vld [vmem:[%s1 + $0x158] sm:$0xff]
    %v1655 = vld [vmem:[%s1 + $0x160] sm:$0xff]
    %v1656 = vld [vmem:[%s1 + $0x168] sm:$0xff]
    %v1657 = vld [vmem:[%s1 + $0x170] sm:$0xff]
    %v1658 = vld [vmem:[%s1 + $0x178] sm:$0xff]
    %v1659 = vld [vmem:[%s1 + $0x180] sm:$0xff]
    %v1660 = vld [vmem:[%s1 + $0x188] sm:$0xff]
    %v1661 = vld [vmem:[%s1 + $0x190] sm:$0xff]
    %v1662 = vld [vmem:[%s1 + $0x198] sm:$0xff]
    %v1663 = vld [vmem:[%s1 + $0x1a0] sm:$0xff]
    %v1664 = vld [vmem:[%s1 + $0x1a8] sm:$0xff]
    %v1665 = vld [vmem:[%s1 + $0x1b0] sm:$0xff]
    %v1666 = vld [vmem:[%s1 + $0x1b8] sm:$0xff]
    %v1667 = vld [vmem:[%s1 + $0x1c0] sm:$0xff]
    %v1668 = vld [vmem:[%s1 + $0x1c8] sm:$0xff]
    %v1669 = vld [vmem:[%s1 + $0x1d0] sm:$0xff]
    %v1670 = vld [vmem:[%s1 + $0x1d8] sm:$0xff]
    %v1671 = vld [vmem:[%s1 + $0x1e0] sm:$0xff]
    %v1672 = vld [vmem:[%s1 + $0x1e8] sm:$0xff]
    %v1673 = vld [vmem:[%s1 + $0x1f0] sm:$0xff]
    %v1674 = vld [vmem:[%s1 + $0x1f8] sm:$0xff]
    %1739 = vrot.lane.b32.xlu0 %v1484, 96
    %v1740 = vpop.permute.xlu0 %1739
    %1741 = vrot.lane.b32.xlu0 %v1486, 96
    %v1742 = vpop.permute.xlu0 %1741
    %1743 = vrot.lane.b32.xlu0 %v1488, 96
    %v1744 = vpop.permute.xlu0 %1743
    %1745 = vrot.lane.b32.xlu0 %v1490, 96
    %v1746 = vpop.permute.xlu0 %1745
    %1747 = vrot.lane.b32.xlu0 %v1492, 96
    %v1748 = vpop.permute.xlu0 %1747
    %1749 = vrot.lane.b32.xlu0 %v1494, 96
    %v1750 = vpop.permute.xlu0 %1749
    %1751 = vrot.lane.b32.xlu0 %v1496, 96
    %v1752 = vpop.permute.xlu0 %1751
    %1753 = vrot.lane.b32.xlu0 %v1498, 96
    %v1754 = vpop.permute.xlu0 %1753
    %1755 = vrot.lane.b32.xlu0 %v1500, 96
    %v1756 = vpop.permute.xlu0 %1755
    %1757 = vrot.lane.b32.xlu0 %v1502, 96
    %v1758 = vpop.permute.xlu0 %1757
    %1759 = vrot.lane.b32.xlu0 %v1504, 96
    %v1760 = vpop.permute.xlu0 %1759
    %1761 = vrot.lane.b32.xlu0 %v1506, 96
    %v1762 = vpop.permute.xlu0 %1761
    %1763 = vrot.lane.b32.xlu0 %v1508, 96
    %v1764 = vpop.permute.xlu0 %1763
    %1765 = vrot.lane.b32.xlu0 %v1510, 96
    %v1766 = vpop.permute.xlu0 %1765
    %1767 = vrot.lane.b32.xlu0 %v1512, 96
    %v1768 = vpop.permute.xlu0 %1767
    %1769 = vrot.lane.b32.xlu0 %v1514, 96
    %v1770 = vpop.permute.xlu0 %1769
    %1771 = vrot.lane.b32.xlu0 %v1516, 96
    %v1772 = vpop.permute.xlu0 %1771
    %1773 = vrot.lane.b32.xlu0 %v1518, 96
    %v1774 = vpop.permute.xlu0 %1773
    %1775 = vrot.lane.b32.xlu0 %v1520, 96
    %v1776 = vpop.permute.xlu0 %1775
    %1777 = vrot.lane.b32.xlu0 %v1522, 96
    %v1778 = vpop.permute.xlu0 %1777
    %1779 = vrot.lane.b32.xlu0 %v1524, 96
    %v1780 = vpop.permute.xlu0 %1779
    %1781 = vrot.lane.b32.xlu0 %v1526, 96
    %v1782 = vpop.permute.xlu0 %1781
    %1783 = vrot.lane.b32.xlu0 %v1528, 96
    %v1784 = vpop.permute.xlu0 %1783
    %1785 = vrot.lane.b32.xlu0 %v1530, 96
    %v1786 = vpop.permute.xlu0 %1785
    %1787 = vrot.lane.b32.xlu0 %v1532, 96
    %v1788 = vpop.permute.xlu0 %1787
    %1789 = vrot.lane.b32.xlu0 %v1534, 96
    %v1790 = vpop.permute.xlu0 %1789
    %1791 = vrot.lane.b32.xlu0 %v1536, 96
    %v1792 = vpop.permute.xlu0 %1791
    %1793 = vrot.lane.b32.xlu0 %v1538, 96
    %v1794 = vpop.permute.xlu0 %1793
    %1795 = vrot.lane.b32.xlu0 %v1540, 96
    %v1796 = vpop.permute.xlu0 %1795
    %1797 = vrot.lane.b32.xlu0 %v1542, 96
    %v1798 = vpop.permute.xlu0 %1797
    %1799 = vrot.lane.b32.xlu0 %v1544, 96
    %v1800 = vpop.permute.xlu0 %1799
    %1801 = vrot.lane.b32.xlu0 %v1546, 96
    %v1802 = vpop.permute.xlu0 %1801
    %1803 = vrot.lane.b32.xlu0 %v1548, 96
    %v1804 = vpop.permute.xlu0 %1803
    %1805 = vrot.lane.b32.xlu0 %v1550, 96
    %v1806 = vpop.permute.xlu0 %1805
    %1807 = vrot.lane.b32.xlu0 %v1552, 96
    %v1808 = vpop.permute.xlu0 %1807
    %1809 = vrot.lane.b32.xlu0 %v1554, 96
    %v1810 = vpop.permute.xlu0 %1809
    %1811 = vrot.lane.b32.xlu0 %v1556, 96
    %v1812 = vpop.permute.xlu0 %1811
    %1813 = vrot.lane.b32.xlu0 %v1558, 96
    %v1814 = vpop.permute.xlu0 %1813
    %1815 = vrot.lane.b32.xlu0 %v1560, 96
    %v1816 = vpop.permute.xlu0 %1815
    %1817 = vrot.lane.b32.xlu0 %v1562, 96
    %v1818 = vpop.permute.xlu0 %1817
    %1819 = vrot.lane.b32.xlu0 %v1564, 96
    %v1820 = vpop.permute.xlu0 %1819
    %1821 = vrot.lane.b32.xlu0 %v1566, 96
    %v1822 = vpop.permute.xlu0 %1821
    %1823 = vrot.lane.b32.xlu0 %v1568, 96
    %v1824 = vpop.permute.xlu0 %1823
    %1825 = vrot.lane.b32.xlu0 %v1570, 96
    %v1826 = vpop.permute.xlu0 %1825
    %1827 = vrot.lane.b32.xlu0 %v1572, 96
    %v1828 = vpop.permute.xlu0 %1827
    %1829 = vrot.lane.b32.xlu0 %v1574, 96
    %v1830 = vpop.permute.xlu0 %1829
    %1831 = vrot.lane.b32.xlu0 %v1576, 96
    %v1832 = vpop.permute.xlu0 %1831
    %1833 = vrot.lane.b32.xlu0 %v1578, 96
    %v1834 = vpop.permute.xlu0 %1833
    %1835 = vrot.lane.b32.xlu0 %v1580, 96
    %v1836 = vpop.permute.xlu0 %1835
    %1837 = vrot.lane.b32.xlu0 %v1582, 96
    %v1838 = vpop.permute.xlu0 %1837
    %1839 = vrot.lane.b32.xlu0 %v1584, 96
    %v1840 = vpop.permute.xlu0 %1839
    %1841 = vrot.lane.b32.xlu0 %v1586, 96
    %v1842 = vpop.permute.xlu0 %1841
    %1843 = vrot.lane.b32.xlu0 %v1588, 96
    %v1844 = vpop.permute.xlu0 %1843
    %1845 = vrot.lane.b32.xlu0 %v1590, 96
    %v1846 = vpop.permute.xlu0 %1845
    %1847 = vrot.lane.b32.xlu0 %v1592, 96
    %v1848 = vpop.permute.xlu0 %1847
    %1849 = vrot.lane.b32.xlu0 %v1594, 96
    %v1850 = vpop.permute.xlu0 %1849
    %1851 = vrot.lane.b32.xlu0 %v1596, 96
    %v1852 = vpop.permute.xlu0 %1851
    %1853 = vrot.lane.b32.xlu0 %v1598, 96
    %v1854 = vpop.permute.xlu0 %1853
    %1855 = vrot.lane.b32.xlu0 %v1600, 96
    %v1856 = vpop.permute.xlu0 %1855
    %1857 = vrot.lane.b32.xlu0 %v1602, 96
    %v1858 = vpop.permute.xlu0 %1857
    %1859 = vrot.lane.b32.xlu0 %v1604, 96
    %v1860 = vpop.permute.xlu0 %1859
    %1861 = vrot.lane.b32.xlu0 %v1606, 96
    %v1862 = vpop.permute.xlu0 %1861
    %1863 = vrot.lane.b32.xlu0 %v1608, 96
    %v1864 = vpop.permute.xlu0 %1863
    %1865 = vrot.lane.b32.xlu0 %v1610, 96
    %v1866 = vpop.permute.xlu0 %1865
    %v1931 = vmul.f32 %v1611, %v1740
    %v1932 = vmul.f32 %v1612, %v1742
    %v1933 = vmul.f32 %v1613, %v1744
    %v1934 = vmul.f32 %v1614, %v1746
    %v1935 = vmul.f32 %v1615, %v1748
    %v1936 = vmul.f32 %v1616, %v1750
    %v1937 = vmul.f32 %v1617, %v1752
    %v1938 = vmul.f32 %v1618, %v1754
    %v1939 = vmul.f32 %v1619, %v1756
    %v1940 = vmul.f32 %v1620, %v1758
    %v1941 = vmul.f32 %v1621, %v1760
    %v1942 = vmul.f32 %v1622, %v1762
    %v1943 = vmul.f32 %v1623, %v1764
    %v1944 = vmul.f32 %v1624, %v1766
    %v1945 = vmul.f32 %v1625, %v1768
    %v1946 = vmul.f32 %v1626, %v1770
    %v1947 = vmul.f32 %v1627, %v1772
    %v1948 = vmul.f32 %v1628, %v1774
    %v1949 = vmul.f32 %v1629, %v1776
    %v1950 = vmul.f32 %v1630, %v1778
    %v1951 = vmul.f32 %v1631, %v1780
    %v1952 = vmul.f32 %v1632, %v1782
    %v1953 = vmul.f32 %v1633, %v1784
    %v1954 = vmul.f32 %v1634, %v1786
    %v1955 = vmul.f32 %v1635, %v1788
    %v1956 = vmul.f32 %v1636, %v1790
    %v1957 = vmul.f32 %v1637, %v1792
    %v1958 = vmul.f32 %v1638, %v1794
    %v1959 = vmul.f32 %v1639, %v1796
    %v1960 = vmul.f32 %v1640, %v1798
    %v1961 = vmul.f32 %v1641, %v1800
    %v1962 = vmul.f32 %v1642, %v1802
    %v1963 = vmul.f32 %v1643, %v1804
    %v1964 = vmul.f32 %v1644, %v1806
    %v1965 = vmul.f32 %v1645, %v1808
    %v1966 = vmul.f32 %v1646, %v1810
    %v1967 = vmul.f32 %v1647, %v1812
    %v1968 = vmul.f32 %v1648, %v1814
    %v1969 = vmul.f32 %v1649, %v1816
    %v1970 = vmul.f32 %v1650, %v1818
    %v1971 = vmul.f32 %v1651, %v1820
    %v1972 = vmul.f32 %v1652, %v1822
    %v1973 = vmul.f32 %v1653, %v1824
    %v1974 = vmul.f32 %v1654, %v1826
    %v1975 = vmul.f32 %v1655, %v1828
    %v1976 = vmul.f32 %v1656, %v1830
    %v1977 = vmul.f32 %v1657, %v1832
    %v1978 = vmul.f32 %v1658, %v1834
    %v1979 = vmul.f32 %v1659, %v1836
    %v1980 = vmul.f32 %v1660, %v1838
    %v1981 = vmul.f32 %v1661, %v1840
    %v1982 = vmul.f32 %v1662, %v1842
    %v1983 = vmul.f32 %v1663, %v1844
    %v1984 = vmul.f32 %v1664, %v1846
    %v1985 = vmul.f32 %v1665, %v1848
    %v1986 = vmul.f32 %v1666, %v1850
    %v1987 = vmul.f32 %v1667, %v1852
    %v1988 = vmul.f32 %v1668, %v1854
    %v1989 = vmul.f32 %v1669, %v1856
    %v1990 = vmul.f32 %v1670, %v1858
    %v1991 = vmul.f32 %v1671, %v1860
    %v1992 = vmul.f32 %v1672, %v1862
    %v1993 = vmul.f32 %v1673, %v1864
    %v1994 = vmul.f32 %v1674, %v1866
    %v1995 = vadd.f32 %v1228, %v1931
    %v1996 = vadd.f32 %v1231, %v1932
    %v1997 = vadd.f32 %v1234, %v1933
    %v1998 = vadd.f32 %v1237, %v1934
    %v1999 = vadd.f32 %v1240, %v1935
    %v2000 = vadd.f32 %v1243, %v1936
    %v2001 = vadd.f32 %v1246, %v1937
    %v2002 = vadd.f32 %v1249, %v1938
    %v2003 = vadd.f32 %v1252, %v1939
    %v2004 = vadd.f32 %v1255, %v1940
    %v2005 = vadd.f32 %v1258, %v1941
    %v2006 = vadd.f32 %v1261, %v1942
    %v2007 = vadd.f32 %v1264, %v1943
    %v2008 = vadd.f32 %v1267, %v1944
    %v2009 = vadd.f32 %v1270, %v1945
    %v2010 = vadd.f32 %v1273, %v1946
    %v2011 = vadd.f32 %v1276, %v1947
    %v2012 = vadd.f32 %v1279, %v1948
    %v2013 = vadd.f32 %v1282, %v1949
    %v2014 = vadd.f32 %v1285, %v1950
    %v2015 = vadd.f32 %v1288, %v1951
    %v2016 = vadd.f32 %v1291, %v1952
    %v2017 = vadd.f32 %v1294, %v1953
    %v2018 = vadd.f32 %v1297, %v1954
    %v2019 = vadd.f32 %v1300, %v1955
    %v2020 = vadd.f32 %v1303, %v1956
    %v2021 = vadd.f32 %v1306, %v1957
    %v2022 = vadd.f32 %v1309, %v1958
    %v2023 = vadd.f32 %v1312, %v1959
    %v2024 = vadd.f32 %v1315, %v1960
    %v2025 = vadd.f32 %v1318, %v1961
    %v2026 = vadd.f32 %v1321, %v1962
    %v2027 = vadd.f32 %v1324, %v1963
    %v2028 = vadd.f32 %v1327, %v1964
    %v2029 = vadd.f32 %v1330, %v1965
    %v2030 = vadd.f32 %v1333, %v1966
    %v2031 = vadd.f32 %v1336, %v1967
    %v2032 = vadd.f32 %v1339, %v1968
    %v2033 = vadd.f32 %v1342, %v1969
    %v2034 = vadd.f32 %v1345, %v1970
    %v2035 = vadd.f32 %v1348, %v1971
    %v2036 = vadd.f32 %v1351, %v1972
    %v2037 = vadd.f32 %v1354, %v1973
    %v2038 = vadd.f32 %v1357, %v1974
    %v2039 = vadd.f32 %v1360, %v1975
    %v2040 = vadd.f32 %v1363, %v1976
    %v2041 = vadd.f32 %v1366, %v1977
    %v2042 = vadd.f32 %v1369, %v1978
    %v2043 = vadd.f32 %v1372, %v1979
    %v2044 = vadd.f32 %v1375, %v1980
    %v2045 = vadd.f32 %v1378, %v1981
    %v2046 = vadd.f32 %v1381, %v1982
    %v2047 = vadd.f32 %v1384, %v1983
    %v2048 = vadd.f32 %v1387, %v1984
    %v2049 = vadd.f32 %v1390, %v1985
    %v2050 = vadd.f32 %v1393, %v1986
    %v2051 = vadd.f32 %v1396, %v1987
    %v2052 = vadd.f32 %v1399, %v1988
    %v2053 = vadd.f32 %v1402, %v1989
    %v2054 = vadd.f32 %v1405, %v1990
    %v2055 = vadd.f32 %v1408, %v1991
    %v2056 = vadd.f32 %v1411, %v1992
    %v2057 = vadd.f32 %v1414, %v1993
    %v2058 = vadd.f32 %v1417, %v1994
    %v2059 = vld [vmem:[%s8] sm:$0xff]
    %v2060 = vld [vmem:[%s8 + $0x8] sm:$0xff]
    %v2061 = vld [vmem:[%s8 + $0x10] sm:$0xff]
    %v2062 = vld [vmem:[%s8 + $0x18] sm:$0xff]
    %v2063 = vld [vmem:[%s9] sm:$0x1]
    %v2065 = vperm.slane %v2063, 0
    %vm2067 = vcmask 261120
    %v2069 = vsel %vm2067, %v1995, 0
    %v2072 = vsel %vm2067, %v1996, 0
    %v2075 = vsel %vm2067, %v1997, 0
    %v2078 = vsel %vm2067, %v1998, 0
    %v2081 = vsel %vm2067, %v1999, 0
    %v2084 = vsel %vm2067, %v2000, 0
    %v2087 = vsel %vm2067, %v2001, 0
    %v2090 = vsel %vm2067, %v2002, 0
    %v2093 = vsel %vm2067, %v2003, 0
    %v2096 = vsel %vm2067, %v2004, 0
    %v2099 = vsel %vm2067, %v2005, 0
    %v2102 = vsel %vm2067, %v2006, 0
    %v2105 = vsel %vm2067, %v2007, 0
    %v2108 = vsel %vm2067, %v2008, 0
    %v2111 = vsel %vm2067, %v2009, 0
    %v2114 = vsel %vm2067, %v2010, 0
    %v2117 = vsel %vm2067, %v2011, 0
    %v2120 = vsel %vm2067, %v2012, 0
    %v2123 = vsel %vm2067, %v2013, 0
    %v2126 = vsel %vm2067, %v2014, 0
    %v2129 = vsel %vm2067, %v2015, 0
    %v2132 = vsel %vm2067, %v2016, 0
    %v2135 = vsel %vm2067, %v2017, 0
    %v2138 = vsel %vm2067, %v2018, 0
    %v2141 = vsel %vm2067, %v2019, 0
    %v2144 = vsel %vm2067, %v2020, 0
    %v2147 = vsel %vm2067, %v2021, 0
    %v2150 = vsel %vm2067, %v2022, 0
    %v2153 = vsel %vm2067, %v2023, 0
    %v2156 = vsel %vm2067, %v2024, 0
    %v2159 = vsel %vm2067, %v2025, 0
    %v2162 = vsel %vm2067, %v2026, 0
    %v2165 = vsel %vm2067, %v2027, 0
    %v2168 = vsel %vm2067, %v2028, 0
    %v2171 = vsel %vm2067, %v2029, 0
    %v2174 = vsel %vm2067, %v2030, 0
    %v2177 = vsel %vm2067, %v2031, 0
    %v2180 = vsel %vm2067, %v2032, 0
    %v2183 = vsel %vm2067, %v2033, 0
    %v2186 = vsel %vm2067, %v2034, 0
    %v2189 = vsel %vm2067, %v2035, 0
    %v2192 = vsel %vm2067, %v2036, 0
    %v2195 = vsel %vm2067, %v2037, 0
    %v2198 = vsel %vm2067, %v2038, 0
    %v2201 = vsel %vm2067, %v2039, 0
    %v2204 = vsel %vm2067, %v2040, 0
    %v2207 = vsel %vm2067, %v2041, 0
    %v2210 = vsel %vm2067, %v2042, 0
    %v2213 = vsel %vm2067, %v2043, 0
    %v2216 = vsel %vm2067, %v2044, 0
    %v2219 = vsel %vm2067, %v2045, 0
    %v2222 = vsel %vm2067, %v2046, 0
    %v2225 = vsel %vm2067, %v2047, 0
    %v2228 = vsel %vm2067, %v2048, 0
    %v2231 = vsel %vm2067, %v2049, 0
    %v2234 = vsel %vm2067, %v2050, 0
    %v2237 = vsel %vm2067, %v2051, 0
    %v2240 = vsel %vm2067, %v2052, 0
    %v2243 = vsel %vm2067, %v2053, 0
    %v2246 = vsel %vm2067, %v2054, 0
    %v2249 = vsel %vm2067, %v2055, 0
    %v2252 = vsel %vm2067, %v2056, 0
    %v2255 = vsel %vm2067, %v2057, 0
    %v2258 = vsel %vm2067, %v2058, 0
    %2260 = vmatpush.msra.mxu0 0.0
    %2261 = vmatpush.msra.mxu0 0.0
    %2262 = vmatpush.msra.mxu0 0.0
    %2263 = vmatpush.msra.mxu0 0.0
    %2264 = vmatpush.msra.mxu0 0.0
    %2265 = vmatpush.msra.mxu0 0.0
    %2266 = vmatpush.msra.mxu0 0.0
    %2267 = vmatpush.msra.mxu0 0.0
    %2268 = vmatpush.msra.mxu0 0.0
    %2269 = vmatpush.msra.mxu0 0.0
    %2270 = vmatpush.msra.mxu0 0.0
    %2271 = vmatpush.msra.mxu0 0.0
    %2272 = vmatpush.msra.mxu0 %v2062
    %2273 = vmatpush.msra.mxu0 %v2061
    %2274 = vmatpush.msra.mxu0 %v2060
    %2275 = vmatpush.msra.mxu0 %v2059
    %2276 = vmatmul.f32.gmra.mxu0 %v2069
    %v2277 = vpop.f32.mrf.mxu0
    %v2278 = vadd.f32 %v2065, %v2277
    %2279 = vmatmul.f32.gmra.mxu0 %v2072
    %v2280 = vpop.f32.mrf.mxu0
    %v2281 = vadd.f32 %v2065, %v2280
    %2282 = vmatmul.f32.gmra.mxu0 %v2075
    %v2283 = vpop.f32.mrf.mxu0
    %v2284 = vadd.f32 %v2065, %v2283
    %2285 = vmatmul.f32.gmra.mxu0 %v2078
    %v2286 = vpop.f32.mrf.mxu0
    %v2287 = vadd.f32 %v2065, %v2286
    %2288 = vmatmul.f32.gmra.mxu0 %v2081
    %v2289 = vpop.f32.mrf.mxu0
    %v2290 = vadd.f32 %v2065, %v2289
    %2291 = vmatmul.f32.gmra.mxu0 %v2084
    %v2292 = vpop.f32.mrf.mxu0
    %v2293 = vadd.f32 %v2065, %v2292
    %2294 = vmatmul.f32.gmra.mxu0 %v2087
    %v2295 = vpop.f32.mrf.mxu0
    %v2296 = vadd.f32 %v2065, %v2295
    %2297 = vmatmul.f32.gmra.mxu0 %v2090
    %v2298 = vpop.f32.mrf.mxu0
    %v2299 = vadd.f32 %v2065, %v2298
    %2300 = vmatmul.f32.gmra.mxu0 %v2093
    %v2301 = vpop.f32.mrf.mxu0
    %v2302 = vadd.f32 %v2065, %v2301
    %2303 = vmatmul.f32.gmra.mxu0 %v2096
    %v2304 = vpop.f32.mrf.mxu0
    %v2305 = vadd.f32 %v2065, %v2304
    %2306 = vmatmul.f32.gmra.mxu0 %v2099
    %v2307 = vpop.f32.mrf.mxu0
    %v2308 = vadd.f32 %v2065, %v2307
    %2309 = vmatmul.f32.gmra.mxu0 %v2102
    %v2310 = vpop.f32.mrf.mxu0
    %v2311 = vadd.f32 %v2065, %v2310
    %2312 = vmatmul.f32.gmra.mxu0 %v2105
    %v2313 = vpop.f32.mrf.mxu0
    %v2314 = vadd.f32 %v2065, %v2313
    %2315 = vmatmul.f32.gmra.mxu0 %v2108
    %v2316 = vpop.f32.mrf.mxu0
    %v2317 = vadd.f32 %v2065, %v2316
    %2318 = vmatmul.f32.gmra.mxu0 %v2111
    %v2319 = vpop.f32.mrf.mxu0
    %v2320 = vadd.f32 %v2065, %v2319
    %2321 = vmatmul.f32.gmra.mxu0 %v2114
    %v2322 = vpop.f32.mrf.mxu0
    %v2323 = vadd.f32 %v2065, %v2322
    %2324 = vmatmul.f32.gmra.mxu0 %v2117
    %v2325 = vpop.f32.mrf.mxu0
    %v2326 = vadd.f32 %v2065, %v2325
    %2327 = vmatmul.f32.gmra.mxu0 %v2120
    %v2328 = vpop.f32.mrf.mxu0
    %v2329 = vadd.f32 %v2065, %v2328
    %2330 = vmatmul.f32.gmra.mxu0 %v2123
    %v2331 = vpop.f32.mrf.mxu0
    %v2332 = vadd.f32 %v2065, %v2331
    %2333 = vmatmul.f32.gmra.mxu0 %v2126
    %v2334 = vpop.f32.mrf.mxu0
    %v2335 = vadd.f32 %v2065, %v2334
    %2336 = vmatmul.f32.gmra.mxu0 %v2129
    %v2337 = vpop.f32.mrf.mxu0
    %v2338 = vadd.f32 %v2065, %v2337
    %2339 = vmatmul.f32.gmra.mxu0 %v2132
    %v2340 = vpop.f32.mrf.mxu0
    %v2341 = vadd.f32 %v2065, %v2340
    %2342 = vmatmul.f32.gmra.mxu0 %v2135
    %v2343 = vpop.f32.mrf.mxu0
    %v2344 = vadd.f32 %v2065, %v2343
    %2345 = vmatmul.f32.gmra.mxu0 %v2138
    %v2346 = vpop.f32.mrf.mxu0
    %v2347 = vadd.f32 %v2065, %v2346
    %2348 = vmatmul.f32.gmra.mxu0 %v2141
    %v2349 = vpop.f32.mrf.mxu0
    %v2350 = vadd.f32 %v2065, %v2349
    %2351 = vmatmul.f32.gmra.mxu0 %v2144
    %v2352 = vpop.f32.mrf.mxu0
    %v2353 = vadd.f32 %v2065, %v2352
    %2354 = vmatmul.f32.gmra.mxu0 %v2147
    %v2355 = vpop.f32.mrf.mxu0
    %v2356 = vadd.f32 %v2065, %v2355
    %2357 = vmatmul.f32.gmra.mxu0 %v2150
    %v2358 = vpop.f32.mrf.mxu0
    %v2359 = vadd.f32 %v2065, %v2358
    %2360 = vmatmul.f32.gmra.mxu0 %v2153
    %v2361 = vpop.f32.mrf.mxu0
    %v2362 = vadd.f32 %v2065, %v2361
    %2363 = vmatmul.f32.gmra.mxu0 %v2156
    %v2364 = vpop.f32.mrf.mxu0
    %v2365 = vadd.f32 %v2065, %v2364
    %2366 = vmatmul.f32.gmra.mxu0 %v2159
    %v2367 = vpop.f32.mrf.mxu0
    %v2368 = vadd.f32 %v2065, %v2367
    %2369 = vmatmul.f32.gmra.mxu0 %v2162
    %v2370 = vpop.f32.mrf.mxu0
    %v2371 = vadd.f32 %v2065, %v2370
    %2372 = vmatmul.f32.gmra.mxu0 %v2165
    %v2373 = vpop.f32.mrf.mxu0
    %v2374 = vadd.f32 %v2065, %v2373
    %2375 = vmatmul.f32.gmra.mxu0 %v2168
    %v2376 = vpop.f32.mrf.mxu0
    %v2377 = vadd.f32 %v2065, %v2376
    %2378 = vmatmul.f32.gmra.mxu0 %v2171
    %v2379 = vpop.f32.mrf.mxu0
    %v2380 = vadd.f32 %v2065, %v2379
    %2381 = vmatmul.f32.gmra.mxu0 %v2174
    %v2382 = vpop.f32.mrf.mxu0
    %v2383 = vadd.f32 %v2065, %v2382
    %2384 = vmatmul.f32.gmra.mxu0 %v2177
    %v2385 = vpop.f32.mrf.mxu0
    %v2386 = vadd.f32 %v2065, %v2385
    %2387 = vmatmul.f32.gmra.mxu0 %v2180
    %v2388 = vpop.f32.mrf.mxu0
    %v2389 = vadd.f32 %v2065, %v2388
    %2390 = vmatmul.f32.gmra.mxu0 %v2183
    %v2391 = vpop.f32.mrf.mxu0
    %v2392 = vadd.f32 %v2065, %v2391
    %2393 = vmatmul.f32.gmra.mxu0 %v2186
    %v2394 = vpop.f32.mrf.mxu0
    %v2395 = vadd.f32 %v2065, %v2394
    %2396 = vmatmul.f32.gmra.mxu0 %v2189
    %v2397 = vpop.f32.mrf.mxu0
    %v2398 = vadd.f32 %v2065, %v2397
    %2399 = vmatmul.f32.gmra.mxu0 %v2192
    %v2400 = vpop.f32.mrf.mxu0
    %v2401 = vadd.f32 %v2065, %v2400
    %2402 = vmatmul.f32.gmra.mxu0 %v2195
    %v2403 = vpop.f32.mrf.mxu0
    %v2404 = vadd.f32 %v2065, %v2403
    %2405 = vmatmul.f32.gmra.mxu0 %v2198
    %v2406 = vpop.f32.mrf.mxu0
    %v2407 = vadd.f32 %v2065, %v2406
    %2408 = vmatmul.f32.gmra.mxu0 %v2201
    %v2409 = vpop.f32.mrf.mxu0
    %v2410 = vadd.f32 %v2065, %v2409
    %2411 = vmatmul.f32.gmra.mxu0 %v2204
    %v2412 = vpop.f32.mrf.mxu0
    %v2413 = vadd.f32 %v2065, %v2412
    %2414 = vmatmul.f32.gmra.mxu0 %v2207
    %v2415 = vpop.f32.mrf.mxu0
    %v2416 = vadd.f32 %v2065, %v2415
    %2417 = vmatmul.f32.gmra.mxu0 %v2210
    %v2418 = vpop.f32.mrf.mxu0
    %v2419 = vadd.f32 %v2065, %v2418
    %2420 = vmatmul.f32.gmra.mxu0 %v2213
    %v2421 = vpop.f32.mrf.mxu0
    %v2422 = vadd.f32 %v2065, %v2421
    %2423 = vmatmul.f32.gmra.mxu0 %v2216
    %v2424 = vpop.f32.mrf.mxu0
    %v2425 = vadd.f32 %v2065, %v2424
    %2426 = vmatmul.f32.gmra.mxu0 %v2219
    %v2427 = vpop.f32.mrf.mxu0
    %v2428 = vadd.f32 %v2065, %v2427
    %2429 = vmatmul.f32.gmra.mxu0 %v2222
    %v2430 = vpop.f32.mrf.mxu0
    %v2431 = vadd.f32 %v2065, %v2430
    %2432 = vmatmul.f32.gmra.mxu0 %v2225
    %v2433 = vpop.f32.mrf.mxu0
    %v2434 = vadd.f32 %v2065, %v2433
    %2435 = vmatmul.f32.gmra.mxu0 %v2228
    %v2436 = vpop.f32.mrf.mxu0
    %v2437 = vadd.f32 %v2065, %v2436
    %2438 = vmatmul.f32.gmra.mxu0 %v2231
    %v2439 = vpop.f32.mrf.mxu0
    %v2440 = vadd.f32 %v2065, %v2439
    %2441 = vmatmul.f32.gmra.mxu0 %v2234
    %v2442 = vpop.f32.mrf.mxu0
    %v2443 = vadd.f32 %v2065, %v2442
    %2444 = vmatmul.f32.gmra.mxu0 %v2237
    %v2445 = vpop.f32.mrf.mxu0
    %v2446 = vadd.f32 %v2065, %v2445
    %2447 = vmatmul.f32.gmra.mxu0 %v2240
    %v2448 = vpop.f32.mrf.mxu0
    %v2449 = vadd.f32 %v2065, %v2448
    %2450 = vmatmul.f32.gmra.mxu0 %v2243
    %v2451 = vpop.f32.mrf.mxu0
    %v2452 = vadd.f32 %v2065, %v2451
    %2453 = vmatmul.f32.gmra.mxu0 %v2246
    %v2454 = vpop.f32.mrf.mxu0
    %v2455 = vadd.f32 %v2065, %v2454
    %2456 = vmatmul.f32.gmra.mxu0 %v2249
    %v2457 = vpop.f32.mrf.mxu0
    %v2458 = vadd.f32 %v2065, %v2457
    %2459 = vmatmul.f32.gmra.mxu0 %v2252
    %v2460 = vpop.f32.mrf.mxu0
    %v2461 = vadd.f32 %v2065, %v2460
    %2462 = vmatmul.f32.gmra.mxu0 %v2255
    %v2463 = vpop.f32.mrf.mxu0
    %v2464 = vadd.f32 %v2065, %v2463
    %2465 = vmatmul.f32.gmra.mxu0 %v2258
    %v2466 = vpop.f32.mrf.mxu0
    %v2467 = vadd.f32 %v2065, %v2466
    %2468 = vdwg.mxu0
    %v2469 = vmax.f32 %v2278, 0.0
    %v2470 = vmax.f32 %v2281, 0.0
    %v2471 = vmax.f32 %v2284, 0.0
    %v2472 = vmax.f32 %v2287, 0.0
    %v2473 = vmax.f32 %v2290, 0.0
    %v2474 = vmax.f32 %v2293, 0.0
    %v2475 = vmax.f32 %v2296, 0.0
    %v2476 = vmax.f32 %v2299, 0.0
    %v2477 = vmax.f32 %v2302, 0.0
    %v2478 = vmax.f32 %v2305, 0.0
    %v2479 = vmax.f32 %v2308, 0.0
    %v2480 = vmax.f32 %v2311, 0.0
    %v2481 = vmax.f32 %v2314, 0.0
    %v2482 = vmax.f32 %v2317, 0.0
    %v2483 = vmax.f32 %v2320, 0.0
    %v2484 = vmax.f32 %v2323, 0.0
    %v2485 = vmax.f32 %v2326, 0.0
    %v2486 = vmax.f32 %v2329, 0.0
    %v2487 = vmax.f32 %v2332, 0.0
    %v2488 = vmax.f32 %v2335, 0.0
    %v2489 = vmax.f32 %v2338, 0.0
    %v2490 = vmax.f32 %v2341, 0.0
    %v2491 = vmax.f32 %v2344, 0.0
    %v2492 = vmax.f32 %v2347, 0.0
    %v2493 = vmax.f32 %v2350, 0.0
    %v2494 = vmax.f32 %v2353, 0.0
    %v2495 = vmax.f32 %v2356, 0.0
    %v2496 = vmax.f32 %v2359, 0.0
    %v2497 = vmax.f32 %v2362, 0.0
    %v2498 = vmax.f32 %v2365, 0.0
    %v2499 = vmax.f32 %v2368, 0.0
    %v2500 = vmax.f32 %v2371, 0.0
    %v2501 = vmax.f32 %v2374, 0.0
    %v2502 = vmax.f32 %v2377, 0.0
    %v2503 = vmax.f32 %v2380, 0.0
    %v2504 = vmax.f32 %v2383, 0.0
    %v2505 = vmax.f32 %v2386, 0.0
    %v2506 = vmax.f32 %v2389, 0.0
    %v2507 = vmax.f32 %v2392, 0.0
    %v2508 = vmax.f32 %v2395, 0.0
    %v2509 = vmax.f32 %v2398, 0.0
    %v2510 = vmax.f32 %v2401, 0.0
    %v2511 = vmax.f32 %v2404, 0.0
    %v2512 = vmax.f32 %v2407, 0.0
    %v2513 = vmax.f32 %v2410, 0.0
    %v2514 = vmax.f32 %v2413, 0.0
    %v2515 = vmax.f32 %v2416, 0.0
    %v2516 = vmax.f32 %v2419, 0.0
    %v2517 = vmax.f32 %v2422, 0.0
    %v2518 = vmax.f32 %v2425, 0.0
    %v2519 = vmax.f32 %v2428, 0.0
    %v2520 = vmax.f32 %v2431, 0.0
    %v2521 = vmax.f32 %v2434, 0.0
    %v2522 = vmax.f32 %v2437, 0.0
    %v2523 = vmax.f32 %v2440, 0.0
    %v2524 = vmax.f32 %v2443, 0.0
    %v2525 = vmax.f32 %v2446, 0.0
    %v2526 = vmax.f32 %v2449, 0.0
    %v2527 = vmax.f32 %v2452, 0.0
    %v2528 = vmax.f32 %v2455, 0.0
    %v2529 = vmax.f32 %v2458, 0.0
    %v2530 = vmax.f32 %v2461, 0.0
    %v2531 = vmax.f32 %v2464, 0.0
    %v2532 = vmax.f32 %v2467, 0.0
    %v2533 = vld [vmem:[%s10] sm:$0xff]
    %v2534 = vld [vmem:[%s10 + $0x8] sm:$0xff]
    %v2535 = vld [vmem:[%s10 + $0x10] sm:$0xff]
    %v2536 = vld [vmem:[%s10 + $0x18] sm:$0xff]
    %v2537 = vld [vmem:[%s10 + $0x20] sm:$0xff]
    %v2538 = vld [vmem:[%s10 + $0x28] sm:$0xff]
    %v2539 = vld [vmem:[%s10 + $0x30] sm:$0xff]
    %v2540 = vld [vmem:[%s10 + $0x38] sm:$0xff]
    %v2541 = vld [vmem:[%s11] sm:$0x1]
    %v2543 = vperm.slane %v2541, 0
    %v2546 = vsel %vm1017, %v2469, 0
    %v2549 = vsel %vm1017, %v2470, 0
    %v2552 = vsel %vm1017, %v2471, 0
    %v2555 = vsel %vm1017, %v2472, 0
    %v2558 = vsel %vm1017, %v2473, 0
    %v2561 = vsel %vm1017, %v2474, 0
    %v2564 = vsel %vm1017, %v2475, 0
    %v2567 = vsel %vm1017, %v2476, 0
    %v2570 = vsel %vm1017, %v2477, 0
    %v2573 = vsel %vm1017, %v2478, 0
    %v2576 = vsel %vm1017, %v2479, 0
    %v2579 = vsel %vm1017, %v2480, 0
    %v2582 = vsel %vm1017, %v2481, 0
    %v2585 = vsel %vm1017, %v2482, 0
    %v2588 = vsel %vm1017, %v2483, 0
    %v2591 = vsel %vm1017, %v2484, 0
    %v2594 = vsel %vm1017, %v2485, 0
    %v2597 = vsel %vm1017, %v2486, 0
    %v2600 = vsel %vm1017, %v2487, 0
    %v2603 = vsel %vm1017, %v2488, 0
    %v2606 = vsel %vm1017, %v2489, 0
    %v2609 = vsel %vm1017, %v2490, 0
    %v2612 = vsel %vm1017, %v2491, 0
    %v2615 = vsel %vm1017, %v2492, 0
    %v2618 = vsel %vm1017, %v2493, 0
    %v2621 = vsel %vm1017, %v2494, 0
    %v2624 = vsel %vm1017, %v2495, 0
    %v2627 = vsel %vm1017, %v2496, 0
    %v2630 = vsel %vm1017, %v2497, 0
    %v2633 = vsel %vm1017, %v2498, 0
    %v2636 = vsel %vm1017, %v2499, 0
    %v2639 = vsel %vm1017, %v2500, 0
    %v2642 = vsel %vm1017, %v2501, 0
    %v2645 = vsel %vm1017, %v2502, 0
    %v2648 = vsel %vm1017, %v2503, 0
    %v2651 = vsel %vm1017, %v2504, 0
    %v2654 = vsel %vm1017, %v2505, 0
    %v2657 = vsel %vm1017, %v2506, 0
    %v2660 = vsel %vm1017, %v2507, 0
    %v2663 = vsel %vm1017, %v2508, 0
    %v2666 = vsel %vm1017, %v2509, 0
    %v2669 = vsel %vm1017, %v2510, 0
    %v2672 = vsel %vm1017, %v2511, 0
    %v2675 = vsel %vm1017, %v2512, 0
    %v2678 = vsel %vm1017, %v2513, 0
    %v2681 = vsel %vm1017, %v2514, 0
    %v2684 = vsel %vm1017, %v2515, 0
    %v2687 = vsel %vm1017, %v2516, 0
    %v2690 = vsel %vm1017, %v2517, 0
    %v2693 = vsel %vm1017, %v2518, 0
    %v2696 = vsel %vm1017, %v2519, 0
    %v2699 = vsel %vm1017, %v2520, 0
    %v2702 = vsel %vm1017, %v2521, 0
    %v2705 = vsel %vm1017, %v2522, 0
    %v2708 = vsel %vm1017, %v2523, 0
    %v2711 = vsel %vm1017, %v2524, 0
    %v2714 = vsel %vm1017, %v2525, 0
    %v2717 = vsel %vm1017, %v2526, 0
    %v2720 = vsel %vm1017, %v2527, 0
    %v2723 = vsel %vm1017, %v2528, 0
    %v2726 = vsel %vm1017, %v2529, 0
    %v2729 = vsel %vm1017, %v2530, 0
    %v2732 = vsel %vm1017, %v2531, 0
    %v2735 = vsel %vm1017, %v2532, 0
    %2737 = vmatpush.msra.mxu0 0.0
    %2738 = vmatpush.msra.mxu0 0.0
    %2739 = vmatpush.msra.mxu0 0.0
    %2740 = vmatpush.msra.mxu0 0.0
    %2741 = vmatpush.msra.mxu0 0.0
    %2742 = vmatpush.msra.mxu0 0.0
    %2743 = vmatpush.msra.mxu0 0.0
    %2744 = vmatpush.msra.mxu0 0.0
    %2745 = vmatpush.msra.mxu0 %v2540
    %2746 = vmatpush.msra.mxu0 %v2539
    %2747 = vmatpush.msra.mxu0 %v2538
    %2748 = vmatpush.msra.mxu0 %v2537
    %2749 = vmatpush.msra.mxu0 %v2536
    %2750 = vmatpush.msra.mxu0 %v2535
    %2751 = vmatpush.msra.mxu0 %v2534
    %2752 = vmatpush.msra.mxu0 %v2533
    %2753 = vmatmul.f32.gmra.mxu0 %v2546
    %v2754 = vpop.f32.mrf.mxu0
    %v2755 = vadd.f32 %v2543, %v2754
    %2756 = vmatmul.f32.gmra.mxu0 %v2549
    %v2757 = vpop.f32.mrf.mxu0
    %v2758 = vadd.f32 %v2543, %v2757
    %2759 = vmatmul.f32.gmra.mxu0 %v2552
    %v2760 = vpop.f32.mrf.mxu0
    %v2761 = vadd.f32 %v2543, %v2760
    %2762 = vmatmul.f32.gmra.mxu0 %v2555
    %v2763 = vpop.f32.mrf.mxu0
    %v2764 = vadd.f32 %v2543, %v2763
    %2765 = vmatmul.f32.gmra.mxu0 %v2558
    %v2766 = vpop.f32.mrf.mxu0
    %v2767 = vadd.f32 %v2543, %v2766
    %2768 = vmatmul.f32.gmra.mxu0 %v2561
    %v2769 = vpop.f32.mrf.mxu0
    %v2770 = vadd.f32 %v2543, %v2769
    %2771 = vmatmul.f32.gmra.mxu0 %v2564
    %v2772 = vpop.f32.mrf.mxu0
    %v2773 = vadd.f32 %v2543, %v2772
    %2774 = vmatmul.f32.gmra.mxu0 %v2567
    %v2775 = vpop.f32.mrf.mxu0
    %v2776 = vadd.f32 %v2543, %v2775
    %2777 = vmatmul.f32.gmra.mxu0 %v2570
    %v2778 = vpop.f32.mrf.mxu0
    %v2779 = vadd.f32 %v2543, %v2778
    %2780 = vmatmul.f32.gmra.mxu0 %v2573
    %v2781 = vpop.f32.mrf.mxu0
    %v2782 = vadd.f32 %v2543, %v2781
    %2783 = vmatmul.f32.gmra.mxu0 %v2576
    %v2784 = vpop.f32.mrf.mxu0
    %v2785 = vadd.f32 %v2543, %v2784
    %2786 = vmatmul.f32.gmra.mxu0 %v2579
    %v2787 = vpop.f32.mrf.mxu0
    %v2788 = vadd.f32 %v2543, %v2787
    %2789 = vmatmul.f32.gmra.mxu0 %v2582
    %v2790 = vpop.f32.mrf.mxu0
    %v2791 = vadd.f32 %v2543, %v2790
    %2792 = vmatmul.f32.gmra.mxu0 %v2585
    %v2793 = vpop.f32.mrf.mxu0
    %v2794 = vadd.f32 %v2543, %v2793
    %2795 = vmatmul.f32.gmra.mxu0 %v2588
    %v2796 = vpop.f32.mrf.mxu0
    %v2797 = vadd.f32 %v2543, %v2796
    %2798 = vmatmul.f32.gmra.mxu0 %v2591
    %v2799 = vpop.f32.mrf.mxu0
    %v2800 = vadd.f32 %v2543, %v2799
    %2801 = vmatmul.f32.gmra.mxu0 %v2594
    %v2802 = vpop.f32.mrf.mxu0
    %v2803 = vadd.f32 %v2543, %v2802
    %2804 = vmatmul.f32.gmra.mxu0 %v2597
    %v2805 = vpop.f32.mrf.mxu0
    %v2806 = vadd.f32 %v2543, %v2805
    %2807 = vmatmul.f32.gmra.mxu0 %v2600
    %v2808 = vpop.f32.mrf.mxu0
    %v2809 = vadd.f32 %v2543, %v2808
    %2810 = vmatmul.f32.gmra.mxu0 %v2603
    %v2811 = vpop.f32.mrf.mxu0
    %v2812 = vadd.f32 %v2543, %v2811
    %2813 = vmatmul.f32.gmra.mxu0 %v2606
    %v2814 = vpop.f32.mrf.mxu0
    %v2815 = vadd.f32 %v2543, %v2814
    %2816 = vmatmul.f32.gmra.mxu0 %v2609
    %v2817 = vpop.f32.mrf.mxu0
    %v2818 = vadd.f32 %v2543, %v2817
    %2819 = vmatmul.f32.gmra.mxu0 %v2612
    %v2820 = vpop.f32.mrf.mxu0
    %v2821 = vadd.f32 %v2543, %v2820
    %2822 = vmatmul.f32.gmra.mxu0 %v2615
    %v2823 = vpop.f32.mrf.mxu0
    %v2824 = vadd.f32 %v2543, %v2823
    %2825 = vmatmul.f32.gmra.mxu0 %v2618
    %v2826 = vpop.f32.mrf.mxu0
    %v2827 = vadd.f32 %v2543, %v2826
    %2828 = vmatmul.f32.gmra.mxu0 %v2621
    %v2829 = vpop.f32.mrf.mxu0
    %v2830 = vadd.f32 %v2543, %v2829
    %2831 = vmatmul.f32.gmra.mxu0 %v2624
    %v2832 = vpop.f32.mrf.mxu0
    %v2833 = vadd.f32 %v2543, %v2832
    %2834 = vmatmul.f32.gmra.mxu0 %v2627
    %v2835 = vpop.f32.mrf.mxu0
    %v2836 = vadd.f32 %v2543, %v2835
    %2837 = vmatmul.f32.gmra.mxu0 %v2630
    %v2838 = vpop.f32.mrf.mxu0
    %v2839 = vadd.f32 %v2543, %v2838
    %2840 = vmatmul.f32.gmra.mxu0 %v2633
    %v2841 = vpop.f32.mrf.mxu0
    %v2842 = vadd.f32 %v2543, %v2841
    %2843 = vmatmul.f32.gmra.mxu0 %v2636
    %v2844 = vpop.f32.mrf.mxu0
    %v2845 = vadd.f32 %v2543, %v2844
    %2846 = vmatmul.f32.gmra.mxu0 %v2639
    %v2847 = vpop.f32.mrf.mxu0
    %v2848 = vadd.f32 %v2543, %v2847
    %2849 = vmatmul.f32.gmra.mxu0 %v2642
    %v2850 = vpop.f32.mrf.mxu0
    %v2851 = vadd.f32 %v2543, %v2850
    %2852 = vmatmul.f32.gmra.mxu0 %v2645
    %v2853 = vpop.f32.mrf.mxu0
    %v2854 = vadd.f32 %v2543, %v2853
    %2855 = vmatmul.f32.gmra.mxu0 %v2648
    %v2856 = vpop.f32.mrf.mxu0
    %v2857 = vadd.f32 %v2543, %v2856
    %2858 = vmatmul.f32.gmra.mxu0 %v2651
    %v2859 = vpop.f32.mrf.mxu0
    %v2860 = vadd.f32 %v2543, %v2859
    %2861 = vmatmul.f32.gmra.mxu0 %v2654
    %v2862 = vpop.f32.mrf.mxu0
    %v2863 = vadd.f32 %v2543, %v2862
    %2864 = vmatmul.f32.gmra.mxu0 %v2657
    %v2865 = vpop.f32.mrf.mxu0
    %v2866 = vadd.f32 %v2543, %v2865
    %2867 = vmatmul.f32.gmra.mxu0 %v2660
    %v2868 = vpop.f32.mrf.mxu0
    %v2869 = vadd.f32 %v2543, %v2868
    %2870 = vmatmul.f32.gmra.mxu0 %v2663
    %v2871 = vpop.f32.mrf.mxu0
    %v2872 = vadd.f32 %v2543, %v2871
    %2873 = vmatmul.f32.gmra.mxu0 %v2666
    %v2874 = vpop.f32.mrf.mxu0
    %v2875 = vadd.f32 %v2543, %v2874
    %2876 = vmatmul.f32.gmra.mxu0 %v2669
    %v2877 = vpop.f32.mrf.mxu0
    %v2878 = vadd.f32 %v2543, %v2877
    %2879 = vmatmul.f32.gmra.mxu0 %v2672
    %v2880 = vpop.f32.mrf.mxu0
    %v2881 = vadd.f32 %v2543, %v2880
    %2882 = vmatmul.f32.gmra.mxu0 %v2675
    %v2883 = vpop.f32.mrf.mxu0
    %v2884 = vadd.f32 %v2543, %v2883
    %2885 = vmatmul.f32.gmra.mxu0 %v2678
    %v2886 = vpop.f32.mrf.mxu0
    %v2887 = vadd.f32 %v2543, %v2886
    %2888 = vmatmul.f32.gmra.mxu0 %v2681
    %v2889 = vpop.f32.mrf.mxu0
    %v2890 = vadd.f32 %v2543, %v2889
    %2891 = vmatmul.f32.gmra.mxu0 %v2684
    %v2892 = vpop.f32.mrf.mxu0
    %v2893 = vadd.f32 %v2543, %v2892
    %2894 = vmatmul.f32.gmra.mxu0 %v2687
    %v2895 = vpop.f32.mrf.mxu0
    %v2896 = vadd.f32 %v2543, %v2895
    %2897 = vmatmul.f32.gmra.mxu0 %v2690
    %v2898 = vpop.f32.mrf.mxu0
    %v2899 = vadd.f32 %v2543, %v2898
    %2900 = vmatmul.f32.gmra.mxu0 %v2693
    %v2901 = vpop.f32.mrf.mxu0
    %v2902 = vadd.f32 %v2543, %v2901
    %2903 = vmatmul.f32.gmra.mxu0 %v2696
    %v2904 = vpop.f32.mrf.mxu0
    %v2905 = vadd.f32 %v2543, %v2904
    %2906 = vmatmul.f32.gmra.mxu0 %v2699
    %v2907 = vpop.f32.mrf.mxu0
    %v2908 = vadd.f32 %v2543, %v2907
    %2909 = vmatmul.f32.gmra.mxu0 %v2702
    %v2910 = vpop.f32.mrf.mxu0
    %v2911 = vadd.f32 %v2543, %v2910
    %2912 = vmatmul.f32.gmra.mxu0 %v2705
    %v2913 = vpop.f32.mrf.mxu0
    %v2914 = vadd.f32 %v2543, %v2913
    %2915 = vmatmul.f32.gmra.mxu0 %v2708
    %v2916 = vpop.f32.mrf.mxu0
    %v2917 = vadd.f32 %v2543, %v2916
    %2918 = vmatmul.f32.gmra.mxu0 %v2711
    %v2919 = vpop.f32.mrf.mxu0
    %v2920 = vadd.f32 %v2543, %v2919
    %2921 = vmatmul.f32.gmra.mxu0 %v2714
    %v2922 = vpop.f32.mrf.mxu0
    %v2923 = vadd.f32 %v2543, %v2922
    %2924 = vmatmul.f32.gmra.mxu0 %v2717
    %v2925 = vpop.f32.mrf.mxu0
    %v2926 = vadd.f32 %v2543, %v2925
    %2927 = vmatmul.f32.gmra.mxu0 %v2720
    %v2928 = vpop.f32.mrf.mxu0
    %v2929 = vadd.f32 %v2543, %v2928
    %2930 = vmatmul.f32.gmra.mxu0 %v2723
    %v2931 = vpop.f32.mrf.mxu0
    %v2932 = vadd.f32 %v2543, %v2931
    %2933 = vmatmul.f32.gmra.mxu0 %v2726
    %v2934 = vpop.f32.mrf.mxu0
    %v2935 = vadd.f32 %v2543, %v2934
    %2936 = vmatmul.f32.gmra.mxu0 %v2729
    %v2937 = vpop.f32.mrf.mxu0
    %v2938 = vadd.f32 %v2543, %v2937
    %2939 = vmatmul.f32.gmra.mxu0 %v2732
    %v2940 = vpop.f32.mrf.mxu0
    %v2941 = vadd.f32 %v2543, %v2940
    %2942 = vmatmul.f32.gmra.mxu0 %v2735
    %v2943 = vpop.f32.mrf.mxu0
    %v2944 = vadd.f32 %v2543, %v2943
    %2945 = vdwg.mxu0
    %v2946 = vmax.f32 %v2755, 0.0
    %v2947 = vmax.f32 %v2758, 0.0
    %v2948 = vmax.f32 %v2761, 0.0
    %v2949 = vmax.f32 %v2764, 0.0
    %v2950 = vmax.f32 %v2767, 0.0
    %v2951 = vmax.f32 %v2770, 0.0
    %v2952 = vmax.f32 %v2773, 0.0
    %v2953 = vmax.f32 %v2776, 0.0
    %v2954 = vmax.f32 %v2779, 0.0
    %v2955 = vmax.f32 %v2782, 0.0
    %v2956 = vmax.f32 %v2785, 0.0
    %v2957 = vmax.f32 %v2788, 0.0
    %v2958 = vmax.f32 %v2791, 0.0
    %v2959 = vmax.f32 %v2794, 0.0
    %v2960 = vmax.f32 %v2797, 0.0
    %v2961 = vmax.f32 %v2800, 0.0
    %v2962 = vmax.f32 %v2803, 0.0
    %v2963 = vmax.f32 %v2806, 0.0
    %v2964 = vmax.f32 %v2809, 0.0
    %v2965 = vmax.f32 %v2812, 0.0
    %v2966 = vmax.f32 %v2815, 0.0
    %v2967 = vmax.f32 %v2818, 0.0
    %v2968 = vmax.f32 %v2821, 0.0
    %v2969 = vmax.f32 %v2824, 0.0
    %v2970 = vmax.f32 %v2827, 0.0
    %v2971 = vmax.f32 %v2830, 0.0
    %v2972 = vmax.f32 %v2833, 0.0
    %v2973 = vmax.f32 %v2836, 0.0
    %v2974 = vmax.f32 %v2839, 0.0
    %v2975 = vmax.f32 %v2842, 0.0
    %v2976 = vmax.f32 %v2845, 0.0
    %v2977 = vmax.f32 %v2848, 0.0
    %v2978 = vmax.f32 %v2851, 0.0
    %v2979 = vmax.f32 %v2854, 0.0
    %v2980 = vmax.f32 %v2857, 0.0
    %v2981 = vmax.f32 %v2860, 0.0
    %v2982 = vmax.f32 %v2863, 0.0
    %v2983 = vmax.f32 %v2866, 0.0
    %v2984 = vmax.f32 %v2869, 0.0
    %v2985 = vmax.f32 %v2872, 0.0
    %v2986 = vmax.f32 %v2875, 0.0
    %v2987 = vmax.f32 %v2878, 0.0
    %v2988 = vmax.f32 %v2881, 0.0
    %v2989 = vmax.f32 %v2884, 0.0
    %v2990 = vmax.f32 %v2887, 0.0
    %v2991 = vmax.f32 %v2890, 0.0
    %v2992 = vmax.f32 %v2893, 0.0
    %v2993 = vmax.f32 %v2896, 0.0
    %v2994 = vmax.f32 %v2899, 0.0
    %v2995 = vmax.f32 %v2902, 0.0
    %v2996 = vmax.f32 %v2905, 0.0
    %v2997 = vmax.f32 %v2908, 0.0
    %v2998 = vmax.f32 %v2911, 0.0
    %v2999 = vmax.f32 %v2914, 0.0
    %v3000 = vmax.f32 %v2917, 0.0
    %v3001 = vmax.f32 %v2920, 0.0
    %v3002 = vmax.f32 %v2923, 0.0
    %v3003 = vmax.f32 %v2926, 0.0
    %v3004 = vmax.f32 %v2929, 0.0
    %v3005 = vmax.f32 %v2932, 0.0
    %v3006 = vmax.f32 %v2935, 0.0
    %v3007 = vmax.f32 %v2938, 0.0
    %v3008 = vmax.f32 %v2941, 0.0
    %v3009 = vmax.f32 %v2944, 0.0
    %v3010 = vld [vmem:[%s12] sm:$0xff]
    %v3011 = vld [vmem:[%s12 + $0x8] sm:$0xff]
    %v3012 = vld [vmem:[%s12 + $0x10] sm:$0xff]
    %v3013 = vld [vmem:[%s12 + $0x18] sm:$0xff]
    %v3014 = vld [vmem:[%s12 + $0x20] sm:$0xff]
    %v3015 = vld [vmem:[%s12 + $0x28] sm:$0xff]
    %v3016 = vld [vmem:[%s12 + $0x30] sm:$0xff]
    %v3017 = vld [vmem:[%s12 + $0x38] sm:$0xff]
    %v3018 = vld [vmem:[%s12 + $0x40] sm:$0xff]
    %v3019 = vld [vmem:[%s12 + $0x48] sm:$0xff]
    %v3020 = vld [vmem:[%s12 + $0x50] sm:$0xff]
    %v3021 = vld [vmem:[%s12 + $0x58] sm:$0xff]
    %v3022 = vld [vmem:[%s12 + $0x60] sm:$0xff]
    %v3023 = vld [vmem:[%s12 + $0x68] sm:$0xff]
    %v3024 = vld [vmem:[%s12 + $0x70] sm:$0xff]
    %v3025 = vld [vmem:[%s12 + $0x78] sm:$0xff]
    %v3026 = vld [vmem:[%s12 + $0x80] sm:$0xff]
    %v3027 = vld [vmem:[%s12 + $0x88] sm:$0xff]
    %v3028 = vld [vmem:[%s12 + $0x90] sm:$0xff]
    %v3029 = vld [vmem:[%s12 + $0x98] sm:$0xff]
    %v3030 = vld [vmem:[%s12 + $0xa0] sm:$0xff]
    %v3031 = vld [vmem:[%s12 + $0xa8] sm:$0xff]
    %v3032 = vld [vmem:[%s12 + $0xb0] sm:$0xff]
    %v3033 = vld [vmem:[%s12 + $0xb8] sm:$0xff]
    %v3034 = vld [vmem:[%s12 + $0xc0] sm:$0xff]
    %v3035 = vld [vmem:[%s12 + $0xc8] sm:$0xff]
    %v3036 = vld [vmem:[%s12 + $0xd0] sm:$0xff]
    %v3037 = vld [vmem:[%s12 + $0xd8] sm:$0xff]
    %v3038 = vld [vmem:[%s12 + $0xe0] sm:$0xff]
    %v3039 = vld [vmem:[%s12 + $0xe8] sm:$0xff]
    %v3040 = vld [vmem:[%s12 + $0xf0] sm:$0xff]
    %v3041 = vld [vmem:[%s12 + $0xf8] sm:$0xff]
    %v3042 = vld [vmem:[%s13] sm:$0x3]
    %v3044 = vperm.slane %v3042, 0
    %v3045 = vperm.slane %v3042, 1
    %3048 = vmatpush.msra.mxu0 %v3040
    %3049 = vmatpush.msra.mxu0 %v3038
    %3050 = vmatpush.msra.mxu0 %v3036
    %3051 = vmatpush.msra.mxu0 %v3034
    %3052 = vmatpush.msra.mxu0 %v3032
    %3053 = vmatpush.msra.mxu0 %v3030
    %3054 = vmatpush.msra.mxu0 %v3028
    %3055 = vmatpush.msra.mxu0 %v3026
    %3056 = vmatpush.msra.mxu0 %v3024
    %3057 = vmatpush.msra.mxu0 %v3022
    %3058 = vmatpush.msra.mxu0 %v3020
    %3059 = vmatpush.msra.mxu0 %v3018
    %3060 = vmatpush.msra.mxu0 %v3016
    %3061 = vmatpush.msra.mxu0 %v3014
    %3062 = vmatpush.msra.mxu0 %v3012
    %3063 = vmatpush.msra.mxu0 %v3010
    %3064 = vmatmul.f32.gmra.mxu0 %v2946
    %v3065 = vpop.f32.mrf.mxu0
    %v3066 = vadd.f32 %v3044, %v3065
    %3067 = vmatmul.f32.gmra.mxu0 %v2947
    %v3068 = vpop.f32.mrf.mxu0
    %v3069 = vadd.f32 %v3044, %v3068
    %3070 = vmatmul.f32.gmra.mxu0 %v2948
    %v3071 = vpop.f32.mrf.mxu0
    %v3072 = vadd.f32 %v3044, %v3071
    %3073 = vmatmul.f32.gmra.mxu0 %v2949
    %v3074 = vpop.f32.mrf.mxu0
    %v3075 = vadd.f32 %v3044, %v3074
    %3076 = vmatmul.f32.gmra.mxu0 %v2950
    %v3077 = vpop.f32.mrf.mxu0
    %v3078 = vadd.f32 %v3044, %v3077
    %3079 = vmatmul.f32.gmra.mxu0 %v2951
    %v3080 = vpop.f32.mrf.mxu0
    %v3081 = vadd.f32 %v3044, %v3080
    %3082 = vmatmul.f32.gmra.mxu0 %v2952
    %v3083 = vpop.f32.mrf.mxu0
    %v3084 = vadd.f32 %v3044, %v3083
    %3085 = vmatmul.f32.gmra.mxu0 %v2953
    %v3086 = vpop.f32.mrf.mxu0
    %v3087 = vadd.f32 %v3044, %v3086
    %3088 = vmatmul.f32.gmra.mxu0 %v2954
    %v3089 = vpop.f32.mrf.mxu0
    %v3090 = vadd.f32 %v3044, %v3089
    %3091 = vmatmul.f32.gmra.mxu0 %v2955
    %v3092 = vpop.f32.mrf.mxu0
    %v3093 = vadd.f32 %v3044, %v3092
    %3094 = vmatmul.f32.gmra.mxu0 %v2956
    %v3095 = vpop.f32.mrf.mxu0
    %v3096 = vadd.f32 %v3044, %v3095
    %3097 = vmatmul.f32.gmra.mxu0 %v2957
    %v3098 = vpop.f32.mrf.mxu0
    %v3099 = vadd.f32 %v3044, %v3098
    %3100 = vmatmul.f32.gmra.mxu0 %v2958
    %v3101 = vpop.f32.mrf.mxu0
    %v3102 = vadd.f32 %v3044, %v3101
    %3103 = vmatmul.f32.gmra.mxu0 %v2959
    %v3104 = vpop.f32.mrf.mxu0
    %v3105 = vadd.f32 %v3044, %v3104
    %3106 = vmatmul.f32.gmra.mxu0 %v2960
    %v3107 = vpop.f32.mrf.mxu0
    %v3108 = vadd.f32 %v3044, %v3107
    %3109 = vmatmul.f32.gmra.mxu0 %v2961
    %v3110 = vpop.f32.mrf.mxu0
    %v3111 = vadd.f32 %v3044, %v3110
    %3112 = vmatmul.f32.gmra.mxu0 %v2962
    %v3113 = vpop.f32.mrf.mxu0
    %v3114 = vadd.f32 %v3044, %v3113
    %3115 = vmatmul.f32.gmra.mxu0 %v2963
    %v3116 = vpop.f32.mrf.mxu0
    %v3117 = vadd.f32 %v3044, %v3116
    %3118 = vmatmul.f32.gmra.mxu0 %v2964
    %v3119 = vpop.f32.mrf.mxu0
    %v3120 = vadd.f32 %v3044, %v3119
    %3121 = vmatmul.f32.gmra.mxu0 %v2965
    %v3122 = vpop.f32.mrf.mxu0
    %v3123 = vadd.f32 %v3044, %v3122
    %3124 = vmatmul.f32.gmra.mxu0 %v2966
    %v3125 = vpop.f32.mrf.mxu0
    %v3126 = vadd.f32 %v3044, %v3125
    %3127 = vmatmul.f32.gmra.mxu0 %v2967
    %v3128 = vpop.f32.mrf.mxu0
    %v3129 = vadd.f32 %v3044, %v3128
    %3130 = vmatmul.f32.gmra.mxu0 %v2968
    %v3131 = vpop.f32.mrf.mxu0
    %v3132 = vadd.f32 %v3044, %v3131
    %3133 = vmatmul.f32.gmra.mxu0 %v2969
    %v3134 = vpop.f32.mrf.mxu0
    %v3135 = vadd.f32 %v3044, %v3134
    %3136 = vmatmul.f32.gmra.mxu0 %v2970
    %v3137 = vpop.f32.mrf.mxu0
    %v3138 = vadd.f32 %v3044, %v3137
    %3139 = vmatmul.f32.gmra.mxu0 %v2971
    %v3140 = vpop.f32.mrf.mxu0
    %v3141 = vadd.f32 %v3044, %v3140
    %3142 = vmatmul.f32.gmra.mxu0 %v2972
    %v3143 = vpop.f32.mrf.mxu0
    %v3144 = vadd.f32 %v3044, %v3143
    %3145 = vmatmul.f32.gmra.mxu0 %v2973
    %v3146 = vpop.f32.mrf.mxu0
    %v3147 = vadd.f32 %v3044, %v3146
    %3148 = vmatmul.f32.gmra.mxu0 %v2974
    %v3149 = vpop.f32.mrf.mxu0
    %v3150 = vadd.f32 %v3044, %v3149
    %3151 = vmatmul.f32.gmra.mxu0 %v2975
    %v3152 = vpop.f32.mrf.mxu0
    %v3153 = vadd.f32 %v3044, %v3152
    %3154 = vmatmul.f32.gmra.mxu0 %v2976
    %v3155 = vpop.f32.mrf.mxu0
    %v3156 = vadd.f32 %v3044, %v3155
    %3157 = vmatmul.f32.gmra.mxu0 %v2977
    %v3158 = vpop.f32.mrf.mxu0
    %v3159 = vadd.f32 %v3044, %v3158
    %3160 = vmatmul.f32.gmra.mxu0 %v2978
    %v3161 = vpop.f32.mrf.mxu0
    %v3162 = vadd.f32 %v3044, %v3161
    %3163 = vmatmul.f32.gmra.mxu0 %v2979
    %v3164 = vpop.f32.mrf.mxu0
    %v3165 = vadd.f32 %v3044, %v3164
    %3166 = vmatmul.f32.gmra.mxu0 %v2980
    %v3167 = vpop.f32.mrf.mxu0
    %v3168 = vadd.f32 %v3044, %v3167
    %3169 = vmatmul.f32.gmra.mxu0 %v2981
    %v3170 = vpop.f32.mrf.mxu0
    %v3171 = vadd.f32 %v3044, %v3170
    %3172 = vmatmul.f32.gmra.mxu0 %v2982
    %v3173 = vpop.f32.mrf.mxu0
    %v3174 = vadd.f32 %v3044, %v3173
    %3175 = vmatmul.f32.gmra.mxu0 %v2983
    %v3176 = vpop.f32.mrf.mxu0
    %v3177 = vadd.f32 %v3044, %v3176
    %3178 = vmatmul.f32.gmra.mxu0 %v2984
    %v3179 = vpop.f32.mrf.mxu0
    %v3180 = vadd.f32 %v3044, %v3179
    %3181 = vmatmul.f32.gmra.mxu0 %v2985
    %v3182 = vpop.f32.mrf.mxu0
    %v3183 = vadd.f32 %v3044, %v3182
    %3184 = vmatmul.f32.gmra.mxu0 %v2986
    %v3185 = vpop.f32.mrf.mxu0
    %v3186 = vadd.f32 %v3044, %v3185
    %3187 = vmatmul.f32.gmra.mxu0 %v2987
    %v3188 = vpop.f32.mrf.mxu0
    %v3189 = vadd.f32 %v3044, %v3188
    %3190 = vmatmul.f32.gmra.mxu0 %v2988
    %v3191 = vpop.f32.mrf.mxu0
    %v3192 = vadd.f32 %v3044, %v3191
    %3193 = vmatmul.f32.gmra.mxu0 %v2989
    %v3194 = vpop.f32.mrf.mxu0
    %v3195 = vadd.f32 %v3044, %v3194
    %3196 = vmatmul.f32.gmra.mxu0 %v2990
    %v3197 = vpop.f32.mrf.mxu0
    %v3198 = vadd.f32 %v3044, %v3197
    %3199 = vmatmul.f32.gmra.mxu0 %v2991
    %v3200 = vpop.f32.mrf.mxu0
    %v3201 = vadd.f32 %v3044, %v3200
    %3202 = vmatmul.f32.gmra.mxu0 %v2992
    %v3203 = vpop.f32.mrf.mxu0
    %v3204 = vadd.f32 %v3044, %v3203
    %3205 = vmatmul.f32.gmra.mxu0 %v2993
    %v3206 = vpop.f32.mrf.mxu0
    %v3207 = vadd.f32 %v3044, %v3206
    %3208 = vmatmul.f32.gmra.mxu0 %v2994
    %v3209 = vpop.f32.mrf.mxu0
    %v3210 = vadd.f32 %v3044, %v3209
    %3211 = vmatmul.f32.gmra.mxu0 %v2995
    %v3212 = vpop.f32.mrf.mxu0
    %v3213 = vadd.f32 %v3044, %v3212
    %3214 = vmatmul.f32.gmra.mxu0 %v2996
    %v3215 = vpop.f32.mrf.mxu0
    %v3216 = vadd.f32 %v3044, %v3215
    %3217 = vmatmul.f32.gmra.mxu0 %v2997
    %v3218 = vpop.f32.mrf.mxu0
    %v3219 = vadd.f32 %v3044, %v3218
    %3220 = vmatmul.f32.gmra.mxu0 %v2998
    %v3221 = vpop.f32.mrf.mxu0
    %v3222 = vadd.f32 %v3044, %v3221
    %3223 = vmatmul.f32.gmra.mxu0 %v2999
    %v3224 = vpop.f32.mrf.mxu0
    %v3225 = vadd.f32 %v3044, %v3224
    %3226 = vmatmul.f32.gmra.mxu0 %v3000
    %v3227 = vpop.f32.mrf.mxu0
    %v3228 = vadd.f32 %v3044, %v3227
    %3229 = vmatmul.f32.gmra.mxu0 %v3001
    %v3230 = vpop.f32.mrf.mxu0
    %v3231 = vadd.f32 %v3044, %v3230
    %3232 = vmatmul.f32.gmra.mxu0 %v3002
    %v3233 = vpop.f32.mrf.mxu0
    %v3234 = vadd.f32 %v3044, %v3233
    %3235 = vmatmul.f32.gmra.mxu0 %v3003
    %v3236 = vpop.f32.mrf.mxu0
    %v3237 = vadd.f32 %v3044, %v3236
    %3238 = vmatmul.f32.gmra.mxu0 %v3004
    %v3239 = vpop.f32.mrf.mxu0
    %v3240 = vadd.f32 %v3044, %v3239
    %3241 = vmatmul.f32.gmra.mxu0 %v3005
    %v3242 = vpop.f32.mrf.mxu0
    %v3243 = vadd.f32 %v3044, %v3242
    %3244 = vmatmul.f32.gmra.mxu0 %v3006
    %v3245 = vpop.f32.mrf.mxu0
    %v3246 = vadd.f32 %v3044, %v3245
    %3247 = vmatmul.f32.gmra.mxu0 %v3007
    %v3248 = vpop.f32.mrf.mxu0
    %v3249 = vadd.f32 %v3044, %v3248
    %3250 = vmatmul.f32.gmra.mxu0 %v3008
    %v3251 = vpop.f32.mrf.mxu0
    %v3252 = vadd.f32 %v3044, %v3251
    %3253 = vmatmul.f32.gmra.mxu0 %v3009
    %v3254 = vpop.f32.mrf.mxu0
    %v3255 = vadd.f32 %v3044, %v3254
    %3256 = vdwg.mxu0
    %3257 = vmatpush.msra.mxu0 %v3041
    %3258 = vmatpush.msra.mxu0 %v3039
    %3259 = vmatpush.msra.mxu0 %v3037
    %3260 = vmatpush.msra.mxu0 %v3035
    %3261 = vmatpush.msra.mxu0 %v3033
    %3262 = vmatpush.msra.mxu0 %v3031
    %3263 = vmatpush.msra.mxu0 %v3029
    %3264 = vmatpush.msra.mxu0 %v3027
    %3265 = vmatpush.msra.mxu0 %v3025
    %3266 = vmatpush.msra.mxu0 %v3023
    %3267 = vmatpush.msra.mxu0 %v3021
    %3268 = vmatpush.msra.mxu0 %v3019
    %3269 = vmatpush.msra.mxu0 %v3017
    %3270 = vmatpush.msra.mxu0 %v3015
    %3271 = vmatpush.msra.mxu0 %v3013
    %3272 = vmatpush.msra.mxu0 %v3011
    %3273 = vmatmul.f32.gmra.mxu0 %v2946
    %v3274 = vpop.f32.mrf.mxu0
    %v3275 = vadd.f32 %v3045, %v3274
    %3276 = vmatmul.f32.gmra.mxu0 %v2947
    %v3277 = vpop.f32.mrf.mxu0
    %v3278 = vadd.f32 %v3045, %v3277
    %3279 = vmatmul.f32.gmra.mxu0 %v2948
    %v3280 = vpop.f32.mrf.mxu0
    %v3281 = vadd.f32 %v3045, %v3280
    %3282 = vmatmul.f32.gmra.mxu0 %v2949
    %v3283 = vpop.f32.mrf.mxu0
    %v3284 = vadd.f32 %v3045, %v3283
    %3285 = vmatmul.f32.gmra.mxu0 %v2950
    %v3286 = vpop.f32.mrf.mxu0
    %v3287 = vadd.f32 %v3045, %v3286
    %3288 = vmatmul.f32.gmra.mxu0 %v2951
    %v3289 = vpop.f32.mrf.mxu0
    %v3290 = vadd.f32 %v3045, %v3289
    %3291 = vmatmul.f32.gmra.mxu0 %v2952
    %v3292 = vpop.f32.mrf.mxu0
    %v3293 = vadd.f32 %v3045, %v3292
    %3294 = vmatmul.f32.gmra.mxu0 %v2953
    %v3295 = vpop.f32.mrf.mxu0
    %v3296 = vadd.f32 %v3045, %v3295
    %3297 = vmatmul.f32.gmra.mxu0 %v2954
    %v3298 = vpop.f32.mrf.mxu0
    %v3299 = vadd.f32 %v3045, %v3298
    %3300 = vmatmul.f32.gmra.mxu0 %v2955
    %v3301 = vpop.f32.mrf.mxu0
    %v3302 = vadd.f32 %v3045, %v3301
    %3303 = vmatmul.f32.gmra.mxu0 %v2956
    %v3304 = vpop.f32.mrf.mxu0
    %v3305 = vadd.f32 %v3045, %v3304
    %3306 = vmatmul.f32.gmra.mxu0 %v2957
    %v3307 = vpop.f32.mrf.mxu0
    %v3308 = vadd.f32 %v3045, %v3307
    %3309 = vmatmul.f32.gmra.mxu0 %v2958
    %v3310 = vpop.f32.mrf.mxu0
    %v3311 = vadd.f32 %v3045, %v3310
    %3312 = vmatmul.f32.gmra.mxu0 %v2959
    %v3313 = vpop.f32.mrf.mxu0
    %v3314 = vadd.f32 %v3045, %v3313
    %3315 = vmatmul.f32.gmra.mxu0 %v2960
    %v3316 = vpop.f32.mrf.mxu0
    %v3317 = vadd.f32 %v3045, %v3316
    %3318 = vmatmul.f32.gmra.mxu0 %v2961
    %v3319 = vpop.f32.mrf.mxu0
    %v3320 = vadd.f32 %v3045, %v3319
    %3321 = vmatmul.f32.gmra.mxu0 %v2962
    %v3322 = vpop.f32.mrf.mxu0
    %v3323 = vadd.f32 %v3045, %v3322
    %3324 = vmatmul.f32.gmra.mxu0 %v2963
    %v3325 = vpop.f32.mrf.mxu0
    %v3326 = vadd.f32 %v3045, %v3325
    %3327 = vmatmul.f32.gmra.mxu0 %v2964
    %v3328 = vpop.f32.mrf.mxu0
    %v3329 = vadd.f32 %v3045, %v3328
    %3330 = vmatmul.f32.gmra.mxu0 %v2965
    %v3331 = vpop.f32.mrf.mxu0
    %v3332 = vadd.f32 %v3045, %v3331
    %3333 = vmatmul.f32.gmra.mxu0 %v2966
    %v3334 = vpop.f32.mrf.mxu0
    %v3335 = vadd.f32 %v3045, %v3334
    %3336 = vmatmul.f32.gmra.mxu0 %v2967
    %v3337 = vpop.f32.mrf.mxu0
    %v3338 = vadd.f32 %v3045, %v3337
    %3339 = vmatmul.f32.gmra.mxu0 %v2968
    %v3340 = vpop.f32.mrf.mxu0
    %v3341 = vadd.f32 %v3045, %v3340
    %3342 = vmatmul.f32.gmra.mxu0 %v2969
    %v3343 = vpop.f32.mrf.mxu0
    %v3344 = vadd.f32 %v3045, %v3343
    %3345 = vmatmul.f32.gmra.mxu0 %v2970
    %v3346 = vpop.f32.mrf.mxu0
    %v3347 = vadd.f32 %v3045, %v3346
    %3348 = vmatmul.f32.gmra.mxu0 %v2971
    %v3349 = vpop.f32.mrf.mxu0
    %v3350 = vadd.f32 %v3045, %v3349
    %3351 = vmatmul.f32.gmra.mxu0 %v2972
    %v3352 = vpop.f32.mrf.mxu0
    %v3353 = vadd.f32 %v3045, %v3352
    %3354 = vmatmul.f32.gmra.mxu0 %v2973
    %v3355 = vpop.f32.mrf.mxu0
    %v3356 = vadd.f32 %v3045, %v3355
    %3357 = vmatmul.f32.gmra.mxu0 %v2974
    %v3358 = vpop.f32.mrf.mxu0
    %v3359 = vadd.f32 %v3045, %v3358
    %3360 = vmatmul.f32.gmra.mxu0 %v2975
    %v3361 = vpop.f32.mrf.mxu0
    %v3362 = vadd.f32 %v3045, %v3361
    %3363 = vmatmul.f32.gmra.mxu0 %v2976
    %v3364 = vpop.f32.mrf.mxu0
    %v3365 = vadd.f32 %v3045, %v3364
    %3366 = vmatmul.f32.gmra.mxu0 %v2977
    %v3367 = vpop.f32.mrf.mxu0
    %v3368 = vadd.f32 %v3045, %v3367
    %3369 = vmatmul.f32.gmra.mxu0 %v2978
    %v3370 = vpop.f32.mrf.mxu0
    %v3371 = vadd.f32 %v3045, %v3370
    %3372 = vmatmul.f32.gmra.mxu0 %v2979
    %v3373 = vpop.f32.mrf.mxu0
    %v3374 = vadd.f32 %v3045, %v3373
    %3375 = vmatmul.f32.gmra.mxu0 %v2980
    %v3376 = vpop.f32.mrf.mxu0
    %v3377 = vadd.f32 %v3045, %v3376
    %3378 = vmatmul.f32.gmra.mxu0 %v2981
    %v3379 = vpop.f32.mrf.mxu0
    %v3380 = vadd.f32 %v3045, %v3379
    %3381 = vmatmul.f32.gmra.mxu0 %v2982
    %v3382 = vpop.f32.mrf.mxu0
    %v3383 = vadd.f32 %v3045, %v3382
    %3384 = vmatmul.f32.gmra.mxu0 %v2983
    %v3385 = vpop.f32.mrf.mxu0
    %v3386 = vadd.f32 %v3045, %v3385
    %3387 = vmatmul.f32.gmra.mxu0 %v2984
    %v3388 = vpop.f32.mrf.mxu0
    %v3389 = vadd.f32 %v3045, %v3388
    %3390 = vmatmul.f32.gmra.mxu0 %v2985
    %v3391 = vpop.f32.mrf.mxu0
    %v3392 = vadd.f32 %v3045, %v3391
    %3393 = vmatmul.f32.gmra.mxu0 %v2986
    %v3394 = vpop.f32.mrf.mxu0
    %v3395 = vadd.f32 %v3045, %v3394
    %3396 = vmatmul.f32.gmra.mxu0 %v2987
    %v3397 = vpop.f32.mrf.mxu0
    %v3398 = vadd.f32 %v3045, %v3397
    %3399 = vmatmul.f32.gmra.mxu0 %v2988
    %v3400 = vpop.f32.mrf.mxu0
    %v3401 = vadd.f32 %v3045, %v3400
    %3402 = vmatmul.f32.gmra.mxu0 %v2989
    %v3403 = vpop.f32.mrf.mxu0
    %v3404 = vadd.f32 %v3045, %v3403
    %3405 = vmatmul.f32.gmra.mxu0 %v2990
    %v3406 = vpop.f32.mrf.mxu0
    %v3407 = vadd.f32 %v3045, %v3406
    %3408 = vmatmul.f32.gmra.mxu0 %v2991
    %v3409 = vpop.f32.mrf.mxu0
    %v3410 = vadd.f32 %v3045, %v3409
    %3411 = vmatmul.f32.gmra.mxu0 %v2992
    %v3412 = vpop.f32.mrf.mxu0
    %v3413 = vadd.f32 %v3045, %v3412
    %3414 = vmatmul.f32.gmra.mxu0 %v2993
    %v3415 = vpop.f32.mrf.mxu0
    %v3416 = vadd.f32 %v3045, %v3415
    %3417 = vmatmul.f32.gmra.mxu0 %v2994
    %v3418 = vpop.f32.mrf.mxu0
    %v3419 = vadd.f32 %v3045, %v3418
    %3420 = vmatmul.f32.gmra.mxu0 %v2995
    %v3421 = vpop.f32.mrf.mxu0
    %v3422 = vadd.f32 %v3045, %v3421
    %3423 = vmatmul.f32.gmra.mxu0 %v2996
    %v3424 = vpop.f32.mrf.mxu0
    %v3425 = vadd.f32 %v3045, %v3424
    %3426 = vmatmul.f32.gmra.mxu0 %v2997
    %v3427 = vpop.f32.mrf.mxu0
    %v3428 = vadd.f32 %v3045, %v3427
    %3429 = vmatmul.f32.gmra.mxu0 %v2998
    %v3430 = vpop.f32.mrf.mxu0
    %v3431 = vadd.f32 %v3045, %v3430
    %3432 = vmatmul.f32.gmra.mxu0 %v2999
    %v3433 = vpop.f32.mrf.mxu0
    %v3434 = vadd.f32 %v3045, %v3433
    %3435 = vmatmul.f32.gmra.mxu0 %v3000
    %v3436 = vpop.f32.mrf.mxu0
    %v3437 = vadd.f32 %v3045, %v3436
    %3438 = vmatmul.f32.gmra.mxu0 %v3001
    %v3439 = vpop.f32.mrf.mxu0
    %v3440 = vadd.f32 %v3045, %v3439
    %3441 = vmatmul.f32.gmra.mxu0 %v3002
    %v3442 = vpop.f32.mrf.mxu0
    %v3443 = vadd.f32 %v3045, %v3442
    %3444 = vmatmul.f32.gmra.mxu0 %v3003
    %v3445 = vpop.f32.mrf.mxu0
    %v3446 = vadd.f32 %v3045, %v3445
    %3447 = vmatmul.f32.gmra.mxu0 %v3004
    %v3448 = vpop.f32.mrf.mxu0
    %v3449 = vadd.f32 %v3045, %v3448
    %3450 = vmatmul.f32.gmra.mxu0 %v3005
    %v3451 = vpop.f32.mrf.mxu0
    %v3452 = vadd.f32 %v3045, %v3451
    %3453 = vmatmul.f32.gmra.mxu0 %v3006
    %v3454 = vpop.f32.mrf.mxu0
    %v3455 = vadd.f32 %v3045, %v3454
    %3456 = vmatmul.f32.gmra.mxu0 %v3007
    %v3457 = vpop.f32.mrf.mxu0
    %v3458 = vadd.f32 %v3045, %v3457
    %3459 = vmatmul.f32.gmra.mxu0 %v3008
    %v3460 = vpop.f32.mrf.mxu0
    %v3461 = vadd.f32 %v3045, %v3460
    %3462 = vmatmul.f32.gmra.mxu0 %v3009
    %v3463 = vpop.f32.mrf.mxu0
    %v3464 = vadd.f32 %v3045, %v3463
    %3465 = vdwg.mxu0
    %v3466 = vxor.u32 %v3066, 2147483648
    %v3467 = vxor.u32 %v3275, 2147483648
    %v3468 = vxor.u32 %v3069, 2147483648
    %v3469 = vxor.u32 %v3278, 2147483648
    %v3470 = vxor.u32 %v3072, 2147483648
    %v3471 = vxor.u32 %v3281, 2147483648
    %v3472 = vxor.u32 %v3075, 2147483648
    %v3473 = vxor.u32 %v3284, 2147483648
    %v3474 = vxor.u32 %v3078, 2147483648
    %v3475 = vxor.u32 %v3287, 2147483648
    %v3476 = vxor.u32 %v3081, 2147483648
    %v3477 = vxor.u32 %v3290, 2147483648
    %v3478 = vxor.u32 %v3084, 2147483648
    %v3479 = vxor.u32 %v3293, 2147483648
    %v3480 = vxor.u32 %v3087, 2147483648
    %v3481 = vxor.u32 %v3296, 2147483648
    %v3482 = vxor.u32 %v3090, 2147483648
    %v3483 = vxor.u32 %v3299, 2147483648
    %v3484 = vxor.u32 %v3093, 2147483648
    %v3485 = vxor.u32 %v3302, 2147483648
    %v3486 = vxor.u32 %v3096, 2147483648
    %v3487 = vxor.u32 %v3305, 2147483648
    %v3488 = vxor.u32 %v3099, 2147483648
    %v3489 = vxor.u32 %v3308, 2147483648
    %v3490 = vxor.u32 %v3102, 2147483648
    %v3491 = vxor.u32 %v3311, 2147483648
    %v3492 = vxor.u32 %v3105, 2147483648
    %v3493 = vxor.u32 %v3314, 2147483648
    %v3494 = vxor.u32 %v3108, 2147483648
    %v3495 = vxor.u32 %v3317, 2147483648
    %v3496 = vxor.u32 %v3111, 2147483648
    %v3497 = vxor.u32 %v3320, 2147483648
    %v3498 = vxor.u32 %v3114, 2147483648
    %v3499 = vxor.u32 %v3323, 2147483648
    %v3500 = vxor.u32 %v3117, 2147483648
    %v3501 = vxor.u32 %v3326, 2147483648
    %v3502 = vxor.u32 %v3120, 2147483648
    %v3503 = vxor.u32 %v3329, 2147483648
    %v3504 = vxor.u32 %v3123, 2147483648
    %v3505 = vxor.u32 %v3332, 2147483648
    %v3506 = vxor.u32 %v3126, 2147483648
    %v3507 = vxor.u32 %v3335, 2147483648
    %v3508 = vxor.u32 %v3129, 2147483648
    %v3509 = vxor.u32 %v3338, 2147483648
    %v3510 = vxor.u32 %v3132, 2147483648
    %v3511 = vxor.u32 %v3341, 2147483648
    %v3512 = vxor.u32 %v3135, 2147483648
    %v3513 = vxor.u32 %v3344, 2147483648
    %v3514 = vxor.u32 %v3138, 2147483648
    %v3515 = vxor.u32 %v3347, 2147483648
    %v3516 = vxor.u32 %v3141, 2147483648
    %v3517 = vxor.u32 %v3350, 2147483648
    %v3518 = vxor.u32 %v3144, 2147483648
    %v3519 = vxor.u32 %v3353, 2147483648
    %v3520 = vxor.u32 %v3147, 2147483648
    %v3521 = vxor.u32 %v3356, 2147483648
    %v3522 = vxor.u32 %v3150, 2147483648
    %v3523 = vxor.u32 %v3359, 2147483648
    %v3524 = vxor.u32 %v3153, 2147483648
    %v3525 = vxor.u32 %v3362, 2147483648
    %v3526 = vxor.u32 %v3156, 2147483648
    %v3527 = vxor.u32 %v3365, 2147483648
    %v3528 = vxor.u32 %v3159, 2147483648
    %v3529 = vxor.u32 %v3368, 2147483648
    %v3530 = vxor.u32 %v3162, 2147483648
    %v3531 = vxor.u32 %v3371, 2147483648
    %v3532 = vxor.u32 %v3165, 2147483648
    %v3533 = vxor.u32 %v3374, 2147483648
    %v3534 = vxor.u32 %v3168, 2147483648
    %v3535 = vxor.u32 %v3377, 2147483648
    %v3536 = vxor.u32 %v3171, 2147483648
    %v3537 = vxor.u32 %v3380, 2147483648
    %v3538 = vxor.u32 %v3174, 2147483648
    %v3539 = vxor.u32 %v3383, 2147483648
    %v3540 = vxor.u32 %v3177, 2147483648
    %v3541 = vxor.u32 %v3386, 2147483648
    %v3542 = vxor.u32 %v3180, 2147483648
    %v3543 = vxor.u32 %v3389, 2147483648
    %v3544 = vxor.u32 %v3183, 2147483648
    %v3545 = vxor.u32 %v3392, 2147483648
    %v3546 = vxor.u32 %v3186, 2147483648
    %v3547 = vxor.u32 %v3395, 2147483648
    %v3548 = vxor.u32 %v3189, 2147483648
    %v3549 = vxor.u32 %v3398, 2147483648
    %v3550 = vxor.u32 %v3192, 2147483648
    %v3551 = vxor.u32 %v3401, 2147483648
    %v3552 = vxor.u32 %v3195, 2147483648
    %v3553 = vxor.u32 %v3404, 2147483648
    %v3554 = vxor.u32 %v3198, 2147483648
    %v3555 = vxor.u32 %v3407, 2147483648
    %v3556 = vxor.u32 %v3201, 2147483648
    %v3557 = vxor.u32 %v3410, 2147483648
    %v3558 = vxor.u32 %v3204, 2147483648
    %v3559 = vxor.u32 %v3413, 2147483648
    %v3560 = vxor.u32 %v3207, 2147483648
    %v3561 = vxor.u32 %v3416, 2147483648
    %v3562 = vxor.u32 %v3210, 2147483648
    %v3563 = vxor.u32 %v3419, 2147483648
    %v3564 = vxor.u32 %v3213, 2147483648
    %v3565 = vxor.u32 %v3422, 2147483648
    %v3566 = vxor.u32 %v3216, 2147483648
    %v3567 = vxor.u32 %v3425, 2147483648
    %v3568 = vxor.u32 %v3219, 2147483648
    %v3569 = vxor.u32 %v3428, 2147483648
    %v3570 = vxor.u32 %v3222, 2147483648
    %v3571 = vxor.u32 %v3431, 2147483648
    %v3572 = vxor.u32 %v3225, 2147483648
    %v3573 = vxor.u32 %v3434, 2147483648
    %v3574 = vxor.u32 %v3228, 2147483648
    %v3575 = vxor.u32 %v3437, 2147483648
    %v3576 = vxor.u32 %v3231, 2147483648
    %v3577 = vxor.u32 %v3440, 2147483648
    %v3578 = vxor.u32 %v3234, 2147483648
    %v3579 = vxor.u32 %v3443, 2147483648
    %v3580 = vxor.u32 %v3237, 2147483648
    %v3581 = vxor.u32 %v3446, 2147483648
    %v3582 = vxor.u32 %v3240, 2147483648
    %v3583 = vxor.u32 %v3449, 2147483648
    %v3584 = vxor.u32 %v3243, 2147483648
    %v3585 = vxor.u32 %v3452, 2147483648
    %v3586 = vxor.u32 %v3246, 2147483648
    %v3587 = vxor.u32 %v3455, 2147483648
    %v3588 = vxor.u32 %v3249, 2147483648
    %v3589 = vxor.u32 %v3458, 2147483648
    %v3590 = vxor.u32 %v3252, 2147483648
    %v3591 = vxor.u32 %v3461, 2147483648
    %v3592 = vxor.u32 %v3255, 2147483648
    %v3593 = vxor.u32 %v3464, 2147483648
    %v3594 = vmul.f32 %v3466, 1.442695
    %v3595 = vpow.pop %v3594
    %v3596 = vmul.f32 %v3467, 1.442695
    %v3597 = vpow.pop %v3596
    %v3598 = vmul.f32 %v3468, 1.442695
    %v3599 = vpow.pop %v3598
    %v3600 = vmul.f32 %v3469, 1.442695
    %v3601 = vpow.pop %v3600
    %v3602 = vmul.f32 %v3470, 1.442695
    %v3603 = vpow.pop %v3602
    %v3604 = vmul.f32 %v3471, 1.442695
    %v3605 = vpow.pop %v3604
    %v3606 = vmul.f32 %v3472, 1.442695
    %v3607 = vpow.pop %v3606
    %v3608 = vmul.f32 %v3473, 1.442695
    %v3609 = vpow.pop %v3608
    %v3610 = vmul.f32 %v3474, 1.442695
    %v3611 = vpow.pop %v3610
    %v3612 = vmul.f32 %v3475, 1.442695
    %v3613 = vpow.pop %v3612
    %v3614 = vmul.f32 %v3476, 1.442695
    %v3615 = vpow.pop %v3614
    %v3616 = vmul.f32 %v3477, 1.442695
    %v3617 = vpow.pop %v3616
    %v3618 = vmul.f32 %v3478, 1.442695
    %v3619 = vpow.pop %v3618
    %v3620 = vmul.f32 %v3479, 1.442695
    %v3621 = vpow.pop %v3620
    %v3622 = vmul.f32 %v3480, 1.442695
    %v3623 = vpow.pop %v3622
    %v3624 = vmul.f32 %v3481, 1.442695
    %v3625 = vpow.pop %v3624
    %v3626 = vmul.f32 %v3482, 1.442695
    %v3627 = vpow.pop %v3626
    %v3628 = vmul.f32 %v3483, 1.442695
    %v3629 = vpow.pop %v3628
    %v3630 = vmul.f32 %v3484, 1.442695
    %v3631 = vpow.pop %v3630
    %v3632 = vmul.f32 %v3485, 1.442695
    %v3633 = vpow.pop %v3632
    %v3634 = vmul.f32 %v3486, 1.442695
    %v3635 = vpow.pop %v3634
    %v3636 = vmul.f32 %v3487, 1.442695
    %v3637 = vpow.pop %v3636
    %v3638 = vmul.f32 %v3488, 1.442695
    %v3639 = vpow.pop %v3638
    %v3640 = vmul.f32 %v3489, 1.442695
    %v3641 = vpow.pop %v3640
    %v3642 = vmul.f32 %v3490, 1.442695
    %v3643 = vpow.pop %v3642
    %v3644 = vmul.f32 %v3491, 1.442695
    %v3645 = vpow.pop %v3644
    %v3646 = vmul.f32 %v3492, 1.442695
    %v3647 = vpow.pop %v3646
    %v3648 = vmul.f32 %v3493, 1.442695
    %v3649 = vpow.pop %v3648
    %v3650 = vmul.f32 %v3494, 1.442695
    %v3651 = vpow.pop %v3650
    %v3652 = vmul.f32 %v3495, 1.442695
    %v3653 = vpow.pop %v3652
    %v3654 = vmul.f32 %v3496, 1.442695
    %v3655 = vpow.pop %v3654
    %v3656 = vmul.f32 %v3497, 1.442695
    %v3657 = vpow.pop %v3656
    %v3658 = vmul.f32 %v3498, 1.442695
    %v3659 = vpow.pop %v3658
    %v3660 = vmul.f32 %v3499, 1.442695
    %v3661 = vpow.pop %v3660
    %v3662 = vmul.f32 %v3500, 1.442695
    %v3663 = vpow.pop %v3662
    %v3664 = vmul.f32 %v3501, 1.442695
    %v3665 = vpow.pop %v3664
    %v3666 = vmul.f32 %v3502, 1.442695
    %v3667 = vpow.pop %v3666
    %v3668 = vmul.f32 %v3503, 1.442695
    %v3669 = vpow.pop %v3668
    %v3670 = vmul.f32 %v3504, 1.442695
    %v3671 = vpow.pop %v3670
    %v3672 = vmul.f32 %v3505, 1.442695
    %v3673 = vpow.pop %v3672
    %v3674 = vmul.f32 %v3506, 1.442695
    %v3675 = vpow.pop %v3674
    %v3676 = vmul.f32 %v3507, 1.442695
    %v3677 = vpow.pop %v3676
    %v3678 = vmul.f32 %v3508, 1.442695
    %v3679 = vpow.pop %v3678
    %v3680 = vmul.f32 %v3509, 1.442695
    %v3681 = vpow.pop %v3680
    %v3682 = vmul.f32 %v3510, 1.442695
    %v3683 = vpow.pop %v3682
    %v3684 = vmul.f32 %v3511, 1.442695
    %v3685 = vpow.pop %v3684
    %v3686 = vmul.f32 %v3512, 1.442695
    %v3687 = vpow.pop %v3686
    %v3688 = vmul.f32 %v3513, 1.442695
    %v3689 = vpow.pop %v3688
    %v3690 = vmul.f32 %v3514, 1.442695
    %v3691 = vpow.pop %v3690
    %v3692 = vmul.f32 %v3515, 1.442695
    %v3693 = vpow.pop %v3692
    %v3694 = vmul.f32 %v3516, 1.442695
    %v3695 = vpow.pop %v3694
    %v3696 = vmul.f32 %v3517, 1.442695
    %v3697 = vpow.pop %v3696
    %v3698 = vmul.f32 %v3518, 1.442695
    %v3699 = vpow.pop %v3698
    %v3700 = vmul.f32 %v3519, 1.442695
    %v3701 = vpow.pop %v3700
    %v3702 = vmul.f32 %v3520, 1.442695
    %v3703 = vpow.pop %v3702
    %v3704 = vmul.f32 %v3521, 1.442695
    %v3705 = vpow.pop %v3704
    %v3706 = vmul.f32 %v3522, 1.442695
    %v3707 = vpow.pop %v3706
    %v3708 = vmul.f32 %v3523, 1.442695
    %v3709 = vpow.pop %v3708
    %v3710 = vmul.f32 %v3524, 1.442695
    %v3711 = vpow.pop %v3710
    %v3712 = vmul.f32 %v3525, 1.442695
    %v3713 = vpow.pop %v3712
    %v3714 = vmul.f32 %v3526, 1.442695
    %v3715 = vpow.pop %v3714
    %v3716 = vmul.f32 %v3527, 1.442695
    %v3717 = vpow.pop %v3716
    %v3718 = vmul.f32 %v3528, 1.442695
    %v3719 = vpow.pop %v3718
    %v3720 = vmul.f32 %v3529, 1.442695
    %v3721 = vpow.pop %v3720
    %v3722 = vmul.f32 %v3530, 1.442695
    %v3723 = vpow.pop %v3722
    %v3724 = vmul.f32 %v3531, 1.442695
    %v3725 = vpow.pop %v3724
    %v3726 = vmul.f32 %v3532, 1.442695
    %v3727 = vpow.pop %v3726
    %v3728 = vmul.f32 %v3533, 1.442695
    %v3729 = vpow.pop %v3728
    %v3730 = vmul.f32 %v3534, 1.442695
    %v3731 = vpow.pop %v3730
    %v3732 = vmul.f32 %v3535, 1.442695
    %v3733 = vpow.pop %v3732
    %v3734 = vmul.f32 %v3536, 1.442695
    %v3735 = vpow.pop %v3734
    %v3736 = vmul.f32 %v3537, 1.442695
    %v3737 = vpow.pop %v3736
    %v3738 = vmul.f32 %v3538, 1.442695
    %v3739 = vpow.pop %v3738
    %v3740 = vmul.f32 %v3539, 1.442695
    %v3741 = vpow.pop %v3740
    %v3742 = vmul.f32 %v3540, 1.442695
    %v3743 = vpow.pop %v3742
    %v3744 = vmul.f32 %v3541, 1.442695
    %v3745 = vpow.pop %v3744
    %v3746 = vmul.f32 %v3542, 1.442695
    %v3747 = vpow.pop %v3746
    %v3748 = vmul.f32 %v3543, 1.442695
    %v3749 = vpow.pop %v3748
    %v3750 = vmul.f32 %v3544, 1.442695
    %v3751 = vpow.pop %v3750
    %v3752 = vmul.f32 %v3545, 1.442695
    %v3753 = vpow.pop %v3752
    %v3754 = vmul.f32 %v3546, 1.442695
    %v3755 = vpow.pop %v3754
    %v3756 = vmul.f32 %v3547, 1.442695
    %v3757 = vpow.pop %v3756
    %v3758 = vmul.f32 %v3548, 1.442695
    %v3759 = vpow.pop %v3758
    %v3760 = vmul.f32 %v3549, 1.442695
    %v3761 = vpow.pop %v3760
    %v3762 = vmul.f32 %v3550, 1.442695
    %v3763 = vpow.pop %v3762
    %v3764 = vmul.f32 %v3551, 1.442695
    %v3765 = vpow.pop %v3764
    %v3766 = vmul.f32 %v3552, 1.442695
    %v3767 = vpow.pop %v3766
    %v3768 = vmul.f32 %v3553, 1.442695
    %v3769 = vpow.pop %v3768
    %v3770 = vmul.f32 %v3554, 1.442695
    %v3771 = vpow.pop %v3770
    %v3772 = vmul.f32 %v3555, 1.442695
    %v3773 = vpow.pop %v3772
    %v3774 = vmul.f32 %v3556, 1.442695
    %v3775 = vpow.pop %v3774
    %v3776 = vmul.f32 %v3557, 1.442695
    %v3777 = vpow.pop %v3776
    %v3778 = vmul.f32 %v3558, 1.442695
    %v3779 = vpow.pop %v3778
    %v3780 = vmul.f32 %v3559, 1.442695
    %v3781 = vpow.pop %v3780
    %v3782 = vmul.f32 %v3560, 1.442695
    %v3783 = vpow.pop %v3782
    %v3784 = vmul.f32 %v3561, 1.442695
    %v3785 = vpow.pop %v3784
    %v3786 = vmul.f32 %v3562, 1.442695
    %v3787 = vpow.pop %v3786
    %v3788 = vmul.f32 %v3563, 1.442695
    %v3789 = vpow.pop %v3788
    %v3790 = vmul.f32 %v3564, 1.442695
    %v3791 = vpow.pop %v3790
    %v3792 = vmul.f32 %v3565, 1.442695
    %v3793 = vpow.pop %v3792
    %v3794 = vmul.f32 %v3566, 1.442695
    %v3795 = vpow.pop %v3794
    %v3796 = vmul.f32 %v3567, 1.442695
    %v3797 = vpow.pop %v3796
    %v3798 = vmul.f32 %v3568, 1.442695
    %v3799 = vpow.pop %v3798
    %v3800 = vmul.f32 %v3569, 1.442695
    %v3801 = vpow.pop %v3800
    %v3802 = vmul.f32 %v3570, 1.442695
    %v3803 = vpow.pop %v3802
    %v3804 = vmul.f32 %v3571, 1.442695
    %v3805 = vpow.pop %v3804
    %v3806 = vmul.f32 %v3572, 1.442695
    %v3807 = vpow.pop %v3806
    %v3808 = vmul.f32 %v3573, 1.442695
    %v3809 = vpow.pop %v3808
    %v3810 = vmul.f32 %v3574, 1.442695
    %v3811 = vpow.pop %v3810
    %v3812 = vmul.f32 %v3575, 1.442695
    %v3813 = vpow.pop %v3812
    %v3814 = vmul.f32 %v3576, 1.442695
    %v3815 = vpow.pop %v3814
    %v3816 = vmul.f32 %v3577, 1.442695
    %v3817 = vpow.pop %v3816
    %v3818 = vmul.f32 %v3578, 1.442695
    %v3819 = vpow.pop %v3818
    %v3820 = vmul.f32 %v3579, 1.442695
    %v3821 = vpow.pop %v3820
    %v3822 = vmul.f32 %v3580, 1.442695
    %v3823 = vpow.pop %v3822
    %v3824 = vmul.f32 %v3581, 1.442695
    %v3825 = vpow.pop %v3824
    %v3826 = vmul.f32 %v3582, 1.442695
    %v3827 = vpow.pop %v3826
    %v3828 = vmul.f32 %v3583, 1.442695
    %v3829 = vpow.pop %v3828
    %v3830 = vmul.f32 %v3584, 1.442695
    %v3831 = vpow.pop %v3830
    %v3832 = vmul.f32 %v3585, 1.442695
    %v3833 = vpow.pop %v3832
    %v3834 = vmul.f32 %v3586, 1.442695
    %v3835 = vpow.pop %v3834
    %v3836 = vmul.f32 %v3587, 1.442695
    %v3837 = vpow.pop %v3836
    %v3838 = vmul.f32 %v3588, 1.442695
    %v3839 = vpow.pop %v3838
    %v3840 = vmul.f32 %v3589, 1.442695
    %v3841 = vpow.pop %v3840
    %v3842 = vmul.f32 %v3590, 1.442695
    %v3843 = vpow.pop %v3842
    %v3844 = vmul.f32 %v3591, 1.442695
    %v3845 = vpow.pop %v3844
    %v3846 = vmul.f32 %v3592, 1.442695
    %v3847 = vpow.pop %v3846
    %v3848 = vmul.f32 %v3593, 1.442695
    %v3849 = vpow.pop %v3848
    %v3850 = vadd.f32 %v3595, 1.0
    %v3851 = vadd.f32 %v3597, 1.0
    %v3852 = vadd.f32 %v3599, 1.0
    %v3853 = vadd.f32 %v3601, 1.0
    %v3854 = vadd.f32 %v3603, 1.0
    %v3855 = vadd.f32 %v3605, 1.0
    %v3856 = vadd.f32 %v3607, 1.0
    %v3857 = vadd.f32 %v3609, 1.0
    %v3858 = vadd.f32 %v3611, 1.0
    %v3859 = vadd.f32 %v3613, 1.0
    %v3860 = vadd.f32 %v3615, 1.0
    %v3861 = vadd.f32 %v3617, 1.0
    %v3862 = vadd.f32 %v3619, 1.0
    %v3863 = vadd.f32 %v3621, 1.0
    %v3864 = vadd.f32 %v3623, 1.0
    %v3865 = vadd.f32 %v3625, 1.0
    %v3866 = vadd.f32 %v3627, 1.0
    %v3867 = vadd.f32 %v3629, 1.0
    %v3868 = vadd.f32 %v3631, 1.0
    %v3869 = vadd.f32 %v3633, 1.0
    %v3870 = vadd.f32 %v3635, 1.0
    %v3871 = vadd.f32 %v3637, 1.0
    %v3872 = vadd.f32 %v3639, 1.0
    %v3873 = vadd.f32 %v3641, 1.0
    %v3874 = vadd.f32 %v3643, 1.0
    %v3875 = vadd.f32 %v3645, 1.0
    %v3876 = vadd.f32 %v3647, 1.0
    %v3877 = vadd.f32 %v3649, 1.0
    %v3878 = vadd.f32 %v3651, 1.0
    %v3879 = vadd.f32 %v3653, 1.0
    %v3880 = vadd.f32 %v3655, 1.0
    %v3881 = vadd.f32 %v3657, 1.0
    %v3882 = vadd.f32 %v3659, 1.0
    %v3883 = vadd.f32 %v3661, 1.0
    %v3884 = vadd.f32 %v3663, 1.0
    %v3885 = vadd.f32 %v3665, 1.0
    %v3886 = vadd.f32 %v3667, 1.0
    %v3887 = vadd.f32 %v3669, 1.0
    %v3888 = vadd.f32 %v3671, 1.0
    %v3889 = vadd.f32 %v3673, 1.0
    %v3890 = vadd.f32 %v3675, 1.0
    %v3891 = vadd.f32 %v3677, 1.0
    %v3892 = vadd.f32 %v3679, 1.0
    %v3893 = vadd.f32 %v3681, 1.0
    %v3894 = vadd.f32 %v3683, 1.0
    %v3895 = vadd.f32 %v3685, 1.0
    %v3896 = vadd.f32 %v3687, 1.0
    %v3897 = vadd.f32 %v3689, 1.0
    %v3898 = vadd.f32 %v3691, 1.0
    %v3899 = vadd.f32 %v3693, 1.0
    %v3900 = vadd.f32 %v3695, 1.0
    %v3901 = vadd.f32 %v3697, 1.0
    %v3902 = vadd.f32 %v3699, 1.0
    %v3903 = vadd.f32 %v3701, 1.0
    %v3904 = vadd.f32 %v3703, 1.0
    %v3905 = vadd.f32 %v3705, 1.0
    %v3906 = vadd.f32 %v3707, 1.0
    %v3907 = vadd.f32 %v3709, 1.0
    %v3908 = vadd.f32 %v3711, 1.0
    %v3909 = vadd.f32 %v3713, 1.0
    %v3910 = vadd.f32 %v3715, 1.0
    %v3911 = vadd.f32 %v3717, 1.0
    %v3912 = vadd.f32 %v3719, 1.0
    %v3913 = vadd.f32 %v3721, 1.0
    %v3914 = vadd.f32 %v3723, 1.0
    %v3915 = vadd.f32 %v3725, 1.0
    %v3916 = vadd.f32 %v3727, 1.0
    %v3917 = vadd.f32 %v3729, 1.0
    %v3918 = vadd.f32 %v3731, 1.0
    %v3919 = vadd.f32 %v3733, 1.0
    %v3920 = vadd.f32 %v3735, 1.0
    %v3921 = vadd.f32 %v3737, 1.0
    %v3922 = vadd.f32 %v3739, 1.0
    %v3923 = vadd.f32 %v3741, 1.0
    %v3924 = vadd.f32 %v3743, 1.0
    %v3925 = vadd.f32 %v3745, 1.0
    %v3926 = vadd.f32 %v3747, 1.0
    %v3927 = vadd.f32 %v3749, 1.0
    %v3928 = vadd.f32 %v3751, 1.0
    %v3929 = vadd.f32 %v3753, 1.0
    %v3930 = vadd.f32 %v3755, 1.0
    %v3931 = vadd.f32 %v3757, 1.0
    %v3932 = vadd.f32 %v3759, 1.0
    %v3933 = vadd.f32 %v3761, 1.0
    %v3934 = vadd.f32 %v3763, 1.0
    %v3935 = vadd.f32 %v3765, 1.0
    %v3936 = vadd.f32 %v3767, 1.0
    %v3937 = vadd.f32 %v3769, 1.0
    %v3938 = vadd.f32 %v3771, 1.0
    %v3939 = vadd.f32 %v3773, 1.0
    %v3940 = vadd.f32 %v3775, 1.0
    %v3941 = vadd.f32 %v3777, 1.0
    %v3942 = vadd.f32 %v3779, 1.0
    %v3943 = vadd.f32 %v3781, 1.0
    %v3944 = vadd.f32 %v3783, 1.0
    %v3945 = vadd.f32 %v3785, 1.0
    %v3946 = vadd.f32 %v3787, 1.0
    %v3947 = vadd.f32 %v3789, 1.0
    %v3948 = vadd.f32 %v3791, 1.0
    %v3949 = vadd.f32 %v3793, 1.0
    %v3950 = vadd.f32 %v3795, 1.0
    %v3951 = vadd.f32 %v3797, 1.0
    %v3952 = vadd.f32 %v3799, 1.0
    %v3953 = vadd.f32 %v3801, 1.0
    %v3954 = vadd.f32 %v3803, 1.0
    %v3955 = vadd.f32 %v3805, 1.0
    %v3956 = vadd.f32 %v3807, 1.0
    %v3957 = vadd.f32 %v3809, 1.0
    %v3958 = vadd.f32 %v3811, 1.0
    %v3959 = vadd.f32 %v3813, 1.0
    %v3960 = vadd.f32 %v3815, 1.0
    %v3961 = vadd.f32 %v3817, 1.0
    %v3962 = vadd.f32 %v3819, 1.0
    %v3963 = vadd.f32 %v3821, 1.0
    %v3964 = vadd.f32 %v3823, 1.0
    %v3965 = vadd.f32 %v3825, 1.0
    %v3966 = vadd.f32 %v3827, 1.0
    %v3967 = vadd.f32 %v3829, 1.0
    %v3968 = vadd.f32 %v3831, 1.0
    %v3969 = vadd.f32 %v3833, 1.0
    %v3970 = vadd.f32 %v3835, 1.0
    %v3971 = vadd.f32 %v3837, 1.0
    %v3972 = vadd.f32 %v3839, 1.0
    %v3973 = vadd.f32 %v3841, 1.0
    %v3974 = vadd.f32 %v3843, 1.0
    %v3975 = vadd.f32 %v3845, 1.0
    %v3976 = vadd.f32 %v3847, 1.0
    %v3977 = vadd.f32 %v3849, 1.0
    %v3978 = vrcp.pop %v3850
    %v3979 = vmul.f32 %v3850, %v3978
    %v3980 = vsub.f32 1.0, %v3979
    %v3981 = vmul.f32 %v3978, %v3980
    %v3982 = vadd.f32 %v3978, %v3981
    %vm3983 = vweird.f32 %v3850
    %vm3984 = vweird.f32 %v3978
    %vm3985 = vmor %vm3983, %vm3984
    %v3986 = vsel %vm3985, %v3978, %v3982
    %v3987 = vand.u32 2147483647, %v3850
    %vm3988 = vcmp.eq.f32.partialorder %v3987, 8.507059e+37
    %v3989 = vand.u32 %v3850, 2147483648
    %v3990 = vor.u32 1.1754944e-38, %v3989
    %v3991 = vsel %vm3988, %v3990, %v3986
    %v3992 = vmul.f32 1.0, %v3991
    %v3993 = vrcp.pop %v3851
    %v3994 = vmul.f32 %v3851, %v3993
    %v3995 = vsub.f32 1.0, %v3994
    %v3996 = vmul.f32 %v3993, %v3995
    %v3997 = vadd.f32 %v3993, %v3996
    %vm3998 = vweird.f32 %v3851
    %vm3999 = vweird.f32 %v3993
    %vm4000 = vmor %vm3998, %vm3999
    %v4001 = vsel %vm4000, %v3993, %v3997
    %v4002 = vand.u32 2147483647, %v3851
    %vm4003 = vcmp.eq.f32.partialorder %v4002, 8.507059e+37
    %v4004 = vand.u32 %v3851, 2147483648
    %v4005 = vor.u32 1.1754944e-38, %v4004
    %v4006 = vsel %vm4003, %v4005, %v4001
    %v4007 = vmul.f32 1.0, %v4006
    %v4008 = vrcp.pop %v3852
    %v4009 = vmul.f32 %v3852, %v4008
    %v4010 = vsub.f32 1.0, %v4009
    %v4011 = vmul.f32 %v4008, %v4010
    %v4012 = vadd.f32 %v4008, %v4011
    %vm4013 = vweird.f32 %v3852
    %vm4014 = vweird.f32 %v4008
    %vm4015 = vmor %vm4013, %vm4014
    %v4016 = vsel %vm4015, %v4008, %v4012
    %v4017 = vand.u32 2147483647, %v3852
    %vm4018 = vcmp.eq.f32.partialorder %v4017, 8.507059e+37
    %v4019 = vand.u32 %v3852, 2147483648
    %v4020 = vor.u32 1.1754944e-38, %v4019
    %v4021 = vsel %vm4018, %v4020, %v4016
    %v4022 = vmul.f32 1.0, %v4021
    %v4023 = vrcp.pop %v3853
    %v4024 = vmul.f32 %v3853, %v4023
    %v4025 = vsub.f32 1.0, %v4024
    %v4026 = vmul.f32 %v4023, %v4025
    %v4027 = vadd.f32 %v4023, %v4026
    %vm4028 = vweird.f32 %v3853
    %vm4029 = vweird.f32 %v4023
    %vm4030 = vmor %vm4028, %vm4029
    %v4031 = vsel %vm4030, %v4023, %v4027
    %v4032 = vand.u32 2147483647, %v3853
    %vm4033 = vcmp.eq.f32.partialorder %v4032, 8.507059e+37
    %v4034 = vand.u32 %v3853, 2147483648
    %v4035 = vor.u32 1.1754944e-38, %v4034
    %v4036 = vsel %vm4033, %v4035, %v4031
    %v4037 = vmul.f32 1.0, %v4036
    %v4038 = vrcp.pop %v3854
    %v4039 = vmul.f32 %v3854, %v4038
    %v4040 = vsub.f32 1.0, %v4039
    %v4041 = vmul.f32 %v4038, %v4040
    %v4042 = vadd.f32 %v4038, %v4041
    %vm4043 = vweird.f32 %v3854
    %vm4044 = vweird.f32 %v4038
    %vm4045 = vmor %vm4043, %vm4044
    %v4046 = vsel %vm4045, %v4038, %v4042
    %v4047 = vand.u32 2147483647, %v3854
    %vm4048 = vcmp.eq.f32.partialorder %v4047, 8.507059e+37
    %v4049 = vand.u32 %v3854, 2147483648
    %v4050 = vor.u32 1.1754944e-38, %v4049
    %v4051 = vsel %vm4048, %v4050, %v4046
    %v4052 = vmul.f32 1.0, %v4051
    %v4053 = vrcp.pop %v3855
    %v4054 = vmul.f32 %v3855, %v4053
    %v4055 = vsub.f32 1.0, %v4054
    %v4056 = vmul.f32 %v4053, %v4055
    %v4057 = vadd.f32 %v4053, %v4056
    %vm4058 = vweird.f32 %v3855
    %vm4059 = vweird.f32 %v4053
    %vm4060 = vmor %vm4058, %vm4059
    %v4061 = vsel %vm4060, %v4053, %v4057
    %v4062 = vand.u32 2147483647, %v3855
    %vm4063 = vcmp.eq.f32.partialorder %v4062, 8.507059e+37
    %v4064 = vand.u32 %v3855, 2147483648
    %v4065 = vor.u32 1.1754944e-38, %v4064
    %v4066 = vsel %vm4063, %v4065, %v4061
    %v4067 = vmul.f32 1.0, %v4066
    %v4068 = vrcp.pop %v3856
    %v4069 = vmul.f32 %v3856, %v4068
    %v4070 = vsub.f32 1.0, %v4069
    %v4071 = vmul.f32 %v4068, %v4070
    %v4072 = vadd.f32 %v4068, %v4071
    %vm4073 = vweird.f32 %v3856
    %vm4074 = vweird.f32 %v4068
    %vm4075 = vmor %vm4073, %vm4074
    %v4076 = vsel %vm4075, %v4068, %v4072
    %v4077 = vand.u32 2147483647, %v3856
    %vm4078 = vcmp.eq.f32.partialorder %v4077, 8.507059e+37
    %v4079 = vand.u32 %v3856, 2147483648
    %v4080 = vor.u32 1.1754944e-38, %v4079
    %v4081 = vsel %vm4078, %v4080, %v4076
    %v4082 = vmul.f32 1.0, %v4081
    %v4083 = vrcp.pop %v3857
    %v4084 = vmul.f32 %v3857, %v4083
    %v4085 = vsub.f32 1.0, %v4084
    %v4086 = vmul.f32 %v4083, %v4085
    %v4087 = vadd.f32 %v4083, %v4086
    %vm4088 = vweird.f32 %v3857
    %vm4089 = vweird.f32 %v4083
    %vm4090 = vmor %vm4088, %vm4089
    %v4091 = vsel %vm4090, %v4083, %v4087
    %v4092 = vand.u32 2147483647, %v3857
    %vm4093 = vcmp.eq.f32.partialorder %v4092, 8.507059e+37
    %v4094 = vand.u32 %v3857, 2147483648
    %v4095 = vor.u32 1.1754944e-38, %v4094
    %v4096 = vsel %vm4093, %v4095, %v4091
    %v4097 = vmul.f32 1.0, %v4096
    %v4098 = vrcp.pop %v3858
    %v4099 = vmul.f32 %v3858, %v4098
    %v4100 = vsub.f32 1.0, %v4099
    %v4101 = vmul.f32 %v4098, %v4100
    %v4102 = vadd.f32 %v4098, %v4101
    %vm4103 = vweird.f32 %v3858
    %vm4104 = vweird.f32 %v4098
    %vm4105 = vmor %vm4103, %vm4104
    %v4106 = vsel %vm4105, %v4098, %v4102
    %v4107 = vand.u32 2147483647, %v3858
    %vm4108 = vcmp.eq.f32.partialorder %v4107, 8.507059e+37
    %v4109 = vand.u32 %v3858, 2147483648
    %v4110 = vor.u32 1.1754944e-38, %v4109
    %v4111 = vsel %vm4108, %v4110, %v4106
    %v4112 = vmul.f32 1.0, %v4111
    %v4113 = vrcp.pop %v3859
    %v4114 = vmul.f32 %v3859, %v4113
    %v4115 = vsub.f32 1.0, %v4114
    %v4116 = vmul.f32 %v4113, %v4115
    %v4117 = vadd.f32 %v4113, %v4116
    %vm4118 = vweird.f32 %v3859
    %vm4119 = vweird.f32 %v4113
    %vm4120 = vmor %vm4118, %vm4119
    %v4121 = vsel %vm4120, %v4113, %v4117
    %v4122 = vand.u32 2147483647, %v3859
    %vm4123 = vcmp.eq.f32.partialorder %v4122, 8.507059e+37
    %v4124 = vand.u32 %v3859, 2147483648
    %v4125 = vor.u32 1.1754944e-38, %v4124
    %v4126 = vsel %vm4123, %v4125, %v4121
    %v4127 = vmul.f32 1.0, %v4126
    %v4128 = vrcp.pop %v3860
    %v4129 = vmul.f32 %v3860, %v4128
    %v4130 = vsub.f32 1.0, %v4129
    %v4131 = vmul.f32 %v4128, %v4130
    %v4132 = vadd.f32 %v4128, %v4131
    %vm4133 = vweird.f32 %v3860
    %vm4134 = vweird.f32 %v4128
    %vm4135 = vmor %vm4133, %vm4134
    %v4136 = vsel %vm4135, %v4128, %v4132
    %v4137 = vand.u32 2147483647, %v3860
    %vm4138 = vcmp.eq.f32.partialorder %v4137, 8.507059e+37
    %v4139 = vand.u32 %v3860, 2147483648
    %v4140 = vor.u32 1.1754944e-38, %v4139
    %v4141 = vsel %vm4138, %v4140, %v4136
    %v4142 = vmul.f32 1.0, %v4141
    %v4143 = vrcp.pop %v3861
    %v4144 = vmul.f32 %v3861, %v4143
    %v4145 = vsub.f32 1.0, %v4144
    %v4146 = vmul.f32 %v4143, %v4145
    %v4147 = vadd.f32 %v4143, %v4146
    %vm4148 = vweird.f32 %v3861
    %vm4149 = vweird.f32 %v4143
    %vm4150 = vmor %vm4148, %vm4149
    %v4151 = vsel %vm4150, %v4143, %v4147
    %v4152 = vand.u32 2147483647, %v3861
    %vm4153 = vcmp.eq.f32.partialorder %v4152, 8.507059e+37
    %v4154 = vand.u32 %v3861, 2147483648
    %v4155 = vor.u32 1.1754944e-38, %v4154
    %v4156 = vsel %vm4153, %v4155, %v4151
    %v4157 = vmul.f32 1.0, %v4156
    %v4158 = vrcp.pop %v3862
    %v4159 = vmul.f32 %v3862, %v4158
    %v4160 = vsub.f32 1.0, %v4159
    %v4161 = vmul.f32 %v4158, %v4160
    %v4162 = vadd.f32 %v4158, %v4161
    %vm4163 = vweird.f32 %v3862
    %vm4164 = vweird.f32 %v4158
    %vm4165 = vmor %vm4163, %vm4164
    %v4166 = vsel %vm4165, %v4158, %v4162
    %v4167 = vand.u32 2147483647, %v3862
    %vm4168 = vcmp.eq.f32.partialorder %v4167, 8.507059e+37
    %v4169 = vand.u32 %v3862, 2147483648
    %v4170 = vor.u32 1.1754944e-38, %v4169
    %v4171 = vsel %vm4168, %v4170, %v4166
    %v4172 = vmul.f32 1.0, %v4171
    %v4173 = vrcp.pop %v3863
    %v4174 = vmul.f32 %v3863, %v4173
    %v4175 = vsub.f32 1.0, %v4174
    %v4176 = vmul.f32 %v4173, %v4175
    %v4177 = vadd.f32 %v4173, %v4176
    %vm4178 = vweird.f32 %v3863
    %vm4179 = vweird.f32 %v4173
    %vm4180 = vmor %vm4178, %vm4179
    %v4181 = vsel %vm4180, %v4173, %v4177
    %v4182 = vand.u32 2147483647, %v3863
    %vm4183 = vcmp.eq.f32.partialorder %v4182, 8.507059e+37
    %v4184 = vand.u32 %v3863, 2147483648
    %v4185 = vor.u32 1.1754944e-38, %v4184
    %v4186 = vsel %vm4183, %v4185, %v4181
    %v4187 = vmul.f32 1.0, %v4186
    %v4188 = vrcp.pop %v3864
    %v4189 = vmul.f32 %v3864, %v4188
    %v4190 = vsub.f32 1.0, %v4189
    %v4191 = vmul.f32 %v4188, %v4190
    %v4192 = vadd.f32 %v4188, %v4191
    %vm4193 = vweird.f32 %v3864
    %vm4194 = vweird.f32 %v4188
    %vm4195 = vmor %vm4193, %vm4194
    %v4196 = vsel %vm4195, %v4188, %v4192
    %v4197 = vand.u32 2147483647, %v3864
    %vm4198 = vcmp.eq.f32.partialorder %v4197, 8.507059e+37
    %v4199 = vand.u32 %v3864, 2147483648
    %v4200 = vor.u32 1.1754944e-38, %v4199
    %v4201 = vsel %vm4198, %v4200, %v4196
    %v4202 = vmul.f32 1.0, %v4201
    %v4203 = vrcp.pop %v3865
    %v4204 = vmul.f32 %v3865, %v4203
    %v4205 = vsub.f32 1.0, %v4204
    %v4206 = vmul.f32 %v4203, %v4205
    %v4207 = vadd.f32 %v4203, %v4206
    %vm4208 = vweird.f32 %v3865
    %vm4209 = vweird.f32 %v4203
    %vm4210 = vmor %vm4208, %vm4209
    %v4211 = vsel %vm4210, %v4203, %v4207
    %v4212 = vand.u32 2147483647, %v3865
    %vm4213 = vcmp.eq.f32.partialorder %v4212, 8.507059e+37
    %v4214 = vand.u32 %v3865, 2147483648
    %v4215 = vor.u32 1.1754944e-38, %v4214
    %v4216 = vsel %vm4213, %v4215, %v4211
    %v4217 = vmul.f32 1.0, %v4216
    %v4218 = vrcp.pop %v3866
    %v4219 = vmul.f32 %v3866, %v4218
    %v4220 = vsub.f32 1.0, %v4219
    %v4221 = vmul.f32 %v4218, %v4220
    %v4222 = vadd.f32 %v4218, %v4221
    %vm4223 = vweird.f32 %v3866
    %vm4224 = vweird.f32 %v4218
    %vm4225 = vmor %vm4223, %vm4224
    %v4226 = vsel %vm4225, %v4218, %v4222
    %v4227 = vand.u32 2147483647, %v3866
    %vm4228 = vcmp.eq.f32.partialorder %v4227, 8.507059e+37
    %v4229 = vand.u32 %v3866, 2147483648
    %v4230 = vor.u32 1.1754944e-38, %v4229
    %v4231 = vsel %vm4228, %v4230, %v4226
    %v4232 = vmul.f32 1.0, %v4231
    %v4233 = vrcp.pop %v3867
    %v4234 = vmul.f32 %v3867, %v4233
    %v4235 = vsub.f32 1.0, %v4234
    %v4236 = vmul.f32 %v4233, %v4235
    %v4237 = vadd.f32 %v4233, %v4236
    %vm4238 = vweird.f32 %v3867
    %vm4239 = vweird.f32 %v4233
    %vm4240 = vmor %vm4238, %vm4239
    %v4241 = vsel %vm4240, %v4233, %v4237
    %v4242 = vand.u32 2147483647, %v3867
    %vm4243 = vcmp.eq.f32.partialorder %v4242, 8.507059e+37
    %v4244 = vand.u32 %v3867, 2147483648
    %v4245 = vor.u32 1.1754944e-38, %v4244
    %v4246 = vsel %vm4243, %v4245, %v4241
    %v4247 = vmul.f32 1.0, %v4246
    %v4248 = vrcp.pop %v3868
    %v4249 = vmul.f32 %v3868, %v4248
    %v4250 = vsub.f32 1.0, %v4249
    %v4251 = vmul.f32 %v4248, %v4250
    %v4252 = vadd.f32 %v4248, %v4251
    %vm4253 = vweird.f32 %v3868
    %vm4254 = vweird.f32 %v4248
    %vm4255 = vmor %vm4253, %vm4254
    %v4256 = vsel %vm4255, %v4248, %v4252
    %v4257 = vand.u32 2147483647, %v3868
    %vm4258 = vcmp.eq.f32.partialorder %v4257, 8.507059e+37
    %v4259 = vand.u32 %v3868, 2147483648
    %v4260 = vor.u32 1.1754944e-38, %v4259
    %v4261 = vsel %vm4258, %v4260, %v4256
    %v4262 = vmul.f32 1.0, %v4261
    %v4263 = vrcp.pop %v3869
    %v4264 = vmul.f32 %v3869, %v4263
    %v4265 = vsub.f32 1.0, %v4264
    %v4266 = vmul.f32 %v4263, %v4265
    %v4267 = vadd.f32 %v4263, %v4266
    %vm4268 = vweird.f32 %v3869
    %vm4269 = vweird.f32 %v4263
    %vm4270 = vmor %vm4268, %vm4269
    %v4271 = vsel %vm4270, %v4263, %v4267
    %v4272 = vand.u32 2147483647, %v3869
    %vm4273 = vcmp.eq.f32.partialorder %v4272, 8.507059e+37
    %v4274 = vand.u32 %v3869, 2147483648
    %v4275 = vor.u32 1.1754944e-38, %v4274
    %v4276 = vsel %vm4273, %v4275, %v4271
    %v4277 = vmul.f32 1.0, %v4276
    %v4278 = vrcp.pop %v3870
    %v4279 = vmul.f32 %v3870, %v4278
    %v4280 = vsub.f32 1.0, %v4279
    %v4281 = vmul.f32 %v4278, %v4280
    %v4282 = vadd.f32 %v4278, %v4281
    %vm4283 = vweird.f32 %v3870
    %vm4284 = vweird.f32 %v4278
    %vm4285 = vmor %vm4283, %vm4284
    %v4286 = vsel %vm4285, %v4278, %v4282
    %v4287 = vand.u32 2147483647, %v3870
    %vm4288 = vcmp.eq.f32.partialorder %v4287, 8.507059e+37
    %v4289 = vand.u32 %v3870, 2147483648
    %v4290 = vor.u32 1.1754944e-38, %v4289
    %v4291 = vsel %vm4288, %v4290, %v4286
    %v4292 = vmul.f32 1.0, %v4291
    %v4293 = vrcp.pop %v3871
    %v4294 = vmul.f32 %v3871, %v4293
    %v4295 = vsub.f32 1.0, %v4294
    %v4296 = vmul.f32 %v4293, %v4295
    %v4297 = vadd.f32 %v4293, %v4296
    %vm4298 = vweird.f32 %v3871
    %vm4299 = vweird.f32 %v4293
    %vm4300 = vmor %vm4298, %vm4299
    %v4301 = vsel %vm4300, %v4293, %v4297
    %v4302 = vand.u32 2147483647, %v3871
    %vm4303 = vcmp.eq.f32.partialorder %v4302, 8.507059e+37
    %v4304 = vand.u32 %v3871, 2147483648
    %v4305 = vor.u32 1.1754944e-38, %v4304
    %v4306 = vsel %vm4303, %v4305, %v4301
    %v4307 = vmul.f32 1.0, %v4306
    %v4308 = vrcp.pop %v3872
    %v4309 = vmul.f32 %v3872, %v4308
    %v4310 = vsub.f32 1.0, %v4309
    %v4311 = vmul.f32 %v4308, %v4310
    %v4312 = vadd.f32 %v4308, %v4311
    %vm4313 = vweird.f32 %v3872
    %vm4314 = vweird.f32 %v4308
    %vm4315 = vmor %vm4313, %vm4314
    %v4316 = vsel %vm4315, %v4308, %v4312
    %v4317 = vand.u32 2147483647, %v3872
    %vm4318 = vcmp.eq.f32.partialorder %v4317, 8.507059e+37
    %v4319 = vand.u32 %v3872, 2147483648
    %v4320 = vor.u32 1.1754944e-38, %v4319
    %v4321 = vsel %vm4318, %v4320, %v4316
    %v4322 = vmul.f32 1.0, %v4321
    %v4323 = vrcp.pop %v3873
    %v4324 = vmul.f32 %v3873, %v4323
    %v4325 = vsub.f32 1.0, %v4324
    %v4326 = vmul.f32 %v4323, %v4325
    %v4327 = vadd.f32 %v4323, %v4326
    %vm4328 = vweird.f32 %v3873
    %vm4329 = vweird.f32 %v4323
    %vm4330 = vmor %vm4328, %vm4329
    %v4331 = vsel %vm4330, %v4323, %v4327
    %v4332 = vand.u32 2147483647, %v3873
    %vm4333 = vcmp.eq.f32.partialorder %v4332, 8.507059e+37
    %v4334 = vand.u32 %v3873, 2147483648
    %v4335 = vor.u32 1.1754944e-38, %v4334
    %v4336 = vsel %vm4333, %v4335, %v4331
    %v4337 = vmul.f32 1.0, %v4336
    %v4338 = vrcp.pop %v3874
    %v4339 = vmul.f32 %v3874, %v4338
    %v4340 = vsub.f32 1.0, %v4339
    %v4341 = vmul.f32 %v4338, %v4340
    %v4342 = vadd.f32 %v4338, %v4341
    %vm4343 = vweird.f32 %v3874
    %vm4344 = vweird.f32 %v4338
    %vm4345 = vmor %vm4343, %vm4344
    %v4346 = vsel %vm4345, %v4338, %v4342
    %v4347 = vand.u32 2147483647, %v3874
    %vm4348 = vcmp.eq.f32.partialorder %v4347, 8.507059e+37
    %v4349 = vand.u32 %v3874, 2147483648
    %v4350 = vor.u32 1.1754944e-38, %v4349
    %v4351 = vsel %vm4348, %v4350, %v4346
    %v4352 = vmul.f32 1.0, %v4351
    %v4353 = vrcp.pop %v3875
    %v4354 = vmul.f32 %v3875, %v4353
    %v4355 = vsub.f32 1.0, %v4354
    %v4356 = vmul.f32 %v4353, %v4355
    %v4357 = vadd.f32 %v4353, %v4356
    %vm4358 = vweird.f32 %v3875
    %vm4359 = vweird.f32 %v4353
    %vm4360 = vmor %vm4358, %vm4359
    %v4361 = vsel %vm4360, %v4353, %v4357
    %v4362 = vand.u32 2147483647, %v3875
    %vm4363 = vcmp.eq.f32.partialorder %v4362, 8.507059e+37
    %v4364 = vand.u32 %v3875, 2147483648
    %v4365 = vor.u32 1.1754944e-38, %v4364
    %v4366 = vsel %vm4363, %v4365, %v4361
    %v4367 = vmul.f32 1.0, %v4366
    %v4368 = vrcp.pop %v3876
    %v4369 = vmul.f32 %v3876, %v4368
    %v4370 = vsub.f32 1.0, %v4369
    %v4371 = vmul.f32 %v4368, %v4370
    %v4372 = vadd.f32 %v4368, %v4371
    %vm4373 = vweird.f32 %v3876
    %vm4374 = vweird.f32 %v4368
    %vm4375 = vmor %vm4373, %vm4374
    %v4376 = vsel %vm4375, %v4368, %v4372
    %v4377 = vand.u32 2147483647, %v3876
    %vm4378 = vcmp.eq.f32.partialorder %v4377, 8.507059e+37
    %v4379 = vand.u32 %v3876, 2147483648
    %v4380 = vor.u32 1.1754944e-38, %v4379
    %v4381 = vsel %vm4378, %v4380, %v4376
    %v4382 = vmul.f32 1.0, %v4381
    %v4383 = vrcp.pop %v3877
    %v4384 = vmul.f32 %v3877, %v4383
    %v4385 = vsub.f32 1.0, %v4384
    %v4386 = vmul.f32 %v4383, %v4385
    %v4387 = vadd.f32 %v4383, %v4386
    %vm4388 = vweird.f32 %v3877
    %vm4389 = vweird.f32 %v4383
    %vm4390 = vmor %vm4388, %vm4389
    %v4391 = vsel %vm4390, %v4383, %v4387
    %v4392 = vand.u32 2147483647, %v3877
    %vm4393 = vcmp.eq.f32.partialorder %v4392, 8.507059e+37
    %v4394 = vand.u32 %v3877, 2147483648
    %v4395 = vor.u32 1.1754944e-38, %v4394
    %v4396 = vsel %vm4393, %v4395, %v4391
    %v4397 = vmul.f32 1.0, %v4396
    %v4398 = vrcp.pop %v3878
    %v4399 = vmul.f32 %v3878, %v4398
    %v4400 = vsub.f32 1.0, %v4399
    %v4401 = vmul.f32 %v4398, %v4400
    %v4402 = vadd.f32 %v4398, %v4401
    %vm4403 = vweird.f32 %v3878
    %vm4404 = vweird.f32 %v4398
    %vm4405 = vmor %vm4403, %vm4404
    %v4406 = vsel %vm4405, %v4398, %v4402
    %v4407 = vand.u32 2147483647, %v3878
    %vm4408 = vcmp.eq.f32.partialorder %v4407, 8.507059e+37
    %v4409 = vand.u32 %v3878, 2147483648
    %v4410 = vor.u32 1.1754944e-38, %v4409
    %v4411 = vsel %vm4408, %v4410, %v4406
    %v4412 = vmul.f32 1.0, %v4411
    %v4413 = vrcp.pop %v3879
    %v4414 = vmul.f32 %v3879, %v4413
    %v4415 = vsub.f32 1.0, %v4414
    %v4416 = vmul.f32 %v4413, %v4415
    %v4417 = vadd.f32 %v4413, %v4416
    %vm4418 = vweird.f32 %v3879
    %vm4419 = vweird.f32 %v4413
    %vm4420 = vmor %vm4418, %vm4419
    %v4421 = vsel %vm4420, %v4413, %v4417
    %v4422 = vand.u32 2147483647, %v3879
    %vm4423 = vcmp.eq.f32.partialorder %v4422, 8.507059e+37
    %v4424 = vand.u32 %v3879, 2147483648
    %v4425 = vor.u32 1.1754944e-38, %v4424
    %v4426 = vsel %vm4423, %v4425, %v4421
    %v4427 = vmul.f32 1.0, %v4426
    %v4428 = vrcp.pop %v3880
    %v4429 = vmul.f32 %v3880, %v4428
    %v4430 = vsub.f32 1.0, %v4429
    %v4431 = vmul.f32 %v4428, %v4430
    %v4432 = vadd.f32 %v4428, %v4431
    %vm4433 = vweird.f32 %v3880
    %vm4434 = vweird.f32 %v4428
    %vm4435 = vmor %vm4433, %vm4434
    %v4436 = vsel %vm4435, %v4428, %v4432
    %v4437 = vand.u32 2147483647, %v3880
    %vm4438 = vcmp.eq.f32.partialorder %v4437, 8.507059e+37
    %v4439 = vand.u32 %v3880, 2147483648
    %v4440 = vor.u32 1.1754944e-38, %v4439
    %v4441 = vsel %vm4438, %v4440, %v4436
    %v4442 = vmul.f32 1.0, %v4441
    %v4443 = vrcp.pop %v3881
    %v4444 = vmul.f32 %v3881, %v4443
    %v4445 = vsub.f32 1.0, %v4444
    %v4446 = vmul.f32 %v4443, %v4445
    %v4447 = vadd.f32 %v4443, %v4446
    %vm4448 = vweird.f32 %v3881
    %vm4449 = vweird.f32 %v4443
    %vm4450 = vmor %vm4448, %vm4449
    %v4451 = vsel %vm4450, %v4443, %v4447
    %v4452 = vand.u32 2147483647, %v3881
    %vm4453 = vcmp.eq.f32.partialorder %v4452, 8.507059e+37
    %v4454 = vand.u32 %v3881, 2147483648
    %v4455 = vor.u32 1.1754944e-38, %v4454
    %v4456 = vsel %vm4453, %v4455, %v4451
    %v4457 = vmul.f32 1.0, %v4456
    %v4458 = vrcp.pop %v3882
    %v4459 = vmul.f32 %v3882, %v4458
    %v4460 = vsub.f32 1.0, %v4459
    %v4461 = vmul.f32 %v4458, %v4460
    %v4462 = vadd.f32 %v4458, %v4461
    %vm4463 = vweird.f32 %v3882
    %vm4464 = vweird.f32 %v4458
    %vm4465 = vmor %vm4463, %vm4464
    %v4466 = vsel %vm4465, %v4458, %v4462
    %v4467 = vand.u32 2147483647, %v3882
    %vm4468 = vcmp.eq.f32.partialorder %v4467, 8.507059e+37
    %v4469 = vand.u32 %v3882, 2147483648
    %v4470 = vor.u32 1.1754944e-38, %v4469
    %v4471 = vsel %vm4468, %v4470, %v4466
    %v4472 = vmul.f32 1.0, %v4471
    %v4473 = vrcp.pop %v3883
    %v4474 = vmul.f32 %v3883, %v4473
    %v4475 = vsub.f32 1.0, %v4474
    %v4476 = vmul.f32 %v4473, %v4475
    %v4477 = vadd.f32 %v4473, %v4476
    %vm4478 = vweird.f32 %v3883
    %vm4479 = vweird.f32 %v4473
    %vm4480 = vmor %vm4478, %vm4479
    %v4481 = vsel %vm4480, %v4473, %v4477
    %v4482 = vand.u32 2147483647, %v3883
    %vm4483 = vcmp.eq.f32.partialorder %v4482, 8.507059e+37
    %v4484 = vand.u32 %v3883, 2147483648
    %v4485 = vor.u32 1.1754944e-38, %v4484
    %v4486 = vsel %vm4483, %v4485, %v4481
    %v4487 = vmul.f32 1.0, %v4486
    %v4488 = vrcp.pop %v3884
    %v4489 = vmul.f32 %v3884, %v4488
    %v4490 = vsub.f32 1.0, %v4489
    %v4491 = vmul.f32 %v4488, %v4490
    %v4492 = vadd.f32 %v4488, %v4491
    %vm4493 = vweird.f32 %v3884
    %vm4494 = vweird.f32 %v4488
    %vm4495 = vmor %vm4493, %vm4494
    %v4496 = vsel %vm4495, %v4488, %v4492
    %v4497 = vand.u32 2147483647, %v3884
    %vm4498 = vcmp.eq.f32.partialorder %v4497, 8.507059e+37
    %v4499 = vand.u32 %v3884, 2147483648
    %v4500 = vor.u32 1.1754944e-38, %v4499
    %v4501 = vsel %vm4498, %v4500, %v4496
    %v4502 = vmul.f32 1.0, %v4501
    %v4503 = vrcp.pop %v3885
    %v4504 = vmul.f32 %v3885, %v4503
    %v4505 = vsub.f32 1.0, %v4504
    %v4506 = vmul.f32 %v4503, %v4505
    %v4507 = vadd.f32 %v4503, %v4506
    %vm4508 = vweird.f32 %v3885
    %vm4509 = vweird.f32 %v4503
    %vm4510 = vmor %vm4508, %vm4509
    %v4511 = vsel %vm4510, %v4503, %v4507
    %v4512 = vand.u32 2147483647, %v3885
    %vm4513 = vcmp.eq.f32.partialorder %v4512, 8.507059e+37
    %v4514 = vand.u32 %v3885, 2147483648
    %v4515 = vor.u32 1.1754944e-38, %v4514
    %v4516 = vsel %vm4513, %v4515, %v4511
    %v4517 = vmul.f32 1.0, %v4516
    %v4518 = vrcp.pop %v3886
    %v4519 = vmul.f32 %v3886, %v4518
    %v4520 = vsub.f32 1.0, %v4519
    %v4521 = vmul.f32 %v4518, %v4520
    %v4522 = vadd.f32 %v4518, %v4521
    %vm4523 = vweird.f32 %v3886
    %vm4524 = vweird.f32 %v4518
    %vm4525 = vmor %vm4523, %vm4524
    %v4526 = vsel %vm4525, %v4518, %v4522
    %v4527 = vand.u32 2147483647, %v3886
    %vm4528 = vcmp.eq.f32.partialorder %v4527, 8.507059e+37
    %v4529 = vand.u32 %v3886, 2147483648
    %v4530 = vor.u32 1.1754944e-38, %v4529
    %v4531 = vsel %vm4528, %v4530, %v4526
    %v4532 = vmul.f32 1.0, %v4531
    %v4533 = vrcp.pop %v3887
    %v4534 = vmul.f32 %v3887, %v4533
    %v4535 = vsub.f32 1.0, %v4534
    %v4536 = vmul.f32 %v4533, %v4535
    %v4537 = vadd.f32 %v4533, %v4536
    %vm4538 = vweird.f32 %v3887
    %vm4539 = vweird.f32 %v4533
    %vm4540 = vmor %vm4538, %vm4539
    %v4541 = vsel %vm4540, %v4533, %v4537
    %v4542 = vand.u32 2147483647, %v3887
    %vm4543 = vcmp.eq.f32.partialorder %v4542, 8.507059e+37
    %v4544 = vand.u32 %v3887, 2147483648
    %v4545 = vor.u32 1.1754944e-38, %v4544
    %v4546 = vsel %vm4543, %v4545, %v4541
    %v4547 = vmul.f32 1.0, %v4546
    %v4548 = vrcp.pop %v3888
    %v4549 = vmul.f32 %v3888, %v4548
    %v4550 = vsub.f32 1.0, %v4549
    %v4551 = vmul.f32 %v4548, %v4550
    %v4552 = vadd.f32 %v4548, %v4551
    %vm4553 = vweird.f32 %v3888
    %vm4554 = vweird.f32 %v4548
    %vm4555 = vmor %vm4553, %vm4554
    %v4556 = vsel %vm4555, %v4548, %v4552
    %v4557 = vand.u32 2147483647, %v3888
    %vm4558 = vcmp.eq.f32.partialorder %v4557, 8.507059e+37
    %v4559 = vand.u32 %v3888, 2147483648
    %v4560 = vor.u32 1.1754944e-38, %v4559
    %v4561 = vsel %vm4558, %v4560, %v4556
    %v4562 = vmul.f32 1.0, %v4561
    %v4563 = vrcp.pop %v3889
    %v4564 = vmul.f32 %v3889, %v4563
    %v4565 = vsub.f32 1.0, %v4564
    %v4566 = vmul.f32 %v4563, %v4565
    %v4567 = vadd.f32 %v4563, %v4566
    %vm4568 = vweird.f32 %v3889
    %vm4569 = vweird.f32 %v4563
    %vm4570 = vmor %vm4568, %vm4569
    %v4571 = vsel %vm4570, %v4563, %v4567
    %v4572 = vand.u32 2147483647, %v3889
    %vm4573 = vcmp.eq.f32.partialorder %v4572, 8.507059e+37
    %v4574 = vand.u32 %v3889, 2147483648
    %v4575 = vor.u32 1.1754944e-38, %v4574
    %v4576 = vsel %vm4573, %v4575, %v4571
    %v4577 = vmul.f32 1.0, %v4576
    %v4578 = vrcp.pop %v3890
    %v4579 = vmul.f32 %v3890, %v4578
    %v4580 = vsub.f32 1.0, %v4579
    %v4581 = vmul.f32 %v4578, %v4580
    %v4582 = vadd.f32 %v4578, %v4581
    %vm4583 = vweird.f32 %v3890
    %vm4584 = vweird.f32 %v4578
    %vm4585 = vmor %vm4583, %vm4584
    %v4586 = vsel %vm4585, %v4578, %v4582
    %v4587 = vand.u32 2147483647, %v3890
    %vm4588 = vcmp.eq.f32.partialorder %v4587, 8.507059e+37
    %v4589 = vand.u32 %v3890, 2147483648
    %v4590 = vor.u32 1.1754944e-38, %v4589
    %v4591 = vsel %vm4588, %v4590, %v4586
    %v4592 = vmul.f32 1.0, %v4591
    %v4593 = vrcp.pop %v3891
    %v4594 = vmul.f32 %v3891, %v4593
    %v4595 = vsub.f32 1.0, %v4594
    %v4596 = vmul.f32 %v4593, %v4595
    %v4597 = vadd.f32 %v4593, %v4596
    %vm4598 = vweird.f32 %v3891
    %vm4599 = vweird.f32 %v4593
    %vm4600 = vmor %vm4598, %vm4599
    %v4601 = vsel %vm4600, %v4593, %v4597
    %v4602 = vand.u32 2147483647, %v3891
    %vm4603 = vcmp.eq.f32.partialorder %v4602, 8.507059e+37
    %v4604 = vand.u32 %v3891, 2147483648
    %v4605 = vor.u32 1.1754944e-38, %v4604
    %v4606 = vsel %vm4603, %v4605, %v4601
    %v4607 = vmul.f32 1.0, %v4606
    %v4608 = vrcp.pop %v3892
    %v4609 = vmul.f32 %v3892, %v4608
    %v4610 = vsub.f32 1.0, %v4609
    %v4611 = vmul.f32 %v4608, %v4610
    %v4612 = vadd.f32 %v4608, %v4611
    %vm4613 = vweird.f32 %v3892
    %vm4614 = vweird.f32 %v4608
    %vm4615 = vmor %vm4613, %vm4614
    %v4616 = vsel %vm4615, %v4608, %v4612
    %v4617 = vand.u32 2147483647, %v3892
    %vm4618 = vcmp.eq.f32.partialorder %v4617, 8.507059e+37
    %v4619 = vand.u32 %v3892, 2147483648
    %v4620 = vor.u32 1.1754944e-38, %v4619
    %v4621 = vsel %vm4618, %v4620, %v4616
    %v4622 = vmul.f32 1.0, %v4621
    %v4623 = vrcp.pop %v3893
    %v4624 = vmul.f32 %v3893, %v4623
    %v4625 = vsub.f32 1.0, %v4624
    %v4626 = vmul.f32 %v4623, %v4625
    %v4627 = vadd.f32 %v4623, %v4626
    %vm4628 = vweird.f32 %v3893
    %vm4629 = vweird.f32 %v4623
    %vm4630 = vmor %vm4628, %vm4629
    %v4631 = vsel %vm4630, %v4623, %v4627
    %v4632 = vand.u32 2147483647, %v3893
    %vm4633 = vcmp.eq.f32.partialorder %v4632, 8.507059e+37
    %v4634 = vand.u32 %v3893, 2147483648
    %v4635 = vor.u32 1.1754944e-38, %v4634
    %v4636 = vsel %vm4633, %v4635, %v4631
    %v4637 = vmul.f32 1.0, %v4636
    %v4638 = vrcp.pop %v3894
    %v4639 = vmul.f32 %v3894, %v4638
    %v4640 = vsub.f32 1.0, %v4639
    %v4641 = vmul.f32 %v4638, %v4640
    %v4642 = vadd.f32 %v4638, %v4641
    %vm4643 = vweird.f32 %v3894
    %vm4644 = vweird.f32 %v4638
    %vm4645 = vmor %vm4643, %vm4644
    %v4646 = vsel %vm4645, %v4638, %v4642
    %v4647 = vand.u32 2147483647, %v3894
    %vm4648 = vcmp.eq.f32.partialorder %v4647, 8.507059e+37
    %v4649 = vand.u32 %v3894, 2147483648
    %v4650 = vor.u32 1.1754944e-38, %v4649
    %v4651 = vsel %vm4648, %v4650, %v4646
    %v4652 = vmul.f32 1.0, %v4651
    %v4653 = vrcp.pop %v3895
    %v4654 = vmul.f32 %v3895, %v4653
    %v4655 = vsub.f32 1.0, %v4654
    %v4656 = vmul.f32 %v4653, %v4655
    %v4657 = vadd.f32 %v4653, %v4656
    %vm4658 = vweird.f32 %v3895
    %vm4659 = vweird.f32 %v4653
    %vm4660 = vmor %vm4658, %vm4659
    %v4661 = vsel %vm4660, %v4653, %v4657
    %v4662 = vand.u32 2147483647, %v3895
    %vm4663 = vcmp.eq.f32.partialorder %v4662, 8.507059e+37
    %v4664 = vand.u32 %v3895, 2147483648
    %v4665 = vor.u32 1.1754944e-38, %v4664
    %v4666 = vsel %vm4663, %v4665, %v4661
    %v4667 = vmul.f32 1.0, %v4666
    %v4668 = vrcp.pop %v3896
    %v4669 = vmul.f32 %v3896, %v4668
    %v4670 = vsub.f32 1.0, %v4669
    %v4671 = vmul.f32 %v4668, %v4670
    %v4672 = vadd.f32 %v4668, %v4671
    %vm4673 = vweird.f32 %v3896
    %vm4674 = vweird.f32 %v4668
    %vm4675 = vmor %vm4673, %vm4674
    %v4676 = vsel %vm4675, %v4668, %v4672
    %v4677 = vand.u32 2147483647, %v3896
    %vm4678 = vcmp.eq.f32.partialorder %v4677, 8.507059e+37
    %v4679 = vand.u32 %v3896, 2147483648
    %v4680 = vor.u32 1.1754944e-38, %v4679
    %v4681 = vsel %vm4678, %v4680, %v4676
    %v4682 = vmul.f32 1.0, %v4681
    %v4683 = vrcp.pop %v3897
    %v4684 = vmul.f32 %v3897, %v4683
    %v4685 = vsub.f32 1.0, %v4684
    %v4686 = vmul.f32 %v4683, %v4685
    %v4687 = vadd.f32 %v4683, %v4686
    %vm4688 = vweird.f32 %v3897
    %vm4689 = vweird.f32 %v4683
    %vm4690 = vmor %vm4688, %vm4689
    %v4691 = vsel %vm4690, %v4683, %v4687
    %v4692 = vand.u32 2147483647, %v3897
    %vm4693 = vcmp.eq.f32.partialorder %v4692, 8.507059e+37
    %v4694 = vand.u32 %v3897, 2147483648
    %v4695 = vor.u32 1.1754944e-38, %v4694
    %v4696 = vsel %vm4693, %v4695, %v4691
    %v4697 = vmul.f32 1.0, %v4696
    %v4698 = vrcp.pop %v3898
    %v4699 = vmul.f32 %v3898, %v4698
    %v4700 = vsub.f32 1.0, %v4699
    %v4701 = vmul.f32 %v4698, %v4700
    %v4702 = vadd.f32 %v4698, %v4701
    %vm4703 = vweird.f32 %v3898
    %vm4704 = vweird.f32 %v4698
    %vm4705 = vmor %vm4703, %vm4704
    %v4706 = vsel %vm4705, %v4698, %v4702
    %v4707 = vand.u32 2147483647, %v3898
    %vm4708 = vcmp.eq.f32.partialorder %v4707, 8.507059e+37
    %v4709 = vand.u32 %v3898, 2147483648
    %v4710 = vor.u32 1.1754944e-38, %v4709
    %v4711 = vsel %vm4708, %v4710, %v4706
    %v4712 = vmul.f32 1.0, %v4711
    %v4713 = vrcp.pop %v3899
    %v4714 = vmul.f32 %v3899, %v4713
    %v4715 = vsub.f32 1.0, %v4714
    %v4716 = vmul.f32 %v4713, %v4715
    %v4717 = vadd.f32 %v4713, %v4716
    %vm4718 = vweird.f32 %v3899
    %vm4719 = vweird.f32 %v4713
    %vm4720 = vmor %vm4718, %vm4719
    %v4721 = vsel %vm4720, %v4713, %v4717
    %v4722 = vand.u32 2147483647, %v3899
    %vm4723 = vcmp.eq.f32.partialorder %v4722, 8.507059e+37
    %v4724 = vand.u32 %v3899, 2147483648
    %v4725 = vor.u32 1.1754944e-38, %v4724
    %v4726 = vsel %vm4723, %v4725, %v4721
    %v4727 = vmul.f32 1.0, %v4726
    %v4728 = vrcp.pop %v3900
    %v4729 = vmul.f32 %v3900, %v4728
    %v4730 = vsub.f32 1.0, %v4729
    %v4731 = vmul.f32 %v4728, %v4730
    %v4732 = vadd.f32 %v4728, %v4731
    %vm4733 = vweird.f32 %v3900
    %vm4734 = vweird.f32 %v4728
    %vm4735 = vmor %vm4733, %vm4734
    %v4736 = vsel %vm4735, %v4728, %v4732
    %v4737 = vand.u32 2147483647, %v3900
    %vm4738 = vcmp.eq.f32.partialorder %v4737, 8.507059e+37
    %v4739 = vand.u32 %v3900, 2147483648
    %v4740 = vor.u32 1.1754944e-38, %v4739
    %v4741 = vsel %vm4738, %v4740, %v4736
    %v4742 = vmul.f32 1.0, %v4741
    %v4743 = vrcp.pop %v3901
    %v4744 = vmul.f32 %v3901, %v4743
    %v4745 = vsub.f32 1.0, %v4744
    %v4746 = vmul.f32 %v4743, %v4745
    %v4747 = vadd.f32 %v4743, %v4746
    %vm4748 = vweird.f32 %v3901
    %vm4749 = vweird.f32 %v4743
    %vm4750 = vmor %vm4748, %vm4749
    %v4751 = vsel %vm4750, %v4743, %v4747
    %v4752 = vand.u32 2147483647, %v3901
    %vm4753 = vcmp.eq.f32.partialorder %v4752, 8.507059e+37
    %v4754 = vand.u32 %v3901, 2147483648
    %v4755 = vor.u32 1.1754944e-38, %v4754
    %v4756 = vsel %vm4753, %v4755, %v4751
    %v4757 = vmul.f32 1.0, %v4756
    %v4758 = vrcp.pop %v3902
    %v4759 = vmul.f32 %v3902, %v4758
    %v4760 = vsub.f32 1.0, %v4759
    %v4761 = vmul.f32 %v4758, %v4760
    %v4762 = vadd.f32 %v4758, %v4761
    %vm4763 = vweird.f32 %v3902
    %vm4764 = vweird.f32 %v4758
    %vm4765 = vmor %vm4763, %vm4764
    %v4766 = vsel %vm4765, %v4758, %v4762
    %v4767 = vand.u32 2147483647, %v3902
    %vm4768 = vcmp.eq.f32.partialorder %v4767, 8.507059e+37
    %v4769 = vand.u32 %v3902, 2147483648
    %v4770 = vor.u32 1.1754944e-38, %v4769
    %v4771 = vsel %vm4768, %v4770, %v4766
    %v4772 = vmul.f32 1.0, %v4771
    %v4773 = vrcp.pop %v3903
    %v4774 = vmul.f32 %v3903, %v4773
    %v4775 = vsub.f32 1.0, %v4774
    %v4776 = vmul.f32 %v4773, %v4775
    %v4777 = vadd.f32 %v4773, %v4776
    %vm4778 = vweird.f32 %v3903
    %vm4779 = vweird.f32 %v4773
    %vm4780 = vmor %vm4778, %vm4779
    %v4781 = vsel %vm4780, %v4773, %v4777
    %v4782 = vand.u32 2147483647, %v3903
    %vm4783 = vcmp.eq.f32.partialorder %v4782, 8.507059e+37
    %v4784 = vand.u32 %v3903, 2147483648
    %v4785 = vor.u32 1.1754944e-38, %v4784
    %v4786 = vsel %vm4783, %v4785, %v4781
    %v4787 = vmul.f32 1.0, %v4786
    %v4788 = vrcp.pop %v3904
    %v4789 = vmul.f32 %v3904, %v4788
    %v4790 = vsub.f32 1.0, %v4789
    %v4791 = vmul.f32 %v4788, %v4790
    %v4792 = vadd.f32 %v4788, %v4791
    %vm4793 = vweird.f32 %v3904
    %vm4794 = vweird.f32 %v4788
    %vm4795 = vmor %vm4793, %vm4794
    %v4796 = vsel %vm4795, %v4788, %v4792
    %v4797 = vand.u32 2147483647, %v3904
    %vm4798 = vcmp.eq.f32.partialorder %v4797, 8.507059e+37
    %v4799 = vand.u32 %v3904, 2147483648
    %v4800 = vor.u32 1.1754944e-38, %v4799
    %v4801 = vsel %vm4798, %v4800, %v4796
    %v4802 = vmul.f32 1.0, %v4801
    %v4803 = vrcp.pop %v3905
    %v4804 = vmul.f32 %v3905, %v4803
    %v4805 = vsub.f32 1.0, %v4804
    %v4806 = vmul.f32 %v4803, %v4805
    %v4807 = vadd.f32 %v4803, %v4806
    %vm4808 = vweird.f32 %v3905
    %vm4809 = vweird.f32 %v4803
    %vm4810 = vmor %vm4808, %vm4809
    %v4811 = vsel %vm4810, %v4803, %v4807
    %v4812 = vand.u32 2147483647, %v3905
    %vm4813 = vcmp.eq.f32.partialorder %v4812, 8.507059e+37
    %v4814 = vand.u32 %v3905, 2147483648
    %v4815 = vor.u32 1.1754944e-38, %v4814
    %v4816 = vsel %vm4813, %v4815, %v4811
    %v4817 = vmul.f32 1.0, %v4816
    %v4818 = vrcp.pop %v3906
    %v4819 = vmul.f32 %v3906, %v4818
    %v4820 = vsub.f32 1.0, %v4819
    %v4821 = vmul.f32 %v4818, %v4820
    %v4822 = vadd.f32 %v4818, %v4821
    %vm4823 = vweird.f32 %v3906
    %vm4824 = vweird.f32 %v4818
    %vm4825 = vmor %vm4823, %vm4824
    %v4826 = vsel %vm4825, %v4818, %v4822
    %v4827 = vand.u32 2147483647, %v3906
    %vm4828 = vcmp.eq.f32.partialorder %v4827, 8.507059e+37
    %v4829 = vand.u32 %v3906, 2147483648
    %v4830 = vor.u32 1.1754944e-38, %v4829
    %v4831 = vsel %vm4828, %v4830, %v4826
    %v4832 = vmul.f32 1.0, %v4831
    %v4833 = vrcp.pop %v3907
    %v4834 = vmul.f32 %v3907, %v4833
    %v4835 = vsub.f32 1.0, %v4834
    %v4836 = vmul.f32 %v4833, %v4835
    %v4837 = vadd.f32 %v4833, %v4836
    %vm4838 = vweird.f32 %v3907
    %vm4839 = vweird.f32 %v4833
    %vm4840 = vmor %vm4838, %vm4839
    %v4841 = vsel %vm4840, %v4833, %v4837
    %v4842 = vand.u32 2147483647, %v3907
    %vm4843 = vcmp.eq.f32.partialorder %v4842, 8.507059e+37
    %v4844 = vand.u32 %v3907, 2147483648
    %v4845 = vor.u32 1.1754944e-38, %v4844
    %v4846 = vsel %vm4843, %v4845, %v4841
    %v4847 = vmul.f32 1.0, %v4846
    %v4848 = vrcp.pop %v3908
    %v4849 = vmul.f32 %v3908, %v4848
    %v4850 = vsub.f32 1.0, %v4849
    %v4851 = vmul.f32 %v4848, %v4850
    %v4852 = vadd.f32 %v4848, %v4851
    %vm4853 = vweird.f32 %v3908
    %vm4854 = vweird.f32 %v4848
    %vm4855 = vmor %vm4853, %vm4854
    %v4856 = vsel %vm4855, %v4848, %v4852
    %v4857 = vand.u32 2147483647, %v3908
    %vm4858 = vcmp.eq.f32.partialorder %v4857, 8.507059e+37
    %v4859 = vand.u32 %v3908, 2147483648
    %v4860 = vor.u32 1.1754944e-38, %v4859
    %v4861 = vsel %vm4858, %v4860, %v4856
    %v4862 = vmul.f32 1.0, %v4861
    %v4863 = vrcp.pop %v3909
    %v4864 = vmul.f32 %v3909, %v4863
    %v4865 = vsub.f32 1.0, %v4864
    %v4866 = vmul.f32 %v4863, %v4865
    %v4867 = vadd.f32 %v4863, %v4866
    %vm4868 = vweird.f32 %v3909
    %vm4869 = vweird.f32 %v4863
    %vm4870 = vmor %vm4868, %vm4869
    %v4871 = vsel %vm4870, %v4863, %v4867
    %v4872 = vand.u32 2147483647, %v3909
    %vm4873 = vcmp.eq.f32.partialorder %v4872, 8.507059e+37
    %v4874 = vand.u32 %v3909, 2147483648
    %v4875 = vor.u32 1.1754944e-38, %v4874
    %v4876 = vsel %vm4873, %v4875, %v4871
    %v4877 = vmul.f32 1.0, %v4876
    %v4878 = vrcp.pop %v3910
    %v4879 = vmul.f32 %v3910, %v4878
    %v4880 = vsub.f32 1.0, %v4879
    %v4881 = vmul.f32 %v4878, %v4880
    %v4882 = vadd.f32 %v4878, %v4881
    %vm4883 = vweird.f32 %v3910
    %vm4884 = vweird.f32 %v4878
    %vm4885 = vmor %vm4883, %vm4884
    %v4886 = vsel %vm4885, %v4878, %v4882
    %v4887 = vand.u32 2147483647, %v3910
    %vm4888 = vcmp.eq.f32.partialorder %v4887, 8.507059e+37
    %v4889 = vand.u32 %v3910, 2147483648
    %v4890 = vor.u32 1.1754944e-38, %v4889
    %v4891 = vsel %vm4888, %v4890, %v4886
    %v4892 = vmul.f32 1.0, %v4891
    %v4893 = vrcp.pop %v3911
    %v4894 = vmul.f32 %v3911, %v4893
    %v4895 = vsub.f32 1.0, %v4894
    %v4896 = vmul.f32 %v4893, %v4895
    %v4897 = vadd.f32 %v4893, %v4896
    %vm4898 = vweird.f32 %v3911
    %vm4899 = vweird.f32 %v4893
    %vm4900 = vmor %vm4898, %vm4899
    %v4901 = vsel %vm4900, %v4893, %v4897
    %v4902 = vand.u32 2147483647, %v3911
    %vm4903 = vcmp.eq.f32.partialorder %v4902, 8.507059e+37
    %v4904 = vand.u32 %v3911, 2147483648
    %v4905 = vor.u32 1.1754944e-38, %v4904
    %v4906 = vsel %vm4903, %v4905, %v4901
    %v4907 = vmul.f32 1.0, %v4906
    %v4908 = vrcp.pop %v3912
    %v4909 = vmul.f32 %v3912, %v4908
    %v4910 = vsub.f32 1.0, %v4909
    %v4911 = vmul.f32 %v4908, %v4910
    %v4912 = vadd.f32 %v4908, %v4911
    %vm4913 = vweird.f32 %v3912
    %vm4914 = vweird.f32 %v4908
    %vm4915 = vmor %vm4913, %vm4914
    %v4916 = vsel %vm4915, %v4908, %v4912
    %v4917 = vand.u32 2147483647, %v3912
    %vm4918 = vcmp.eq.f32.partialorder %v4917, 8.507059e+37
    %v4919 = vand.u32 %v3912, 2147483648
    %v4920 = vor.u32 1.1754944e-38, %v4919
    %v4921 = vsel %vm4918, %v4920, %v4916
    %v4922 = vmul.f32 1.0, %v4921
    %v4923 = vrcp.pop %v3913
    %v4924 = vmul.f32 %v3913, %v4923
    %v4925 = vsub.f32 1.0, %v4924
    %v4926 = vmul.f32 %v4923, %v4925
    %v4927 = vadd.f32 %v4923, %v4926
    %vm4928 = vweird.f32 %v3913
    %vm4929 = vweird.f32 %v4923
    %vm4930 = vmor %vm4928, %vm4929
    %v4931 = vsel %vm4930, %v4923, %v4927
    %v4932 = vand.u32 2147483647, %v3913
    %vm4933 = vcmp.eq.f32.partialorder %v4932, 8.507059e+37
    %v4934 = vand.u32 %v3913, 2147483648
    %v4935 = vor.u32 1.1754944e-38, %v4934
    %v4936 = vsel %vm4933, %v4935, %v4931
    %v4937 = vmul.f32 1.0, %v4936
    %v4938 = vrcp.pop %v3914
    %v4939 = vmul.f32 %v3914, %v4938
    %v4940 = vsub.f32 1.0, %v4939
    %v4941 = vmul.f32 %v4938, %v4940
    %v4942 = vadd.f32 %v4938, %v4941
    %vm4943 = vweird.f32 %v3914
    %vm4944 = vweird.f32 %v4938
    %vm4945 = vmor %vm4943, %vm4944
    %v4946 = vsel %vm4945, %v4938, %v4942
    %v4947 = vand.u32 2147483647, %v3914
    %vm4948 = vcmp.eq.f32.partialorder %v4947, 8.507059e+37
    %v4949 = vand.u32 %v3914, 2147483648
    %v4950 = vor.u32 1.1754944e-38, %v4949
    %v4951 = vsel %vm4948, %v4950, %v4946
    %v4952 = vmul.f32 1.0, %v4951
    %v4953 = vrcp.pop %v3915
    %v4954 = vmul.f32 %v3915, %v4953
    %v4955 = vsub.f32 1.0, %v4954
    %v4956 = vmul.f32 %v4953, %v4955
    %v4957 = vadd.f32 %v4953, %v4956
    %vm4958 = vweird.f32 %v3915
    %vm4959 = vweird.f32 %v4953
    %vm4960 = vmor %vm4958, %vm4959
    %v4961 = vsel %vm4960, %v4953, %v4957
    %v4962 = vand.u32 2147483647, %v3915
    %vm4963 = vcmp.eq.f32.partialorder %v4962, 8.507059e+37
    %v4964 = vand.u32 %v3915, 2147483648
    %v4965 = vor.u32 1.1754944e-38, %v4964
    %v4966 = vsel %vm4963, %v4965, %v4961
    %v4967 = vmul.f32 1.0, %v4966
    %v4968 = vrcp.pop %v3916
    %v4969 = vmul.f32 %v3916, %v4968
    %v4970 = vsub.f32 1.0, %v4969
    %v4971 = vmul.f32 %v4968, %v4970
    %v4972 = vadd.f32 %v4968, %v4971
    %vm4973 = vweird.f32 %v3916
    %vm4974 = vweird.f32 %v4968
    %vm4975 = vmor %vm4973, %vm4974
    %v4976 = vsel %vm4975, %v4968, %v4972
    %v4977 = vand.u32 2147483647, %v3916
    %vm4978 = vcmp.eq.f32.partialorder %v4977, 8.507059e+37
    %v4979 = vand.u32 %v3916, 2147483648
    %v4980 = vor.u32 1.1754944e-38, %v4979
    %v4981 = vsel %vm4978, %v4980, %v4976
    %v4982 = vmul.f32 1.0, %v4981
    %v4983 = vrcp.pop %v3917
    %v4984 = vmul.f32 %v3917, %v4983
    %v4985 = vsub.f32 1.0, %v4984
    %v4986 = vmul.f32 %v4983, %v4985
    %v4987 = vadd.f32 %v4983, %v4986
    %vm4988 = vweird.f32 %v3917
    %vm4989 = vweird.f32 %v4983
    %vm4990 = vmor %vm4988, %vm4989
    %v4991 = vsel %vm4990, %v4983, %v4987
    %v4992 = vand.u32 2147483647, %v3917
    %vm4993 = vcmp.eq.f32.partialorder %v4992, 8.507059e+37
    %v4994 = vand.u32 %v3917, 2147483648
    %v4995 = vor.u32 1.1754944e-38, %v4994
    %v4996 = vsel %vm4993, %v4995, %v4991
    %v4997 = vmul.f32 1.0, %v4996
    %v4998 = vrcp.pop %v3918
    %v4999 = vmul.f32 %v3918, %v4998
    %v5000 = vsub.f32 1.0, %v4999
    %v5001 = vmul.f32 %v4998, %v5000
    %v5002 = vadd.f32 %v4998, %v5001
    %vm5003 = vweird.f32 %v3918
    %vm5004 = vweird.f32 %v4998
    %vm5005 = vmor %vm5003, %vm5004
    %v5006 = vsel %vm5005, %v4998, %v5002
    %v5007 = vand.u32 2147483647, %v3918
    %vm5008 = vcmp.eq.f32.partialorder %v5007, 8.507059e+37
    %v5009 = vand.u32 %v3918, 2147483648
    %v5010 = vor.u32 1.1754944e-38, %v5009
    %v5011 = vsel %vm5008, %v5010, %v5006
    %v5012 = vmul.f32 1.0, %v5011
    %v5013 = vrcp.pop %v3919
    %v5014 = vmul.f32 %v3919, %v5013
    %v5015 = vsub.f32 1.0, %v5014
    %v5016 = vmul.f32 %v5013, %v5015
    %v5017 = vadd.f32 %v5013, %v5016
    %vm5018 = vweird.f32 %v3919
    %vm5019 = vweird.f32 %v5013
    %vm5020 = vmor %vm5018, %vm5019
    %v5021 = vsel %vm5020, %v5013, %v5017
    %v5022 = vand.u32 2147483647, %v3919
    %vm5023 = vcmp.eq.f32.partialorder %v5022, 8.507059e+37
    %v5024 = vand.u32 %v3919, 2147483648
    %v5025 = vor.u32 1.1754944e-38, %v5024
    %v5026 = vsel %vm5023, %v5025, %v5021
    %v5027 = vmul.f32 1.0, %v5026
    %v5028 = vrcp.pop %v3920
    %v5029 = vmul.f32 %v3920, %v5028
    %v5030 = vsub.f32 1.0, %v5029
    %v5031 = vmul.f32 %v5028, %v5030
    %v5032 = vadd.f32 %v5028, %v5031
    %vm5033 = vweird.f32 %v3920
    %vm5034 = vweird.f32 %v5028
    %vm5035 = vmor %vm5033, %vm5034
    %v5036 = vsel %vm5035, %v5028, %v5032
    %v5037 = vand.u32 2147483647, %v3920
    %vm5038 = vcmp.eq.f32.partialorder %v5037, 8.507059e+37
    %v5039 = vand.u32 %v3920, 2147483648
    %v5040 = vor.u32 1.1754944e-38, %v5039
    %v5041 = vsel %vm5038, %v5040, %v5036
    %v5042 = vmul.f32 1.0, %v5041
    %v5043 = vrcp.pop %v3921
    %v5044 = vmul.f32 %v3921, %v5043
    %v5045 = vsub.f32 1.0, %v5044
    %v5046 = vmul.f32 %v5043, %v5045
    %v5047 = vadd.f32 %v5043, %v5046
    %vm5048 = vweird.f32 %v3921
    %vm5049 = vweird.f32 %v5043
    %vm5050 = vmor %vm5048, %vm5049
    %v5051 = vsel %vm5050, %v5043, %v5047
    %v5052 = vand.u32 2147483647, %v3921
    %vm5053 = vcmp.eq.f32.partialorder %v5052, 8.507059e+37
    %v5054 = vand.u32 %v3921, 2147483648
    %v5055 = vor.u32 1.1754944e-38, %v5054
    %v5056 = vsel %vm5053, %v5055, %v5051
    %v5057 = vmul.f32 1.0, %v5056
    %v5058 = vrcp.pop %v3922
    %v5059 = vmul.f32 %v3922, %v5058
    %v5060 = vsub.f32 1.0, %v5059
    %v5061 = vmul.f32 %v5058, %v5060
    %v5062 = vadd.f32 %v5058, %v5061
    %vm5063 = vweird.f32 %v3922
    %vm5064 = vweird.f32 %v5058
    %vm5065 = vmor %vm5063, %vm5064
    %v5066 = vsel %vm5065, %v5058, %v5062
    %v5067 = vand.u32 2147483647, %v3922
    %vm5068 = vcmp.eq.f32.partialorder %v5067, 8.507059e+37
    %v5069 = vand.u32 %v3922, 2147483648
    %v5070 = vor.u32 1.1754944e-38, %v5069
    %v5071 = vsel %vm5068, %v5070, %v5066
    %v5072 = vmul.f32 1.0, %v5071
    %v5073 = vrcp.pop %v3923
    %v5074 = vmul.f32 %v3923, %v5073
    %v5075 = vsub.f32 1.0, %v5074
    %v5076 = vmul.f32 %v5073, %v5075
    %v5077 = vadd.f32 %v5073, %v5076
    %vm5078 = vweird.f32 %v3923
    %vm5079 = vweird.f32 %v5073
    %vm5080 = vmor %vm5078, %vm5079
    %v5081 = vsel %vm5080, %v5073, %v5077
    %v5082 = vand.u32 2147483647, %v3923
    %vm5083 = vcmp.eq.f32.partialorder %v5082, 8.507059e+37
    %v5084 = vand.u32 %v3923, 2147483648
    %v5085 = vor.u32 1.1754944e-38, %v5084
    %v5086 = vsel %vm5083, %v5085, %v5081
    %v5087 = vmul.f32 1.0, %v5086
    %v5088 = vrcp.pop %v3924
    %v5089 = vmul.f32 %v3924, %v5088
    %v5090 = vsub.f32 1.0, %v5089
    %v5091 = vmul.f32 %v5088, %v5090
    %v5092 = vadd.f32 %v5088, %v5091
    %vm5093 = vweird.f32 %v3924
    %vm5094 = vweird.f32 %v5088
    %vm5095 = vmor %vm5093, %vm5094
    %v5096 = vsel %vm5095, %v5088, %v5092
    %v5097 = vand.u32 2147483647, %v3924
    %vm5098 = vcmp.eq.f32.partialorder %v5097, 8.507059e+37
    %v5099 = vand.u32 %v3924, 2147483648
    %v5100 = vor.u32 1.1754944e-38, %v5099
    %v5101 = vsel %vm5098, %v5100, %v5096
    %v5102 = vmul.f32 1.0, %v5101
    %v5103 = vrcp.pop %v3925
    %v5104 = vmul.f32 %v3925, %v5103
    %v5105 = vsub.f32 1.0, %v5104
    %v5106 = vmul.f32 %v5103, %v5105
    %v5107 = vadd.f32 %v5103, %v5106
    %vm5108 = vweird.f32 %v3925
    %vm5109 = vweird.f32 %v5103
    %vm5110 = vmor %vm5108, %vm5109
    %v5111 = vsel %vm5110, %v5103, %v5107
    %v5112 = vand.u32 2147483647, %v3925
    %vm5113 = vcmp.eq.f32.partialorder %v5112, 8.507059e+37
    %v5114 = vand.u32 %v3925, 2147483648
    %v5115 = vor.u32 1.1754944e-38, %v5114
    %v5116 = vsel %vm5113, %v5115, %v5111
    %v5117 = vmul.f32 1.0, %v5116
    %v5118 = vrcp.pop %v3926
    %v5119 = vmul.f32 %v3926, %v5118
    %v5120 = vsub.f32 1.0, %v5119
    %v5121 = vmul.f32 %v5118, %v5120
    %v5122 = vadd.f32 %v5118, %v5121
    %vm5123 = vweird.f32 %v3926
    %vm5124 = vweird.f32 %v5118
    %vm5125 = vmor %vm5123, %vm5124
    %v5126 = vsel %vm5125, %v5118, %v5122
    %v5127 = vand.u32 2147483647, %v3926
    %vm5128 = vcmp.eq.f32.partialorder %v5127, 8.507059e+37
    %v5129 = vand.u32 %v3926, 2147483648
    %v5130 = vor.u32 1.1754944e-38, %v5129
    %v5131 = vsel %vm5128, %v5130, %v5126
    %v5132 = vmul.f32 1.0, %v5131
    %v5133 = vrcp.pop %v3927
    %v5134 = vmul.f32 %v3927, %v5133
    %v5135 = vsub.f32 1.0, %v5134
    %v5136 = vmul.f32 %v5133, %v5135
    %v5137 = vadd.f32 %v5133, %v5136
    %vm5138 = vweird.f32 %v3927
    %vm5139 = vweird.f32 %v5133
    %vm5140 = vmor %vm5138, %vm5139
    %v5141 = vsel %vm5140, %v5133, %v5137
    %v5142 = vand.u32 2147483647, %v3927
    %vm5143 = vcmp.eq.f32.partialorder %v5142, 8.507059e+37
    %v5144 = vand.u32 %v3927, 2147483648
    %v5145 = vor.u32 1.1754944e-38, %v5144
    %v5146 = vsel %vm5143, %v5145, %v5141
    %v5147 = vmul.f32 1.0, %v5146
    %v5148 = vrcp.pop %v3928
    %v5149 = vmul.f32 %v3928, %v5148
    %v5150 = vsub.f32 1.0, %v5149
    %v5151 = vmul.f32 %v5148, %v5150
    %v5152 = vadd.f32 %v5148, %v5151
    %vm5153 = vweird.f32 %v3928
    %vm5154 = vweird.f32 %v5148
    %vm5155 = vmor %vm5153, %vm5154
    %v5156 = vsel %vm5155, %v5148, %v5152
    %v5157 = vand.u32 2147483647, %v3928
    %vm5158 = vcmp.eq.f32.partialorder %v5157, 8.507059e+37
    %v5159 = vand.u32 %v3928, 2147483648
    %v5160 = vor.u32 1.1754944e-38, %v5159
    %v5161 = vsel %vm5158, %v5160, %v5156
    %v5162 = vmul.f32 1.0, %v5161
    %v5163 = vrcp.pop %v3929
    %v5164 = vmul.f32 %v3929, %v5163
    %v5165 = vsub.f32 1.0, %v5164
    %v5166 = vmul.f32 %v5163, %v5165
    %v5167 = vadd.f32 %v5163, %v5166
    %vm5168 = vweird.f32 %v3929
    %vm5169 = vweird.f32 %v5163
    %vm5170 = vmor %vm5168, %vm5169
    %v5171 = vsel %vm5170, %v5163, %v5167
    %v5172 = vand.u32 2147483647, %v3929
    %vm5173 = vcmp.eq.f32.partialorder %v5172, 8.507059e+37
    %v5174 = vand.u32 %v3929, 2147483648
    %v5175 = vor.u32 1.1754944e-38, %v5174
    %v5176 = vsel %vm5173, %v5175, %v5171
    %v5177 = vmul.f32 1.0, %v5176
    %v5178 = vrcp.pop %v3930
    %v5179 = vmul.f32 %v3930, %v5178
    %v5180 = vsub.f32 1.0, %v5179
    %v5181 = vmul.f32 %v5178, %v5180
    %v5182 = vadd.f32 %v5178, %v5181
    %vm5183 = vweird.f32 %v3930
    %vm5184 = vweird.f32 %v5178
    %vm5185 = vmor %vm5183, %vm5184
    %v5186 = vsel %vm5185, %v5178, %v5182
    %v5187 = vand.u32 2147483647, %v3930
    %vm5188 = vcmp.eq.f32.partialorder %v5187, 8.507059e+37
    %v5189 = vand.u32 %v3930, 2147483648
    %v5190 = vor.u32 1.1754944e-38, %v5189
    %v5191 = vsel %vm5188, %v5190, %v5186
    %v5192 = vmul.f32 1.0, %v5191
    %v5193 = vrcp.pop %v3931
    %v5194 = vmul.f32 %v3931, %v5193
    %v5195 = vsub.f32 1.0, %v5194
    %v5196 = vmul.f32 %v5193, %v5195
    %v5197 = vadd.f32 %v5193, %v5196
    %vm5198 = vweird.f32 %v3931
    %vm5199 = vweird.f32 %v5193
    %vm5200 = vmor %vm5198, %vm5199
    %v5201 = vsel %vm5200, %v5193, %v5197
    %v5202 = vand.u32 2147483647, %v3931
    %vm5203 = vcmp.eq.f32.partialorder %v5202, 8.507059e+37
    %v5204 = vand.u32 %v3931, 2147483648
    %v5205 = vor.u32 1.1754944e-38, %v5204
    %v5206 = vsel %vm5203, %v5205, %v5201
    %v5207 = vmul.f32 1.0, %v5206
    %v5208 = vrcp.pop %v3932
    %v5209 = vmul.f32 %v3932, %v5208
    %v5210 = vsub.f32 1.0, %v5209
    %v5211 = vmul.f32 %v5208, %v5210
    %v5212 = vadd.f32 %v5208, %v5211
    %vm5213 = vweird.f32 %v3932
    %vm5214 = vweird.f32 %v5208
    %vm5215 = vmor %vm5213, %vm5214
    %v5216 = vsel %vm5215, %v5208, %v5212
    %v5217 = vand.u32 2147483647, %v3932
    %vm5218 = vcmp.eq.f32.partialorder %v5217, 8.507059e+37
    %v5219 = vand.u32 %v3932, 2147483648
    %v5220 = vor.u32 1.1754944e-38, %v5219
    %v5221 = vsel %vm5218, %v5220, %v5216
    %v5222 = vmul.f32 1.0, %v5221
    %v5223 = vrcp.pop %v3933
    %v5224 = vmul.f32 %v3933, %v5223
    %v5225 = vsub.f32 1.0, %v5224
    %v5226 = vmul.f32 %v5223, %v5225
    %v5227 = vadd.f32 %v5223, %v5226
    %vm5228 = vweird.f32 %v3933
    %vm5229 = vweird.f32 %v5223
    %vm5230 = vmor %vm5228, %vm5229
    %v5231 = vsel %vm5230, %v5223, %v5227
    %v5232 = vand.u32 2147483647, %v3933
    %vm5233 = vcmp.eq.f32.partialorder %v5232, 8.507059e+37
    %v5234 = vand.u32 %v3933, 2147483648
    %v5235 = vor.u32 1.1754944e-38, %v5234
    %v5236 = vsel %vm5233, %v5235, %v5231
    %v5237 = vmul.f32 1.0, %v5236
    %v5238 = vrcp.pop %v3934
    %v5239 = vmul.f32 %v3934, %v5238
    %v5240 = vsub.f32 1.0, %v5239
    %v5241 = vmul.f32 %v5238, %v5240
    %v5242 = vadd.f32 %v5238, %v5241
    %vm5243 = vweird.f32 %v3934
    %vm5244 = vweird.f32 %v5238
    %vm5245 = vmor %vm5243, %vm5244
    %v5246 = vsel %vm5245, %v5238, %v5242
    %v5247 = vand.u32 2147483647, %v3934
    %vm5248 = vcmp.eq.f32.partialorder %v5247, 8.507059e+37
    %v5249 = vand.u32 %v3934, 2147483648
    %v5250 = vor.u32 1.1754944e-38, %v5249
    %v5251 = vsel %vm5248, %v5250, %v5246
    %v5252 = vmul.f32 1.0, %v5251
    %v5253 = vrcp.pop %v3935
    %v5254 = vmul.f32 %v3935, %v5253
    %v5255 = vsub.f32 1.0, %v5254
    %v5256 = vmul.f32 %v5253, %v5255
    %v5257 = vadd.f32 %v5253, %v5256
    %vm5258 = vweird.f32 %v3935
    %vm5259 = vweird.f32 %v5253
    %vm5260 = vmor %vm5258, %vm5259
    %v5261 = vsel %vm5260, %v5253, %v5257
    %v5262 = vand.u32 2147483647, %v3935
    %vm5263 = vcmp.eq.f32.partialorder %v5262, 8.507059e+37
    %v5264 = vand.u32 %v3935, 2147483648
    %v5265 = vor.u32 1.1754944e-38, %v5264
    %v5266 = vsel %vm5263, %v5265, %v5261
    %v5267 = vmul.f32 1.0, %v5266
    %v5268 = vrcp.pop %v3936
    %v5269 = vmul.f32 %v3936, %v5268
    %v5270 = vsub.f32 1.0, %v5269
    %v5271 = vmul.f32 %v5268, %v5270
    %v5272 = vadd.f32 %v5268, %v5271
    %vm5273 = vweird.f32 %v3936
    %vm5274 = vweird.f32 %v5268
    %vm5275 = vmor %vm5273, %vm5274
    %v5276 = vsel %vm5275, %v5268, %v5272
    %v5277 = vand.u32 2147483647, %v3936
    %vm5278 = vcmp.eq.f32.partialorder %v5277, 8.507059e+37
    %v5279 = vand.u32 %v3936, 2147483648
    %v5280 = vor.u32 1.1754944e-38, %v5279
    %v5281 = vsel %vm5278, %v5280, %v5276
    %v5282 = vmul.f32 1.0, %v5281
    %v5283 = vrcp.pop %v3937
    %v5284 = vmul.f32 %v3937, %v5283
    %v5285 = vsub.f32 1.0, %v5284
    %v5286 = vmul.f32 %v5283, %v5285
    %v5287 = vadd.f32 %v5283, %v5286
    %vm5288 = vweird.f32 %v3937
    %vm5289 = vweird.f32 %v5283
    %vm5290 = vmor %vm5288, %vm5289
    %v5291 = vsel %vm5290, %v5283, %v5287
    %v5292 = vand.u32 2147483647, %v3937
    %vm5293 = vcmp.eq.f32.partialorder %v5292, 8.507059e+37
    %v5294 = vand.u32 %v3937, 2147483648
    %v5295 = vor.u32 1.1754944e-38, %v5294
    %v5296 = vsel %vm5293, %v5295, %v5291
    %v5297 = vmul.f32 1.0, %v5296
    %v5298 = vrcp.pop %v3938
    %v5299 = vmul.f32 %v3938, %v5298
    %v5300 = vsub.f32 1.0, %v5299
    %v5301 = vmul.f32 %v5298, %v5300
    %v5302 = vadd.f32 %v5298, %v5301
    %vm5303 = vweird.f32 %v3938
    %vm5304 = vweird.f32 %v5298
    %vm5305 = vmor %vm5303, %vm5304
    %v5306 = vsel %vm5305, %v5298, %v5302
    %v5307 = vand.u32 2147483647, %v3938
    %vm5308 = vcmp.eq.f32.partialorder %v5307, 8.507059e+37
    %v5309 = vand.u32 %v3938, 2147483648
    %v5310 = vor.u32 1.1754944e-38, %v5309
    %v5311 = vsel %vm5308, %v5310, %v5306
    %v5312 = vmul.f32 1.0, %v5311
    %v5313 = vrcp.pop %v3939
    %v5314 = vmul.f32 %v3939, %v5313
    %v5315 = vsub.f32 1.0, %v5314
    %v5316 = vmul.f32 %v5313, %v5315
    %v5317 = vadd.f32 %v5313, %v5316
    %vm5318 = vweird.f32 %v3939
    %vm5319 = vweird.f32 %v5313
    %vm5320 = vmor %vm5318, %vm5319
    %v5321 = vsel %vm5320, %v5313, %v5317
    %v5322 = vand.u32 2147483647, %v3939
    %vm5323 = vcmp.eq.f32.partialorder %v5322, 8.507059e+37
    %v5324 = vand.u32 %v3939, 2147483648
    %v5325 = vor.u32 1.1754944e-38, %v5324
    %v5326 = vsel %vm5323, %v5325, %v5321
    %v5327 = vmul.f32 1.0, %v5326
    %v5328 = vrcp.pop %v3940
    %v5329 = vmul.f32 %v3940, %v5328
    %v5330 = vsub.f32 1.0, %v5329
    %v5331 = vmul.f32 %v5328, %v5330
    %v5332 = vadd.f32 %v5328, %v5331
    %vm5333 = vweird.f32 %v3940
    %vm5334 = vweird.f32 %v5328
    %vm5335 = vmor %vm5333, %vm5334
    %v5336 = vsel %vm5335, %v5328, %v5332
    %v5337 = vand.u32 2147483647, %v3940
    %vm5338 = vcmp.eq.f32.partialorder %v5337, 8.507059e+37
    %v5339 = vand.u32 %v3940, 2147483648
    %v5340 = vor.u32 1.1754944e-38, %v5339
    %v5341 = vsel %vm5338, %v5340, %v5336
    %v5342 = vmul.f32 1.0, %v5341
    %v5343 = vrcp.pop %v3941
    %v5344 = vmul.f32 %v3941, %v5343
    %v5345 = vsub.f32 1.0, %v5344
    %v5346 = vmul.f32 %v5343, %v5345
    %v5347 = vadd.f32 %v5343, %v5346
    %vm5348 = vweird.f32 %v3941
    %vm5349 = vweird.f32 %v5343
    %vm5350 = vmor %vm5348, %vm5349
    %v5351 = vsel %vm5350, %v5343, %v5347
    %v5352 = vand.u32 2147483647, %v3941
    %vm5353 = vcmp.eq.f32.partialorder %v5352, 8.507059e+37
    %v5354 = vand.u32 %v3941, 2147483648
    %v5355 = vor.u32 1.1754944e-38, %v5354
    %v5356 = vsel %vm5353, %v5355, %v5351
    %v5357 = vmul.f32 1.0, %v5356
    %v5358 = vrcp.pop %v3942
    %v5359 = vmul.f32 %v3942, %v5358
    %v5360 = vsub.f32 1.0, %v5359
    %v5361 = vmul.f32 %v5358, %v5360
    %v5362 = vadd.f32 %v5358, %v5361
    %vm5363 = vweird.f32 %v3942
    %vm5364 = vweird.f32 %v5358
    %vm5365 = vmor %vm5363, %vm5364
    %v5366 = vsel %vm5365, %v5358, %v5362
    %v5367 = vand.u32 2147483647, %v3942
    %vm5368 = vcmp.eq.f32.partialorder %v5367, 8.507059e+37
    %v5369 = vand.u32 %v3942, 2147483648
    %v5370 = vor.u32 1.1754944e-38, %v5369
    %v5371 = vsel %vm5368, %v5370, %v5366
    %v5372 = vmul.f32 1.0, %v5371
    %v5373 = vrcp.pop %v3943
    %v5374 = vmul.f32 %v3943, %v5373
    %v5375 = vsub.f32 1.0, %v5374
    %v5376 = vmul.f32 %v5373, %v5375
    %v5377 = vadd.f32 %v5373, %v5376
    %vm5378 = vweird.f32 %v3943
    %vm5379 = vweird.f32 %v5373
    %vm5380 = vmor %vm5378, %vm5379
    %v5381 = vsel %vm5380, %v5373, %v5377
    %v5382 = vand.u32 2147483647, %v3943
    %vm5383 = vcmp.eq.f32.partialorder %v5382, 8.507059e+37
    %v5384 = vand.u32 %v3943, 2147483648
    %v5385 = vor.u32 1.1754944e-38, %v5384
    %v5386 = vsel %vm5383, %v5385, %v5381
    %v5387 = vmul.f32 1.0, %v5386
    %v5388 = vrcp.pop %v3944
    %v5389 = vmul.f32 %v3944, %v5388
    %v5390 = vsub.f32 1.0, %v5389
    %v5391 = vmul.f32 %v5388, %v5390
    %v5392 = vadd.f32 %v5388, %v5391
    %vm5393 = vweird.f32 %v3944
    %vm5394 = vweird.f32 %v5388
    %vm5395 = vmor %vm5393, %vm5394
    %v5396 = vsel %vm5395, %v5388, %v5392
    %v5397 = vand.u32 2147483647, %v3944
    %vm5398 = vcmp.eq.f32.partialorder %v5397, 8.507059e+37
    %v5399 = vand.u32 %v3944, 2147483648
    %v5400 = vor.u32 1.1754944e-38, %v5399
    %v5401 = vsel %vm5398, %v5400, %v5396
    %v5402 = vmul.f32 1.0, %v5401
    %v5403 = vrcp.pop %v3945
    %v5404 = vmul.f32 %v3945, %v5403
    %v5405 = vsub.f32 1.0, %v5404
    %v5406 = vmul.f32 %v5403, %v5405
    %v5407 = vadd.f32 %v5403, %v5406
    %vm5408 = vweird.f32 %v3945
    %vm5409 = vweird.f32 %v5403
    %vm5410 = vmor %vm5408, %vm5409
    %v5411 = vsel %vm5410, %v5403, %v5407
    %v5412 = vand.u32 2147483647, %v3945
    %vm5413 = vcmp.eq.f32.partialorder %v5412, 8.507059e+37
    %v5414 = vand.u32 %v3945, 2147483648
    %v5415 = vor.u32 1.1754944e-38, %v5414
    %v5416 = vsel %vm5413, %v5415, %v5411
    %v5417 = vmul.f32 1.0, %v5416
    %v5418 = vrcp.pop %v3946
    %v5419 = vmul.f32 %v3946, %v5418
    %v5420 = vsub.f32 1.0, %v5419
    %v5421 = vmul.f32 %v5418, %v5420
    %v5422 = vadd.f32 %v5418, %v5421
    %vm5423 = vweird.f32 %v3946
    %vm5424 = vweird.f32 %v5418
    %vm5425 = vmor %vm5423, %vm5424
    %v5426 = vsel %vm5425, %v5418, %v5422
    %v5427 = vand.u32 2147483647, %v3946
    %vm5428 = vcmp.eq.f32.partialorder %v5427, 8.507059e+37
    %v5429 = vand.u32 %v3946, 2147483648
    %v5430 = vor.u32 1.1754944e-38, %v5429
    %v5431 = vsel %vm5428, %v5430, %v5426
    %v5432 = vmul.f32 1.0, %v5431
    %v5433 = vrcp.pop %v3947
    %v5434 = vmul.f32 %v3947, %v5433
    %v5435 = vsub.f32 1.0, %v5434
    %v5436 = vmul.f32 %v5433, %v5435
    %v5437 = vadd.f32 %v5433, %v5436
    %vm5438 = vweird.f32 %v3947
    %vm5439 = vweird.f32 %v5433
    %vm5440 = vmor %vm5438, %vm5439
    %v5441 = vsel %vm5440, %v5433, %v5437
    %v5442 = vand.u32 2147483647, %v3947
    %vm5443 = vcmp.eq.f32.partialorder %v5442, 8.507059e+37
    %v5444 = vand.u32 %v3947, 2147483648
    %v5445 = vor.u32 1.1754944e-38, %v5444
    %v5446 = vsel %vm5443, %v5445, %v5441
    %v5447 = vmul.f32 1.0, %v5446
    %v5448 = vrcp.pop %v3948
    %v5449 = vmul.f32 %v3948, %v5448
    %v5450 = vsub.f32 1.0, %v5449
    %v5451 = vmul.f32 %v5448, %v5450
    %v5452 = vadd.f32 %v5448, %v5451
    %vm5453 = vweird.f32 %v3948
    %vm5454 = vweird.f32 %v5448
    %vm5455 = vmor %vm5453, %vm5454
    %v5456 = vsel %vm5455, %v5448, %v5452
    %v5457 = vand.u32 2147483647, %v3948
    %vm5458 = vcmp.eq.f32.partialorder %v5457, 8.507059e+37
    %v5459 = vand.u32 %v3948, 2147483648
    %v5460 = vor.u32 1.1754944e-38, %v5459
    %v5461 = vsel %vm5458, %v5460, %v5456
    %v5462 = vmul.f32 1.0, %v5461
    %v5463 = vrcp.pop %v3949
    %v5464 = vmul.f32 %v3949, %v5463
    %v5465 = vsub.f32 1.0, %v5464
    %v5466 = vmul.f32 %v5463, %v5465
    %v5467 = vadd.f32 %v5463, %v5466
    %vm5468 = vweird.f32 %v3949
    %vm5469 = vweird.f32 %v5463
    %vm5470 = vmor %vm5468, %vm5469
    %v5471 = vsel %vm5470, %v5463, %v5467
    %v5472 = vand.u32 2147483647, %v3949
    %vm5473 = vcmp.eq.f32.partialorder %v5472, 8.507059e+37
    %v5474 = vand.u32 %v3949, 2147483648
    %v5475 = vor.u32 1.1754944e-38, %v5474
    %v5476 = vsel %vm5473, %v5475, %v5471
    %v5477 = vmul.f32 1.0, %v5476
    %v5478 = vrcp.pop %v3950
    %v5479 = vmul.f32 %v3950, %v5478
    %v5480 = vsub.f32 1.0, %v5479
    %v5481 = vmul.f32 %v5478, %v5480
    %v5482 = vadd.f32 %v5478, %v5481
    %vm5483 = vweird.f32 %v3950
    %vm5484 = vweird.f32 %v5478
    %vm5485 = vmor %vm5483, %vm5484
    %v5486 = vsel %vm5485, %v5478, %v5482
    %v5487 = vand.u32 2147483647, %v3950
    %vm5488 = vcmp.eq.f32.partialorder %v5487, 8.507059e+37
    %v5489 = vand.u32 %v3950, 2147483648
    %v5490 = vor.u32 1.1754944e-38, %v5489
    %v5491 = vsel %vm5488, %v5490, %v5486
    %v5492 = vmul.f32 1.0, %v5491
    %v5493 = vrcp.pop %v3951
    %v5494 = vmul.f32 %v3951, %v5493
    %v5495 = vsub.f32 1.0, %v5494
    %v5496 = vmul.f32 %v5493, %v5495
    %v5497 = vadd.f32 %v5493, %v5496
    %vm5498 = vweird.f32 %v3951
    %vm5499 = vweird.f32 %v5493
    %vm5500 = vmor %vm5498, %vm5499
    %v5501 = vsel %vm5500, %v5493, %v5497
    %v5502 = vand.u32 2147483647, %v3951
    %vm5503 = vcmp.eq.f32.partialorder %v5502, 8.507059e+37
    %v5504 = vand.u32 %v3951, 2147483648
    %v5505 = vor.u32 1.1754944e-38, %v5504
    %v5506 = vsel %vm5503, %v5505, %v5501
    %v5507 = vmul.f32 1.0, %v5506
    %v5508 = vrcp.pop %v3952
    %v5509 = vmul.f32 %v3952, %v5508
    %v5510 = vsub.f32 1.0, %v5509
    %v5511 = vmul.f32 %v5508, %v5510
    %v5512 = vadd.f32 %v5508, %v5511
    %vm5513 = vweird.f32 %v3952
    %vm5514 = vweird.f32 %v5508
    %vm5515 = vmor %vm5513, %vm5514
    %v5516 = vsel %vm5515, %v5508, %v5512
    %v5517 = vand.u32 2147483647, %v3952
    %vm5518 = vcmp.eq.f32.partialorder %v5517, 8.507059e+37
    %v5519 = vand.u32 %v3952, 2147483648
    %v5520 = vor.u32 1.1754944e-38, %v5519
    %v5521 = vsel %vm5518, %v5520, %v5516
    %v5522 = vmul.f32 1.0, %v5521
    %v5523 = vrcp.pop %v3953
    %v5524 = vmul.f32 %v3953, %v5523
    %v5525 = vsub.f32 1.0, %v5524
    %v5526 = vmul.f32 %v5523, %v5525
    %v5527 = vadd.f32 %v5523, %v5526
    %vm5528 = vweird.f32 %v3953
    %vm5529 = vweird.f32 %v5523
    %vm5530 = vmor %vm5528, %vm5529
    %v5531 = vsel %vm5530, %v5523, %v5527
    %v5532 = vand.u32 2147483647, %v3953
    %vm5533 = vcmp.eq.f32.partialorder %v5532, 8.507059e+37
    %v5534 = vand.u32 %v3953, 2147483648
    %v5535 = vor.u32 1.1754944e-38, %v5534
    %v5536 = vsel %vm5533, %v5535, %v5531
    %v5537 = vmul.f32 1.0, %v5536
    %v5538 = vrcp.pop %v3954
    %v5539 = vmul.f32 %v3954, %v5538
    %v5540 = vsub.f32 1.0, %v5539
    %v5541 = vmul.f32 %v5538, %v5540
    %v5542 = vadd.f32 %v5538, %v5541
    %vm5543 = vweird.f32 %v3954
    %vm5544 = vweird.f32 %v5538
    %vm5545 = vmor %vm5543, %vm5544
    %v5546 = vsel %vm5545, %v5538, %v5542
    %v5547 = vand.u32 2147483647, %v3954
    %vm5548 = vcmp.eq.f32.partialorder %v5547, 8.507059e+37
    %v5549 = vand.u32 %v3954, 2147483648
    %v5550 = vor.u32 1.1754944e-38, %v5549
    %v5551 = vsel %vm5548, %v5550, %v5546
    %v5552 = vmul.f32 1.0, %v5551
    %v5553 = vrcp.pop %v3955
    %v5554 = vmul.f32 %v3955, %v5553
    %v5555 = vsub.f32 1.0, %v5554
    %v5556 = vmul.f32 %v5553, %v5555
    %v5557 = vadd.f32 %v5553, %v5556
    %vm5558 = vweird.f32 %v3955
    %vm5559 = vweird.f32 %v5553
    %vm5560 = vmor %vm5558, %vm5559
    %v5561 = vsel %vm5560, %v5553, %v5557
    %v5562 = vand.u32 2147483647, %v3955
    %vm5563 = vcmp.eq.f32.partialorder %v5562, 8.507059e+37
    %v5564 = vand.u32 %v3955, 2147483648
    %v5565 = vor.u32 1.1754944e-38, %v5564
    %v5566 = vsel %vm5563, %v5565, %v5561
    %v5567 = vmul.f32 1.0, %v5566
    %v5568 = vrcp.pop %v3956
    %v5569 = vmul.f32 %v3956, %v5568
    %v5570 = vsub.f32 1.0, %v5569
    %v5571 = vmul.f32 %v5568, %v5570
    %v5572 = vadd.f32 %v5568, %v5571
    %vm5573 = vweird.f32 %v3956
    %vm5574 = vweird.f32 %v5568
    %vm5575 = vmor %vm5573, %vm5574
    %v5576 = vsel %vm5575, %v5568, %v5572
    %v5577 = vand.u32 2147483647, %v3956
    %vm5578 = vcmp.eq.f32.partialorder %v5577, 8.507059e+37
    %v5579 = vand.u32 %v3956, 2147483648
    %v5580 = vor.u32 1.1754944e-38, %v5579
    %v5581 = vsel %vm5578, %v5580, %v5576
    %v5582 = vmul.f32 1.0, %v5581
    %v5583 = vrcp.pop %v3957
    %v5584 = vmul.f32 %v3957, %v5583
    %v5585 = vsub.f32 1.0, %v5584
    %v5586 = vmul.f32 %v5583, %v5585
    %v5587 = vadd.f32 %v5583, %v5586
    %vm5588 = vweird.f32 %v3957
    %vm5589 = vweird.f32 %v5583
    %vm5590 = vmor %vm5588, %vm5589
    %v5591 = vsel %vm5590, %v5583, %v5587
    %v5592 = vand.u32 2147483647, %v3957
    %vm5593 = vcmp.eq.f32.partialorder %v5592, 8.507059e+37
    %v5594 = vand.u32 %v3957, 2147483648
    %v5595 = vor.u32 1.1754944e-38, %v5594
    %v5596 = vsel %vm5593, %v5595, %v5591
    %v5597 = vmul.f32 1.0, %v5596
    %v5598 = vrcp.pop %v3958
    %v5599 = vmul.f32 %v3958, %v5598
    %v5600 = vsub.f32 1.0, %v5599
    %v5601 = vmul.f32 %v5598, %v5600
    %v5602 = vadd.f32 %v5598, %v5601
    %vm5603 = vweird.f32 %v3958
    %vm5604 = vweird.f32 %v5598
    %vm5605 = vmor %vm5603, %vm5604
    %v5606 = vsel %vm5605, %v5598, %v5602
    %v5607 = vand.u32 2147483647, %v3958
    %vm5608 = vcmp.eq.f32.partialorder %v5607, 8.507059e+37
    %v5609 = vand.u32 %v3958, 2147483648
    %v5610 = vor.u32 1.1754944e-38, %v5609
    %v5611 = vsel %vm5608, %v5610, %v5606
    %v5612 = vmul.f32 1.0, %v5611
    %v5613 = vrcp.pop %v3959
    %v5614 = vmul.f32 %v3959, %v5613
    %v5615 = vsub.f32 1.0, %v5614
    %v5616 = vmul.f32 %v5613, %v5615
    %v5617 = vadd.f32 %v5613, %v5616
    %vm5618 = vweird.f32 %v3959
    %vm5619 = vweird.f32 %v5613
    %vm5620 = vmor %vm5618, %vm5619
    %v5621 = vsel %vm5620, %v5613, %v5617
    %v5622 = vand.u32 2147483647, %v3959
    %vm5623 = vcmp.eq.f32.partialorder %v5622, 8.507059e+37
    %v5624 = vand.u32 %v3959, 2147483648
    %v5625 = vor.u32 1.1754944e-38, %v5624
    %v5626 = vsel %vm5623, %v5625, %v5621
    %v5627 = vmul.f32 1.0, %v5626
    %v5628 = vrcp.pop %v3960
    %v5629 = vmul.f32 %v3960, %v5628
    %v5630 = vsub.f32 1.0, %v5629
    %v5631 = vmul.f32 %v5628, %v5630
    %v5632 = vadd.f32 %v5628, %v5631
    %vm5633 = vweird.f32 %v3960
    %vm5634 = vweird.f32 %v5628
    %vm5635 = vmor %vm5633, %vm5634
    %v5636 = vsel %vm5635, %v5628, %v5632
    %v5637 = vand.u32 2147483647, %v3960
    %vm5638 = vcmp.eq.f32.partialorder %v5637, 8.507059e+37
    %v5639 = vand.u32 %v3960, 2147483648
    %v5640 = vor.u32 1.1754944e-38, %v5639
    %v5641 = vsel %vm5638, %v5640, %v5636
    %v5642 = vmul.f32 1.0, %v5641
    %v5643 = vrcp.pop %v3961
    %v5644 = vmul.f32 %v3961, %v5643
    %v5645 = vsub.f32 1.0, %v5644
    %v5646 = vmul.f32 %v5643, %v5645
    %v5647 = vadd.f32 %v5643, %v5646
    %vm5648 = vweird.f32 %v3961
    %vm5649 = vweird.f32 %v5643
    %vm5650 = vmor %vm5648, %vm5649
    %v5651 = vsel %vm5650, %v5643, %v5647
    %v5652 = vand.u32 2147483647, %v3961
    %vm5653 = vcmp.eq.f32.partialorder %v5652, 8.507059e+37
    %v5654 = vand.u32 %v3961, 2147483648
    %v5655 = vor.u32 1.1754944e-38, %v5654
    %v5656 = vsel %vm5653, %v5655, %v5651
    %v5657 = vmul.f32 1.0, %v5656
    %v5658 = vrcp.pop %v3962
    %v5659 = vmul.f32 %v3962, %v5658
    %v5660 = vsub.f32 1.0, %v5659
    %v5661 = vmul.f32 %v5658, %v5660
    %v5662 = vadd.f32 %v5658, %v5661
    %vm5663 = vweird.f32 %v3962
    %vm5664 = vweird.f32 %v5658
    %vm5665 = vmor %vm5663, %vm5664
    %v5666 = vsel %vm5665, %v5658, %v5662
    %v5667 = vand.u32 2147483647, %v3962
    %vm5668 = vcmp.eq.f32.partialorder %v5667, 8.507059e+37
    %v5669 = vand.u32 %v3962, 2147483648
    %v5670 = vor.u32 1.1754944e-38, %v5669
    %v5671 = vsel %vm5668, %v5670, %v5666
    %v5672 = vmul.f32 1.0, %v5671
    %v5673 = vrcp.pop %v3963
    %v5674 = vmul.f32 %v3963, %v5673
    %v5675 = vsub.f32 1.0, %v5674
    %v5676 = vmul.f32 %v5673, %v5675
    %v5677 = vadd.f32 %v5673, %v5676
    %vm5678 = vweird.f32 %v3963
    %vm5679 = vweird.f32 %v5673
    %vm5680 = vmor %vm5678, %vm5679
    %v5681 = vsel %vm5680, %v5673, %v5677
    %v5682 = vand.u32 2147483647, %v3963
    %vm5683 = vcmp.eq.f32.partialorder %v5682, 8.507059e+37
    %v5684 = vand.u32 %v3963, 2147483648
    %v5685 = vor.u32 1.1754944e-38, %v5684
    %v5686 = vsel %vm5683, %v5685, %v5681
    %v5687 = vmul.f32 1.0, %v5686
    %v5688 = vrcp.pop %v3964
    %v5689 = vmul.f32 %v3964, %v5688
    %v5690 = vsub.f32 1.0, %v5689
    %v5691 = vmul.f32 %v5688, %v5690
    %v5692 = vadd.f32 %v5688, %v5691
    %vm5693 = vweird.f32 %v3964
    %vm5694 = vweird.f32 %v5688
    %vm5695 = vmor %vm5693, %vm5694
    %v5696 = vsel %vm5695, %v5688, %v5692
    %v5697 = vand.u32 2147483647, %v3964
    %vm5698 = vcmp.eq.f32.partialorder %v5697, 8.507059e+37
    %v5699 = vand.u32 %v3964, 2147483648
    %v5700 = vor.u32 1.1754944e-38, %v5699
    %v5701 = vsel %vm5698, %v5700, %v5696
    %v5702 = vmul.f32 1.0, %v5701
    %v5703 = vrcp.pop %v3965
    %v5704 = vmul.f32 %v3965, %v5703
    %v5705 = vsub.f32 1.0, %v5704
    %v5706 = vmul.f32 %v5703, %v5705
    %v5707 = vadd.f32 %v5703, %v5706
    %vm5708 = vweird.f32 %v3965
    %vm5709 = vweird.f32 %v5703
    %vm5710 = vmor %vm5708, %vm5709
    %v5711 = vsel %vm5710, %v5703, %v5707
    %v5712 = vand.u32 2147483647, %v3965
    %vm5713 = vcmp.eq.f32.partialorder %v5712, 8.507059e+37
    %v5714 = vand.u32 %v3965, 2147483648
    %v5715 = vor.u32 1.1754944e-38, %v5714
    %v5716 = vsel %vm5713, %v5715, %v5711
    %v5717 = vmul.f32 1.0, %v5716
    %v5718 = vrcp.pop %v3966
    %v5719 = vmul.f32 %v3966, %v5718
    %v5720 = vsub.f32 1.0, %v5719
    %v5721 = vmul.f32 %v5718, %v5720
    %v5722 = vadd.f32 %v5718, %v5721
    %vm5723 = vweird.f32 %v3966
    %vm5724 = vweird.f32 %v5718
    %vm5725 = vmor %vm5723, %vm5724
    %v5726 = vsel %vm5725, %v5718, %v5722
    %v5727 = vand.u32 2147483647, %v3966
    %vm5728 = vcmp.eq.f32.partialorder %v5727, 8.507059e+37
    %v5729 = vand.u32 %v3966, 2147483648
    %v5730 = vor.u32 1.1754944e-38, %v5729
    %v5731 = vsel %vm5728, %v5730, %v5726
    %v5732 = vmul.f32 1.0, %v5731
    %v5733 = vrcp.pop %v3967
    %v5734 = vmul.f32 %v3967, %v5733
    %v5735 = vsub.f32 1.0, %v5734
    %v5736 = vmul.f32 %v5733, %v5735
    %v5737 = vadd.f32 %v5733, %v5736
    %vm5738 = vweird.f32 %v3967
    %vm5739 = vweird.f32 %v5733
    %vm5740 = vmor %vm5738, %vm5739
    %v5741 = vsel %vm5740, %v5733, %v5737
    %v5742 = vand.u32 2147483647, %v3967
    %vm5743 = vcmp.eq.f32.partialorder %v5742, 8.507059e+37
    %v5744 = vand.u32 %v3967, 2147483648
    %v5745 = vor.u32 1.1754944e-38, %v5744
    %v5746 = vsel %vm5743, %v5745, %v5741
    %v5747 = vmul.f32 1.0, %v5746
    %v5748 = vrcp.pop %v3968
    %v5749 = vmul.f32 %v3968, %v5748
    %v5750 = vsub.f32 1.0, %v5749
    %v5751 = vmul.f32 %v5748, %v5750
    %v5752 = vadd.f32 %v5748, %v5751
    %vm5753 = vweird.f32 %v3968
    %vm5754 = vweird.f32 %v5748
    %vm5755 = vmor %vm5753, %vm5754
    %v5756 = vsel %vm5755, %v5748, %v5752
    %v5757 = vand.u32 2147483647, %v3968
    %vm5758 = vcmp.eq.f32.partialorder %v5757, 8.507059e+37
    %v5759 = vand.u32 %v3968, 2147483648
    %v5760 = vor.u32 1.1754944e-38, %v5759
    %v5761 = vsel %vm5758, %v5760, %v5756
    %v5762 = vmul.f32 1.0, %v5761
    %v5763 = vrcp.pop %v3969
    %v5764 = vmul.f32 %v3969, %v5763
    %v5765 = vsub.f32 1.0, %v5764
    %v5766 = vmul.f32 %v5763, %v5765
    %v5767 = vadd.f32 %v5763, %v5766
    %vm5768 = vweird.f32 %v3969
    %vm5769 = vweird.f32 %v5763
    %vm5770 = vmor %vm5768, %vm5769
    %v5771 = vsel %vm5770, %v5763, %v5767
    %v5772 = vand.u32 2147483647, %v3969
    %vm5773 = vcmp.eq.f32.partialorder %v5772, 8.507059e+37
    %v5774 = vand.u32 %v3969, 2147483648
    %v5775 = vor.u32 1.1754944e-38, %v5774
    %v5776 = vsel %vm5773, %v5775, %v5771
    %v5777 = vmul.f32 1.0, %v5776
    %v5778 = vrcp.pop %v3970
    %v5779 = vmul.f32 %v3970, %v5778
    %v5780 = vsub.f32 1.0, %v5779
    %v5781 = vmul.f32 %v5778, %v5780
    %v5782 = vadd.f32 %v5778, %v5781
    %vm5783 = vweird.f32 %v3970
    %vm5784 = vweird.f32 %v5778
    %vm5785 = vmor %vm5783, %vm5784
    %v5786 = vsel %vm5785, %v5778, %v5782
    %v5787 = vand.u32 2147483647, %v3970
    %vm5788 = vcmp.eq.f32.partialorder %v5787, 8.507059e+37
    %v5789 = vand.u32 %v3970, 2147483648
    %v5790 = vor.u32 1.1754944e-38, %v5789
    %v5791 = vsel %vm5788, %v5790, %v5786
    %v5792 = vmul.f32 1.0, %v5791
    %v5793 = vrcp.pop %v3971
    %v5794 = vmul.f32 %v3971, %v5793
    %v5795 = vsub.f32 1.0, %v5794
    %v5796 = vmul.f32 %v5793, %v5795
    %v5797 = vadd.f32 %v5793, %v5796
    %vm5798 = vweird.f32 %v3971
    %vm5799 = vweird.f32 %v5793
    %vm5800 = vmor %vm5798, %vm5799
    %v5801 = vsel %vm5800, %v5793, %v5797
    %v5802 = vand.u32 2147483647, %v3971
    %vm5803 = vcmp.eq.f32.partialorder %v5802, 8.507059e+37
    %v5804 = vand.u32 %v3971, 2147483648
    %v5805 = vor.u32 1.1754944e-38, %v5804
    %v5806 = vsel %vm5803, %v5805, %v5801
    %v5807 = vmul.f32 1.0, %v5806
    %v5808 = vrcp.pop %v3972
    %v5809 = vmul.f32 %v3972, %v5808
    %v5810 = vsub.f32 1.0, %v5809
    %v5811 = vmul.f32 %v5808, %v5810
    %v5812 = vadd.f32 %v5808, %v5811
    %vm5813 = vweird.f32 %v3972
    %vm5814 = vweird.f32 %v5808
    %vm5815 = vmor %vm5813, %vm5814
    %v5816 = vsel %vm5815, %v5808, %v5812
    %v5817 = vand.u32 2147483647, %v3972
    %vm5818 = vcmp.eq.f32.partialorder %v5817, 8.507059e+37
    %v5819 = vand.u32 %v3972, 2147483648
    %v5820 = vor.u32 1.1754944e-38, %v5819
    %v5821 = vsel %vm5818, %v5820, %v5816
    %v5822 = vmul.f32 1.0, %v5821
    %v5823 = vrcp.pop %v3973
    %v5824 = vmul.f32 %v3973, %v5823
    %v5825 = vsub.f32 1.0, %v5824
    %v5826 = vmul.f32 %v5823, %v5825
    %v5827 = vadd.f32 %v5823, %v5826
    %vm5828 = vweird.f32 %v3973
    %vm5829 = vweird.f32 %v5823
    %vm5830 = vmor %vm5828, %vm5829
    %v5831 = vsel %vm5830, %v5823, %v5827
    %v5832 = vand.u32 2147483647, %v3973
    %vm5833 = vcmp.eq.f32.partialorder %v5832, 8.507059e+37
    %v5834 = vand.u32 %v3973, 2147483648
    %v5835 = vor.u32 1.1754944e-38, %v5834
    %v5836 = vsel %vm5833, %v5835, %v5831
    %v5837 = vmul.f32 1.0, %v5836
    %v5838 = vrcp.pop %v3974
    %v5839 = vmul.f32 %v3974, %v5838
    %v5840 = vsub.f32 1.0, %v5839
    %v5841 = vmul.f32 %v5838, %v5840
    %v5842 = vadd.f32 %v5838, %v5841
    %vm5843 = vweird.f32 %v3974
    %vm5844 = vweird.f32 %v5838
    %vm5845 = vmor %vm5843, %vm5844
    %v5846 = vsel %vm5845, %v5838, %v5842
    %v5847 = vand.u32 2147483647, %v3974
    %vm5848 = vcmp.eq.f32.partialorder %v5847, 8.507059e+37
    %v5849 = vand.u32 %v3974, 2147483648
    %v5850 = vor.u32 1.1754944e-38, %v5849
    %v5851 = vsel %vm5848, %v5850, %v5846
    %v5852 = vmul.f32 1.0, %v5851
    %v5853 = vrcp.pop %v3975
    %v5854 = vmul.f32 %v3975, %v5853
    %v5855 = vsub.f32 1.0, %v5854
    %v5856 = vmul.f32 %v5853, %v5855
    %v5857 = vadd.f32 %v5853, %v5856
    %vm5858 = vweird.f32 %v3975
    %vm5859 = vweird.f32 %v5853
    %vm5860 = vmor %vm5858, %vm5859
    %v5861 = vsel %vm5860, %v5853, %v5857
    %v5862 = vand.u32 2147483647, %v3975
    %vm5863 = vcmp.eq.f32.partialorder %v5862, 8.507059e+37
    %v5864 = vand.u32 %v3975, 2147483648
    %v5865 = vor.u32 1.1754944e-38, %v5864
    %v5866 = vsel %vm5863, %v5865, %v5861
    %v5867 = vmul.f32 1.0, %v5866
    %v5868 = vrcp.pop %v3976
    %v5869 = vmul.f32 %v3976, %v5868
    %v5870 = vsub.f32 1.0, %v5869
    %v5871 = vmul.f32 %v5868, %v5870
    %v5872 = vadd.f32 %v5868, %v5871
    %vm5873 = vweird.f32 %v3976
    %vm5874 = vweird.f32 %v5868
    %vm5875 = vmor %vm5873, %vm5874
    %v5876 = vsel %vm5875, %v5868, %v5872
    %v5877 = vand.u32 2147483647, %v3976
    %vm5878 = vcmp.eq.f32.partialorder %v5877, 8.507059e+37
    %v5879 = vand.u32 %v3976, 2147483648
    %v5880 = vor.u32 1.1754944e-38, %v5879
    %v5881 = vsel %vm5878, %v5880, %v5876
    %v5882 = vmul.f32 1.0, %v5881
    %v5883 = vrcp.pop %v3977
    %v5884 = vmul.f32 %v3977, %v5883
    %v5885 = vsub.f32 1.0, %v5884
    %v5886 = vmul.f32 %v5883, %v5885
    %v5887 = vadd.f32 %v5883, %v5886
    %vm5888 = vweird.f32 %v3977
    %vm5889 = vweird.f32 %v5883
    %vm5890 = vmor %vm5888, %vm5889
    %v5891 = vsel %vm5890, %v5883, %v5887
    %v5892 = vand.u32 2147483647, %v3977
    %vm5893 = vcmp.eq.f32.partialorder %v5892, 8.507059e+37
    %v5894 = vand.u32 %v3977, 2147483648
    %v5895 = vor.u32 1.1754944e-38, %v5894
    %v5896 = vsel %vm5893, %v5895, %v5891
    %v5897 = vmul.f32 1.0, %v5896
    %5898 = vst [vmem:[#allocation5] sm:$0xff] %v3992
    %5899 = vst [vmem:[#allocation5 + $0x8] sm:$0xff] %v4007
    %5900 = vst [vmem:[#allocation5 + $0x10] sm:$0xff] %v4022
    %5901 = vst [vmem:[#allocation5 + $0x18] sm:$0xff] %v4037
    %5902 = vst [vmem:[#allocation5 + $0x20] sm:$0xff] %v4052
    %5903 = vst [vmem:[#allocation5 + $0x28] sm:$0xff] %v4067
    %5904 = vst [vmem:[#allocation5 + $0x30] sm:$0xff] %v4082
    %5905 = vst [vmem:[#allocation5 + $0x38] sm:$0xff] %v4097
    %5906 = vst [vmem:[#allocation5 + $0x40] sm:$0xff] %v4112
    %5907 = vst [vmem:[#allocation5 + $0x48] sm:$0xff] %v4127
    %5908 = vst [vmem:[#allocation5 + $0x50] sm:$0xff] %v4142
    %5909 = vst [vmem:[#allocation5 + $0x58] sm:$0xff] %v4157
    %5910 = vst [vmem:[#allocation5 + $0x60] sm:$0xff] %v4172
    %5911 = vst [vmem:[#allocation5 + $0x68] sm:$0xff] %v4187
    %5912 = vst [vmem:[#allocation5 + $0x70] sm:$0xff] %v4202
    %5913 = vst [vmem:[#allocation5 + $0x78] sm:$0xff] %v4217
    %5914 = vst [vmem:[#allocation5 + $0x80] sm:$0xff] %v4232
    %5915 = vst [vmem:[#allocation5 + $0x88] sm:$0xff] %v4247
    %5916 = vst [vmem:[#allocation5 + $0x90] sm:$0xff] %v4262
    %5917 = vst [vmem:[#allocation5 + $0x98] sm:$0xff] %v4277
    %5918 = vst [vmem:[#allocation5 + $0xa0] sm:$0xff] %v4292
    %5919 = vst [vmem:[#allocation5 + $0xa8] sm:$0xff] %v4307
    %5920 = vst [vmem:[#allocation5 + $0xb0] sm:$0xff] %v4322
    %5921 = vst [vmem:[#allocation5 + $0xb8] sm:$0xff] %v4337
    %5922 = vst [vmem:[#allocation5 + $0xc0] sm:$0xff] %v4352
    %5923 = vst [vmem:[#allocation5 + $0xc8] sm:$0xff] %v4367
    %5924 = vst [vmem:[#allocation5 + $0xd0] sm:$0xff] %v4382
    %5925 = vst [vmem:[#allocation5 + $0xd8] sm:$0xff] %v4397
    %5926 = vst [vmem:[#allocation5 + $0xe0] sm:$0xff] %v4412
    %5927 = vst [vmem:[#allocation5 + $0xe8] sm:$0xff] %v4427
    %5928 = vst [vmem:[#allocation5 + $0xf0] sm:$0xff] %v4442
    %5929 = vst [vmem:[#allocation5 + $0xf8] sm:$0xff] %v4457
    %5930 = vst [vmem:[#allocation5 + $0x100] sm:$0xff] %v4472
    %5931 = vst [vmem:[#allocation5 + $0x108] sm:$0xff] %v4487
    %5932 = vst [vmem:[#allocation5 + $0x110] sm:$0xff] %v4502
    %5933 = vst [vmem:[#allocation5 + $0x118] sm:$0xff] %v4517
    %5934 = vst [vmem:[#allocation5 + $0x120] sm:$0xff] %v4532
    %5935 = vst [vmem:[#allocation5 + $0x128] sm:$0xff] %v4547
    %5936 = vst [vmem:[#allocation5 + $0x130] sm:$0xff] %v4562
    %5937 = vst [vmem:[#allocation5 + $0x138] sm:$0xff] %v4577
    %5938 = vst [vmem:[#allocation5 + $0x140] sm:$0xff] %v4592
    %5939 = vst [vmem:[#allocation5 + $0x148] sm:$0xff] %v4607
    %5940 = vst [vmem:[#allocation5 + $0x150] sm:$0xff] %v4622
    %5941 = vst [vmem:[#allocation5 + $0x158] sm:$0xff] %v4637
    %5942 = vst [vmem:[#allocation5 + $0x160] sm:$0xff] %v4652
    %5943 = vst [vmem:[#allocation5 + $0x168] sm:$0xff] %v4667
    %5944 = vst [vmem:[#allocation5 + $0x170] sm:$0xff] %v4682
    %5945 = vst [vmem:[#allocation5 + $0x178] sm:$0xff] %v4697
    %5946 = vst [vmem:[#allocation5 + $0x180] sm:$0xff] %v4712
    %5947 = vst [vmem:[#allocation5 + $0x188] sm:$0xff] %v4727
    %5948 = vst [vmem:[#allocation5 + $0x190] sm:$0xff] %v4742
    %5949 = vst [vmem:[#allocation5 + $0x198] sm:$0xff] %v4757
    %5950 = vst [vmem:[#allocation5 + $0x1a0] sm:$0xff] %v4772
    %5951 = vst [vmem:[#allocation5 + $0x1a8] sm:$0xff] %v4787
    %5952 = vst [vmem:[#allocation5 + $0x1b0] sm:$0xff] %v4802
    %5953 = vst [vmem:[#allocation5 + $0x1b8] sm:$0xff] %v4817
    %5954 = vst [vmem:[#allocation5 + $0x1c0] sm:$0xff] %v4832
    %5955 = vst [vmem:[#allocation5 + $0x1c8] sm:$0xff] %v4847
    %5956 = vst [vmem:[#allocation5 + $0x1d0] sm:$0xff] %v4862
    %5957 = vst [vmem:[#allocation5 + $0x1d8] sm:$0xff] %v4877
    %5958 = vst [vmem:[#allocation5 + $0x1e0] sm:$0xff] %v4892
    %5959 = vst [vmem:[#allocation5 + $0x1e8] sm:$0xff] %v4907
    %5960 = vst [vmem:[#allocation5 + $0x1f0] sm:$0xff] %v4922
    %5961 = vst [vmem:[#allocation5 + $0x1f8] sm:$0xff] %v4937
    %5962 = vst [vmem:[#allocation5 + $0x200] sm:$0xff] %v4952
    %5963 = vst [vmem:[#allocation5 + $0x208] sm:$0xff] %v4967
    %5964 = vst [vmem:[#allocation5 + $0x210] sm:$0xff] %v4982
    %5965 = vst [vmem:[#allocation5 + $0x218] sm:$0xff] %v4997
    %5966 = vst [vmem:[#allocation5 + $0x220] sm:$0xff] %v5012
    %5967 = vst [vmem:[#allocation5 + $0x228] sm:$0xff] %v5027
    %5968 = vst [vmem:[#allocation5 + $0x230] sm:$0xff] %v5042
    %5969 = vst [vmem:[#allocation5 + $0x238] sm:$0xff] %v5057
    %5970 = vst [vmem:[#allocation5 + $0x240] sm:$0xff] %v5072
    %5971 = vst [vmem:[#allocation5 + $0x248] sm:$0xff] %v5087
    %5972 = vst [vmem:[#allocation5 + $0x250] sm:$0xff] %v5102
    %5973 = vst [vmem:[#allocation5 + $0x258] sm:$0xff] %v5117
    %5974 = vst [vmem:[#allocation5 + $0x260] sm:$0xff] %v5132
    %5975 = vst [vmem:[#allocation5 + $0x268] sm:$0xff] %v5147
    %5976 = vst [vmem:[#allocation5 + $0x270] sm:$0xff] %v5162
    %5977 = vst [vmem:[#allocation5 + $0x278] sm:$0xff] %v5177
    %5978 = vst [vmem:[#allocation5 + $0x280] sm:$0xff] %v5192
    %5979 = vst [vmem:[#allocation5 + $0x288] sm:$0xff] %v5207
    %5980 = vst [vmem:[#allocation5 + $0x290] sm:$0xff] %v5222
    %5981 = vst [vmem:[#allocation5 + $0x298] sm:$0xff] %v5237
    %5982 = vst [vmem:[#allocation5 + $0x2a0] sm:$0xff] %v5252
    %5983 = vst [vmem:[#allocation5 + $0x2a8] sm:$0xff] %v5267
    %5984 = vst [vmem:[#allocation5 + $0x2b0] sm:$0xff] %v5282
    %5985 = vst [vmem:[#allocation5 + $0x2b8] sm:$0xff] %v5297
    %5986 = vst [vmem:[#allocation5 + $0x2c0] sm:$0xff] %v5312
    %5987 = vst [vmem:[#allocation5 + $0x2c8] sm:$0xff] %v5327
    %5988 = vst [vmem:[#allocation5 + $0x2d0] sm:$0xff] %v5342
    %5989 = vst [vmem:[#allocation5 + $0x2d8] sm:$0xff] %v5357
    %5990 = vst [vmem:[#allocation5 + $0x2e0] sm:$0xff] %v5372
    %5991 = vst [vmem:[#allocation5 + $0x2e8] sm:$0xff] %v5387
    %5992 = vst [vmem:[#allocation5 + $0x2f0] sm:$0xff] %v5402
    %5993 = vst [vmem:[#allocation5 + $0x2f8] sm:$0xff] %v5417
    %5994 = vst [vmem:[#allocation5 + $0x300] sm:$0xff] %v5432
    %5995 = vst [vmem:[#allocation5 + $0x308] sm:$0xff] %v5447
    %5996 = vst [vmem:[#allocation5 + $0x310] sm:$0xff] %v5462
    %5997 = vst [vmem:[#allocation5 + $0x318] sm:$0xff] %v5477
    %5998 = vst [vmem:[#allocation5 + $0x320] sm:$0xff] %v5492
    %5999 = vst [vmem:[#allocation5 + $0x328] sm:$0xff] %v5507
    %6000 = vst [vmem:[#allocation5 + $0x330] sm:$0xff] %v5522
    %6001 = vst [vmem:[#allocation5 + $0x338] sm:$0xff] %v5537
    %6002 = vst [vmem:[#allocation5 + $0x340] sm:$0xff] %v5552
    %6003 = vst [vmem:[#allocation5 + $0x348] sm:$0xff] %v5567
    %6004 = vst [vmem:[#allocation5 + $0x350] sm:$0xff] %v5582
    %6005 = vst [vmem:[#allocation5 + $0x358] sm:$0xff] %v5597
    %6006 = vst [vmem:[#allocation5 + $0x360] sm:$0xff] %v5612
    %6007 = vst [vmem:[#allocation5 + $0x368] sm:$0xff] %v5627
    %6008 = vst [vmem:[#allocation5 + $0x370] sm:$0xff] %v5642
    %6009 = vst [vmem:[#allocation5 + $0x378] sm:$0xff] %v5657
    %6010 = vst [vmem:[#allocation5 + $0x380] sm:$0xff] %v5672
    %6011 = vst [vmem:[#allocation5 + $0x388] sm:$0xff] %v5687
    %6012 = vst [vmem:[#allocation5 + $0x390] sm:$0xff] %v5702
    %6013 = vst [vmem:[#allocation5 + $0x398] sm:$0xff] %v5717
    %6014 = vst [vmem:[#allocation5 + $0x3a0] sm:$0xff] %v5732
    %6015 = vst [vmem:[#allocation5 + $0x3a8] sm:$0xff] %v5747
    %6016 = vst [vmem:[#allocation5 + $0x3b0] sm:$0xff] %v5762
    %6017 = vst [vmem:[#allocation5 + $0x3b8] sm:$0xff] %v5777
    %6018 = vst [vmem:[#allocation5 + $0x3c0] sm:$0xff] %v5792
    %6019 = vst [vmem:[#allocation5 + $0x3c8] sm:$0xff] %v5807
    %6020 = vst [vmem:[#allocation5 + $0x3d0] sm:$0xff] %v5822
    %6021 = vst [vmem:[#allocation5 + $0x3d8] sm:$0xff] %v5837
    %6022 = vst [vmem:[#allocation5 + $0x3e0] sm:$0xff] %v5852
    %6023 = vst [vmem:[#allocation5 + $0x3e8] sm:$0xff] %v5867
    %6024 = vst [vmem:[#allocation5 + $0x3f0] sm:$0xff] %v5882
    %6025 = vst [vmem:[#allocation5 + $0x3f8] sm:$0xff] %v5897
    %6026 = vst.msk [vmem:[%s15] sm:$0xff] %vm1017, %v1228
    %6027 = vst.msk [vmem:[%s15 + $0x8] sm:$0xff] %vm1017, %v1231
    %6028 = vst.msk [vmem:[%s15 + $0x10] sm:$0xff] %vm1017, %v1234
    %6029 = vst.msk [vmem:[%s15 + $0x18] sm:$0xff] %vm1017, %v1237
    %6030 = vst.msk [vmem:[%s15 + $0x20] sm:$0xff] %vm1017, %v1240
    %6031 = vst.msk [vmem:[%s15 + $0x28] sm:$0xff] %vm1017, %v1243
    %6032 = vst.msk [vmem:[%s15 + $0x30] sm:$0xff] %vm1017, %v1246
    %6033 = vst.msk [vmem:[%s15 + $0x38] sm:$0xff] %vm1017, %v1249
    %6034 = vst.msk [vmem:[%s15 + $0x40] sm:$0xff] %vm1017, %v1252
    %6035 = vst.msk [vmem:[%s15 + $0x48] sm:$0xff] %vm1017, %v1255
    %6036 = vst.msk [vmem:[%s15 + $0x50] sm:$0xff] %vm1017, %v1258
    %6037 = vst.msk [vmem:[%s15 + $0x58] sm:$0xff] %vm1017, %v1261
    %6038 = vst.msk [vmem:[%s15 + $0x60] sm:$0xff] %vm1017, %v1264
    %6039 = vst.msk [vmem:[%s15 + $0x68] sm:$0xff] %vm1017, %v1267
    %6040 = vst.msk [vmem:[%s15 + $0x70] sm:$0xff] %vm1017, %v1270
    %6041 = vst.msk [vmem:[%s15 + $0x78] sm:$0xff] %vm1017, %v1273
    %6042 = vst.msk [vmem:[%s15 + $0x80] sm:$0xff] %vm1017, %v1276
    %6043 = vst.msk [vmem:[%s15 + $0x88] sm:$0xff] %vm1017, %v1279
    %6044 = vst.msk [vmem:[%s15 + $0x90] sm:$0xff] %vm1017, %v1282
    %6045 = vst.msk [vmem:[%s15 + $0x98] sm:$0xff] %vm1017, %v1285
    %6046 = vst.msk [vmem:[%s15 + $0xa0] sm:$0xff] %vm1017, %v1288
    %6047 = vst.msk [vmem:[%s15 + $0xa8] sm:$0xff] %vm1017, %v1291
    %6048 = vst.msk [vmem:[%s15 + $0xb0] sm:$0xff] %vm1017, %v1294
    %6049 = vst.msk [vmem:[%s15 + $0xb8] sm:$0xff] %vm1017, %v1297
    %6050 = vst.msk [vmem:[%s15 + $0xc0] sm:$0xff] %vm1017, %v1300
    %6051 = vst.msk [vmem:[%s15 + $0xc8] sm:$0xff] %vm1017, %v1303
    %6052 = vst.msk [vmem:[%s15 + $0xd0] sm:$0xff] %vm1017, %v1306
    %6053 = vst.msk [vmem:[%s15 + $0xd8] sm:$0xff] %vm1017, %v1309
    %6054 = vst.msk [vmem:[%s15 + $0xe0] sm:$0xff] %vm1017, %v1312
    %6055 = vst.msk [vmem:[%s15 + $0xe8] sm:$0xff] %vm1017, %v1315
    %6056 = vst.msk [vmem:[%s15 + $0xf0] sm:$0xff] %vm1017, %v1318
    %6057 = vst.msk [vmem:[%s15 + $0xf8] sm:$0xff] %vm1017, %v1321
    %6058 = vst.msk [vmem:[%s15 + $0x100] sm:$0xff] %vm1017, %v1324
    %6059 = vst.msk [vmem:[%s15 + $0x108] sm:$0xff] %vm1017, %v1327
    %6060 = vst.msk [vmem:[%s15 + $0x110] sm:$0xff] %vm1017, %v1330
    %6061 = vst.msk [vmem:[%s15 + $0x118] sm:$0xff] %vm1017, %v1333
    %6062 = vst.msk [vmem:[%s15 + $0x120] sm:$0xff] %vm1017, %v1336
    %6063 = vst.msk [vmem:[%s15 + $0x128] sm:$0xff] %vm1017, %v1339
    %6064 = vst.msk [vmem:[%s15 + $0x130] sm:$0xff] %vm1017, %v1342
    %6065 = vst.msk [vmem:[%s15 + $0x138] sm:$0xff] %vm1017, %v1345
    %6066 = vst.msk [vmem:[%s15 + $0x140] sm:$0xff] %vm1017, %v1348
    %6067 = vst.msk [vmem:[%s15 + $0x148] sm:$0xff] %vm1017, %v1351
    %6068 = vst.msk [vmem:[%s15 + $0x150] sm:$0xff] %vm1017, %v1354
    %6069 = vst.msk [vmem:[%s15 + $0x158] sm:$0xff] %vm1017, %v1357
    %6070 = vst.msk [vmem:[%s15 + $0x160] sm:$0xff] %vm1017, %v1360
    %6071 = vst.msk [vmem:[%s15 + $0x168] sm:$0xff] %vm1017, %v1363
    %6072 = vst.msk [vmem:[%s15 + $0x170] sm:$0xff] %vm1017, %v1366
    %6073 = vst.msk [vmem:[%s15 + $0x178] sm:$0xff] %vm1017, %v1369
    %6074 = vst.msk [vmem:[%s15 + $0x180] sm:$0xff] %vm1017, %v1372
    %6075 = vst.msk [vmem:[%s15 + $0x188] sm:$0xff] %vm1017, %v1375
    %6076 = vst.msk [vmem:[%s15 + $0x190] sm:$0xff] %vm1017, %v1378
    %6077 = vst.msk [vmem:[%s15 + $0x198] sm:$0xff] %vm1017, %v1381
    %6078 = vst.msk [vmem:[%s15 + $0x1a0] sm:$0xff] %vm1017, %v1384
    %6079 = vst.msk [vmem:[%s15 + $0x1a8] sm:$0xff] %vm1017, %v1387
    %6080 = vst.msk [vmem:[%s15 + $0x1b0] sm:$0xff] %vm1017, %v1390
    %6081 = vst.msk [vmem:[%s15 + $0x1b8] sm:$0xff] %vm1017, %v1393
    %6082 = vst.msk [vmem:[%s15 + $0x1c0] sm:$0xff] %vm1017, %v1396
    %6083 = vst.msk [vmem:[%s15 + $0x1c8] sm:$0xff] %vm1017, %v1399
    %6084 = vst.msk [vmem:[%s15 + $0x1d0] sm:$0xff] %vm1017, %v1402
    %6085 = vst.msk [vmem:[%s15 + $0x1d8] sm:$0xff] %vm1017, %v1405
    %6086 = vst.msk [vmem:[%s15 + $0x1e0] sm:$0xff] %vm1017, %v1408
    %6087 = vst.msk [vmem:[%s15 + $0x1e8] sm:$0xff] %vm1017, %v1411
    %6088 = vst.msk [vmem:[%s15 + $0x1f0] sm:$0xff] %vm1017, %v1414
    %6089 = vst.msk [vmem:[%s15 + $0x1f8] sm:$0xff] %vm1017, %v1417
    // Predicated region
    $region62: #{tpu_custom_call.1} parent=1 // pred_check
      _
    $region63: #{tpu_custom_call.1} parent=1 // pred_check_branch
      %6091 = sbr.rel (0) target = $region65
    $region64: #{tpu_custom_call.1} parent=1 // pred_region
      %6093 = vsyncadd [#allocation4], 0
      %s6094 = sshll.u32 [#allocation5], 4
      %s6095 = int_to_ptr.vmem [resolvable:$true] %s6094
      %s6096 = sshll.u32 %s14, 4
      %s6097 = int_to_ptr.hbm [resolvable:$true] %s6096
      %6102 = dma.vmem_to_hbm [thread:$0]  %s6095, 16384, %s6097, [#allocation4], 256, 256, 16
    $region65: #{tpu_custom_call.1} parent=1 // pred_fallthru
      _
    // Predicated region
    $region66: #{tpu_custom_call.1} parent=1 // pred_check
      _
    $region67: #{tpu_custom_call.1} parent=1 // pred_check_branch
      %6104 = sbr.rel (0) target = $region69
    $region68: #{tpu_custom_call.1} parent=1 // pred_region
      _
    $region69: #{tpu_custom_call.1} parent=1 // pred_fallthru
      _
    // Predicated region
    $region70: #{tpu_custom_call.1} parent=1 // pred_check
      _
    $region71: #{tpu_custom_call.1} parent=1 // pred_check_branch
      %6106 = sbr.rel (0) target = $region73
    $region72: #{tpu_custom_call.1} parent=1 // pred_region
      %6108 = dma.done [#allocation4], 16384
    $region73: #{tpu_custom_call.1} parent=1 // pred_fallthru
      _
    // Predicated region
    $region74: #{tpu_custom_call.1} parent=1 // pred_check
      _
    $region75: #{tpu_custom_call.1} parent=1 // pred_check_branch
      %6110 = sbr.rel (0) target = $region77
    $region76: #{tpu_custom_call.1} parent=1 // pred_region
      _
    $region77: #{tpu_custom_call.1} parent=1 // pred_fallthru
      _
    %6111 = vsyncpa [#allocation3], 1
    %6112 = vsyncpa [#allocation4], 1

</llo_original>
